<compile_context>
chip_gen: v7x
topology: tpu7x:2x2x1
jax: 0.10.0
libtpu: 0.0.40
codegen_flags: <defaults>
</compile_context>

<pallas_src>
import numpy as np
import jax
import jax.numpy as jnp
from jax.experimental import pallas as pl
from jax.experimental.pallas import tpu as pltpu

BN_EPS = 1e-5
LRELU_SLOPE = 0.01


def conv2d_size_out(size, kernel_size, stride):
    return (size - (kernel_size - 1) - 1) // stride + 1


# ---------------------------------------------------------------------------
# XLA-side im2col: used once per forward (conv1 only) and by the pure-jnp
# reference. Column order matches PyTorch's (Cout, C, kh, kw) weight flatten.
# ---------------------------------------------------------------------------
def im2col(x, k, s):
    B, C, H, W = x.shape
    OH = conv2d_size_out(H, k, s)
    OW = conv2d_size_out(W, k, s)
    cols = []
    for di in range(k):
        for dj in range(k):
            cols.append(x[:, :, di:di + s * OH:s, dj:dj + s * OW:s])  # (B,C,OH,OW)
    p = jnp.stack(cols, axis=2)                        # (B, C, k*k, OH, OW)
    p = p.reshape(B, C * k * k, OH, OW)
    p = p.transpose(0, 2, 3, 1).reshape(B * OH * OW, C * k * k)
    return p, OH, OW


# ---------------------------------------------------------------------------
# The single fused Pallas kernel
# ---------------------------------------------------------------------------
def make_fused_kernel(B, M1, M2, T2, T3):
    """conv1+BN+LReLU -> conv2+BN+LReLU -> conv3+BN+LReLU -> fc1 -> LReLU -> fc2.

    conv2/conv3 im2col is a sum over taps of MXU matmuls using 0/1 per-tap
    row-selection matrices; everything stays VMEM-resident.
    """

    def kernel(p1_ref, w1_ref, b1_ref, g1_ref, be1_ref,
               s2_ref, w2_ref, b2_ref, g2_ref, be2_ref,
               s3_ref, w3_ref, b3_ref, g3_ref, be3_ref,
               wf1_ref, bf1_ref, wf2_ref, bf2_ref, o_ref):

        def bn_lrelu(y, rows, g, beta):
            # Training-mode BatchNorm2d: biased batch stats over the M rows.
            # One pass (sum + sum of squares), f32 math, rsqrt on the EUP.
            inv_m = 1.0 / rows
            s = jnp.sum(y, axis=0, keepdims=True)
            ss = jnp.sum(y * y, axis=0, keepdims=True)
            mean = s * inv_m
            var = ss * inv_m - mean * mean
            z = (y - mean) * jax.lax.rsqrt(var + BN_EPS) * g + beta
            return jnp.where(z >= 0, z, LRELU_SLOPE * z)

        # ---- conv1: single im2col matmul (patches prepared once outside) ----
        y1 = jnp.dot(p1_ref[...], w1_ref[...],
                     preferred_element_type=jnp.float32) + b1_ref[...]
        h1 = bn_lrelu(y1, M1, g1_ref[...], be1_ref[...]).astype(jnp.bfloat16)

        # ---- conv2: sum over 4x4 taps of (row-select @ activation) @ W_tap --
        c2 = w2_ref.shape[-1]
        y2 = jnp.zeros((M2, c2), jnp.float32)
        for t in range(T2):
            sel = jnp.dot(s2_ref[t], h1,
                          preferred_element_type=jnp.float32).astype(jnp.bfloat16)
            y2 = y2 + jnp.dot(sel, w2_ref[t], preferred_element_type=jnp.float32)
        h2 = bn_lrelu(y2 + b2_ref[...], M2,
                      g2_ref[...], be2_ref[...]).astype(jnp.bfloat16)

        # ---- conv3 (spatial 1x1 output) fused with the fc head -------------
        c3 = w3_ref.shape[-1]
        y3 = jnp.zeros((B, c3), jnp.float32)
        for t in range(T3):
            sel = jnp.dot(s3_ref[t], h2,
                          preferred_element_type=jnp.float32).astype(jnp.bfloat16)
            y3 = y3 + jnp.dot(sel, w3_ref[t], preferred_element_type=jnp.float32)
        h3 = bn_lrelu(y3 + b3_ref[...], B,
                      g3_ref[...], be3_ref[...]).astype(jnp.bfloat16)

        # ---- NoisyLinear fc1 (noise folded) -> LeakyReLU -> NoisyLinear fc2 -
        hf = jnp.dot(h3, wf1_ref[...],
                     preferred_element_type=jnp.float32) + bf1_ref[...]
        hf = jnp.where(hf >= 0, hf, LRELU_SLOPE * hf).astype(jnp.bfloat16)
        o_ref[...] = jnp.dot(hf, wf2_ref[...],
                             preferred_element_type=jnp.float32) + bf2_ref[...]

    return kernel


def _vmem_spec():
    return pl.BlockSpec(memory_space=pltpu.MemorySpace.VMEM)


def network_forward(x, kp):
    """x: (B, C, H, W) float32 NCHW; kp: dict from prepare_kernel_inputs()."""
    B = x.shape[0]
    patches1, _, _ = im2col(x, 8, 4)                  # (B*OH1*OW1, C*64) in XLA, once
    p1 = patches1.astype(jnp.bfloat16)

    T2, M2, M1 = kp["S2"].shape
    T3 = kp["S3"].shape[0]
    A = kp["wf2"].shape[-1]

    kernel = make_fused_kernel(B, M1, M2, T2, T3)
    args = (p1,
            kp["w1"], kp["b1"], kp["g1"], kp["be1"],
            kp["S2"], kp["w2"], kp["b2"], kp["g2"], kp["be2"],
            kp["S3"], kp["w3"], kp["b3"], kp["g3"], kp["be3"],
            kp["wf1"], kp["bf1"], kp["wf2"], kp["bf2"])
    return pl.pallas_call(
        kernel,
        out_shape=jax.ShapeDtypeStruct((B, A), jnp.float32),
        in_specs=[_vmem_spec() for _ in args],
        out_specs=_vmem_spec(),
    )(*args)


# ---------------------------------------------------------------------------
# One-time parameter preprocessing (hoisted out of the per-call path)
# ---------------------------------------------------------------------------
def _selection_matrices(B, IH, IW, k, s):
    """Per-tap 0/1 row gather: S[t] @ act(rows=(b,ih,iw), cols=C) picks, for
    every output pixel (b,oh,ow), the input row (b, s*oh+di, s*ow+dj)."""
    OH = conv2d_size_out(IH, k, s)
    OW = conv2d_size_out(IW, k, s)
    S = np.zeros((k * k, B * OH * OW, B * IH * IW), np.float32)
    for di in range(k):
        for dj in range(k):
            t = di * k + dj
            for b in range(B):
                for i in range(OH):
                    for j in range(OW):
                        r = (b * OH + i) * OW + j
                        m = (b * IH + (s * i + di)) * IW + (s * j + dj)
                        S[t, r, m] = 1.0
    return jnp.asarray(S, jnp.bfloat16)


def prepare_kernel_inputs(params, B, H, W):
    oh1 = conv2d_size_out(H, 8, 4)
    ow1 = conv2d_size_out(W, 8, 4)
    oh2 = conv2d_size_out(oh1, 4, 2)
    ow2 = conv2d_size_out(ow1, 4, 2)

    def conv_tap_weights(w):
        # (Cout, Cin, k, k) -> (k*k taps, Cin, Cout); taps in (kh, kw) order.
        cout, cin, k, _ = w.shape
        return jnp.transpose(w, (2, 3, 1, 0)).reshape(k * k, cin, cout).astype(jnp.bfloat16)

    w1, b1, g1, be1 = params["conv1"]
    w2, b2, g2, be2 = params["conv2"]
    w3, b3, g3, be3 = params["conv3"]
    wf1, bf1 = params["fc1_eff"]
    wf2, bf2 = params["fc2_eff"]
    row = lambda v: v.reshape(1, -1).astype(jnp.float32)

    return {
        # conv1: plain im2col matmul, K in PyTorch (C, kh, kw) order
        "w1": w1.reshape(w1.shape[0], -1).T.astype(jnp.bfloat16),
        "b1": row(b1), "g1": row(g1), "be1": row(be1),
        # conv2 / conv3: in-kernel tap-accumulated im2col
        "S2": _selection_matrices(B, oh1, ow1, 4, 2),
        "w2": conv_tap_weights(w2),
        "b2": row(b2), "g2": row(g2), "be2": row(be2),
        "S3": _selection_matrices(B, oh2, ow2, 3, 1),
        "w3": conv_tap_weights(w3),
        "b3": row(b3), "g3": row(g3), "be3": row(be3),
        # noisy fc layers, training-mode effective weights folded at init
        "wf1": wf1.T.astype(jnp.bfloat16), "bf1": row(bf1),
        "wf2": wf2.T.astype(jnp.bfloat16), "bf2": row(bf2),
    }


# ---------------------------------------------------------------------------
# Pure-jnp reference (independent path: NCHW blocks, PyTorch-order im2col,
# same bf16 operand casts / f32 BN) for a sanity check.
# ---------------------------------------------------------------------------
def network_forward_ref(x, params):
    def block_ref(x, p, k, s):
        B = x.shape[0]
        patches, OH, OW = im2col(x, k, s)
        w, b, gamma, beta = p
        cout = w.shape[0]
        y = jnp.dot(patches.astype(jnp.bfloat16),
                    w.reshape(cout, -1).T.astype(jnp.bfloat16),
                    preferred_element_type=jnp.float32) + b[None, :]
        m = y.shape[0]
        mean = jnp.sum(y, axis=0, keepdims=True) / m
        var = jnp.sum(y * y, axis=0, keepdims=True) / m - mean * mean
        z = (y - mean) * jax.lax.rsqrt(var + BN_EPS) * gamma[None, :] + beta[None, :]
        z = jnp.where(z >= 0, z, LRELU_SLOPE * z)
        return z.reshape(B, OH, OW, cout).transpose(0, 3, 1, 2)

    out = block_ref(x, params["conv1"], 8, 4)
    out = block_ref(out, params["conv2"], 4, 2)
    out = block_ref(out, params["conv3"], 3, 1)
    flat = out.reshape(out.shape[0], -1)
    w1, b1 = params["fc1_eff"]
    w2, b2 = params["fc2_eff"]
    h = jnp.dot(flat.astype(jnp.bfloat16), w1.T.astype(jnp.bfloat16),
                preferred_element_type=jnp.float32) + b1[None, :]
    h = jnp.where(h >= 0, h, LRELU_SLOPE * h)
    return jnp.dot(h.astype(jnp.bfloat16), w2.T.astype(jnp.bfloat16),
                   preferred_element_type=jnp.float32) + b2[None, :]


# ---------------------------------------------------------------------------
# Deterministic parameter init (mirrors the PyTorch module's init + noise)
# ---------------------------------------------------------------------------
def scale_noise(key, size):
    x = jax.random.normal(key, (size,), dtype=jnp.float32)
    return jnp.sign(x) * jnp.sqrt(jnp.abs(x))


def make_noisy_linear(key, in_f, out_f, std_init=0.5):
    k_wmu, k_bmu, k_ein, k_eout = jax.random.split(key, 4)
    mu_range = 1.0 / np.sqrt(in_f)
    weight_mu = jax.random.uniform(k_wmu, (out_f, in_f), jnp.float32, -mu_range, mu_range)
    weight_sigma = jnp.full((out_f, in_f), std_init / np.sqrt(in_f), jnp.float32)
    bias_mu = jax.random.uniform(k_bmu, (out_f,), jnp.float32, -mu_range, mu_range)
    bias_sigma = jnp.full((out_f,), std_init / np.sqrt(out_f), jnp.float32)
    eps_in = scale_noise(k_ein, in_f)
    eps_out = scale_noise(k_eout, out_f)
    # training-mode effective weight/bias (noise folded at init)
    w_eff = weight_mu + weight_sigma * jnp.outer(eps_out, eps_in)
    b_eff = bias_mu + bias_sigma * eps_out
    return w_eff, b_eff


def make_conv(key, cin, cout, k):
    k_w, k_b = jax.random.split(key)
    bound = 1.0 / np.sqrt(cin * k * k)
    w = jax.random.uniform(k_w, (cout, cin, k, k), jnp.float32, -bound, bound)
    b = jax.random.uniform(k_b, (cout,), jnp.float32, -bound, bound)
    gamma = jnp.ones((cout,), jnp.float32)
    beta = jnp.zeros((cout,), jnp.float32)
    return (w, b, gamma, beta)


def make_params(key, frame_history, input_h, input_w, actions):
    ks = jax.random.split(key, 5)
    convw = conv2d_size_out(conv2d_size_out(conv2d_size_out(input_w, 8, 4), 4, 2), 3, 1)
    convh = conv2d_size_out(conv2d_size_out(conv2d_size_out(input_h, 8, 4), 4, 2), 3, 1)
    flat = convw * convh * 64
    return {
        "conv1": make_conv(ks[0], frame_history, 32, 8),
        "conv2": make_conv(ks[1], 32, 64, 4),
        "conv3": make_conv(ks[2], 64, 64, 3),
        "fc1_eff": make_noisy_linear(ks[3], flat, 512, std_init=0.5),
        "fc2_eff": make_noisy_linear(ks[4], 512, actions, std_init=0.5),
    }


# --------------------------------- main -------------------------------------
if __name__ == "__main__":
    # small but valid shapes: frame_history=4, input 40x40 (-> 9 -> 3 -> 1), 5 actions
    B, C, H, W = 2, 4, 40, 40
    ACTIONS = 5

    key = jax.random.PRNGKey(0)
    k_x, k_p = jax.random.split(key)
    x = jax.random.normal(k_x, (B, C, H, W), dtype=jnp.float32)
    params = make_params(k_p, C, H, W, ACTIONS)
    kparams = prepare_kernel_inputs(params, B, H, W)   # one-time preprocessing

    fwd = jax.jit(network_forward)
    out = jax.block_until_ready(fwd(x, kparams))

    ref = jax.block_until_ready(network_forward_ref(x, params))
    assert out.shape == (B, ACTIONS), out.shape
    # bf16 matmul operands (f32 accumulate) + B=2 batch-norm stats => looser
    # tolerance than pure-f32; ordering/permutation bugs would be O(1) errors.
    np.testing.assert_allclose(np.asarray(out), np.asarray(ref), rtol=2e-2, atol=2e-2)

    print("KERNEL_OK")
</pallas_src>

<mosaic_0001>
module attributes {stable_mosaic.version = 11 : i64} {
  func.func @kernel(%arg0: memref<162x256xbf16, #tpu.memory_space<vmem>>, %arg1: memref<256x32xbf16, #tpu.memory_space<vmem>>, %arg2: memref<1x32xf32, #tpu.memory_space<vmem>>, %arg3: memref<1x32xf32, #tpu.memory_space<vmem>>, %arg4: memref<1x32xf32, #tpu.memory_space<vmem>>, %arg5: memref<16x18x162xbf16, #tpu.memory_space<vmem>>, %arg6: memref<16x32x64xbf16, #tpu.memory_space<vmem>>, %arg7: memref<1x64xf32, #tpu.memory_space<vmem>>, %arg8: memref<1x64xf32, #tpu.memory_space<vmem>>, %arg9: memref<1x64xf32, #tpu.memory_space<vmem>>, %arg10: memref<9x2x18xbf16, #tpu.memory_space<vmem>>, %arg11: memref<9x64x64xbf16, #tpu.memory_space<vmem>>, %arg12: memref<1x64xf32, #tpu.memory_space<vmem>>, %arg13: memref<1x64xf32, #tpu.memory_space<vmem>>, %arg14: memref<1x64xf32, #tpu.memory_space<vmem>>, %arg15: memref<64x512xbf16, #tpu.memory_space<vmem>>, %arg16: memref<1x512xf32, #tpu.memory_space<vmem>>, %arg17: memref<512x5xbf16, #tpu.memory_space<vmem>>, %arg18: memref<1x5xf32, #tpu.memory_space<vmem>>, %arg19: memref<2x5xf32, #tpu.memory_space<vmem>>) attributes {dimension_semantics = [], scalar_prefetch = 0 : i64, scratch_operands = 0 : i64, tpu.core_type = #tpu.core_type<tc>} {
    %c0 = arith.constant 0 : index
    %c0_0 = arith.constant 0 : index
    %0 = vector.load %arg0[%c0, %c0_0] : memref<162x256xbf16, #tpu.memory_space<vmem>>, vector<162x256xbf16>
    %c0_1 = arith.constant 0 : index
    %c0_2 = arith.constant 0 : index
    %1 = vector.load %arg1[%c0_1, %c0_2] : memref<256x32xbf16, #tpu.memory_space<vmem>>, vector<256x32xbf16>
    %cst = arith.constant dense<0.000000e+00> : vector<162x32xf32>
    %2 = tpu.matmul %0, %1, %cst {dimension_numbers = #tpu.dot_dimension_numbers<[1], [0], [0], [1], [0, 0, 1, 1], [], []>} : vector<162x256xbf16>, vector<256x32xbf16>, vector<162x32xf32> -> vector<162x32xf32>
    %c0_3 = arith.constant 0 : index
    %c0_4 = arith.constant 0 : index
    %3 = vector.load %arg2[%c0_3, %c0_4] : memref<1x32xf32, #tpu.memory_space<vmem>>, vector<1x32xf32>
    %4 = vector.broadcast %3 : vector<1x32xf32> to vector<162x32xf32>
    %5 = arith.addf %2, %4 : vector<162x32xf32>
    %c0_5 = arith.constant 0 : index
    %c0_6 = arith.constant 0 : index
    %6 = vector.load %arg3[%c0_5, %c0_6] : memref<1x32xf32, #tpu.memory_space<vmem>>, vector<1x32xf32>
    %c0_7 = arith.constant 0 : index
    %c0_8 = arith.constant 0 : index
    %7 = vector.load %arg4[%c0_7, %c0_8] : memref<1x32xf32, #tpu.memory_space<vmem>>, vector<1x32xf32>
    %cst_9 = arith.constant dense<0.000000e+00> : vector<32xf32>
    %8 = vector.multi_reduction <add>, %5, %cst_9 [0] : vector<162x32xf32> to vector<32xf32>
    %9 = vector.shape_cast %8 : vector<32xf32> to vector<1x32xf32>
    %10 = arith.mulf %5, %5 : vector<162x32xf32>
    %cst_10 = arith.constant dense<0.000000e+00> : vector<32xf32>
    %11 = vector.multi_reduction <add>, %10, %cst_10 [0] : vector<162x32xf32> to vector<32xf32>
    %12 = vector.shape_cast %11 : vector<32xf32> to vector<1x32xf32>
    %cst_11 = arith.constant 0.00617283955 : f32
    %13 = vector.broadcast %cst_11 : f32 to vector<1x32xf32>
    %14 = arith.mulf %9, %13 : vector<1x32xf32>
    %cst_12 = arith.constant 0.00617283955 : f32
    %15 = vector.broadcast %cst_12 : f32 to vector<1x32xf32>
    %16 = arith.mulf %12, %15 : vector<1x32xf32>
    %17 = arith.mulf %14, %14 : vector<1x32xf32>
    %18 = arith.subf %16, %17 : vector<1x32xf32>
    %19 = vector.broadcast %14 : vector<1x32xf32> to vector<162x32xf32>
    %20 = arith.subf %5, %19 : vector<162x32xf32>
    %cst_13 = arith.constant 9.99999974E-6 : f32
    %21 = vector.broadcast %cst_13 : f32 to vector<1x32xf32>
    %22 = arith.addf %18, %21 : vector<1x32xf32>
    %23 = math.rsqrt %22 : vector<1x32xf32>
    %24 = vector.broadcast %23 : vector<1x32xf32> to vector<162x32xf32>
    %25 = arith.mulf %20, %24 : vector<162x32xf32>
    %26 = vector.broadcast %6 : vector<1x32xf32> to vector<162x32xf32>
    %27 = arith.mulf %25, %26 : vector<162x32xf32>
    %28 = vector.broadcast %7 : vector<1x32xf32> to vector<162x32xf32>
    %29 = arith.addf %27, %28 : vector<162x32xf32>
    %cst_14 = arith.constant 0.000000e+00 : f32
    %30 = vector.broadcast %cst_14 : f32 to vector<162x32xf32>
    %31 = arith.cmpf oge, %29, %30 : vector<162x32xf32>
    %cst_15 = arith.constant 0.00999999977 : f32
    %32 = vector.broadcast %cst_15 : f32 to vector<162x32xf32>
    %33 = arith.mulf %32, %29 : vector<162x32xf32>
    %34 = arith.select %31, %29, %33 : vector<162x32xi1>, vector<162x32xf32>
    %35 = arith.truncf %34 : vector<162x32xf32> to vector<162x32xbf16>
    %cst_16 = arith.constant 0.000000e+00 : f32
    %36 = vector.broadcast %cst_16 : f32 to vector<18x64xf32>
    %c0_17 = arith.constant 0 : index
    %c0_18 = arith.constant 0 : index
    %c0_19 = arith.constant 0 : index
    %37 = vector.load %arg5[%c0_17, %c0_18, %c0_19] : memref<16x18x162xbf16, #tpu.memory_space<vmem>>, vector<1x18x162xbf16>
    %38 = vector.shape_cast %37 : vector<1x18x162xbf16> to vector<18x162xbf16>
    %cst_20 = arith.constant dense<0.000000e+00> : vector<18x32xf32>
    %39 = tpu.matmul %38, %35, %cst_20 {dimension_numbers = #tpu.dot_dimension_numbers<[1], [0], [0], [1], [0, 0, 1, 1], [], []>} : vector<18x162xbf16>, vector<162x32xbf16>, vector<18x32xf32> -> vector<18x32xf32>
    %40 = arith.truncf %39 : vector<18x32xf32> to vector<18x32xbf16>
    %c0_21 = arith.constant 0 : index
    %c0_22 = arith.constant 0 : index
    %c0_23 = arith.constant 0 : index
    %41 = vector.load %arg6[%c0_21, %c0_22, %c0_23] : memref<16x32x64xbf16, #tpu.memory_space<vmem>>, vector<1x32x64xbf16>
    %42 = vector.shape_cast %41 : vector<1x32x64xbf16> to vector<32x64xbf16>
    %cst_24 = arith.constant dense<0.000000e+00> : vector<18x64xf32>
    %43 = tpu.matmul %40, %42, %cst_24 {dimension_numbers = #tpu.dot_dimension_numbers<[1], [0], [0], [1], [0, 0, 1, 1], [], []>} : vector<18x32xbf16>, vector<32x64xbf16>, vector<18x64xf32> -> vector<18x64xf32>
    %44 = arith.addf %36, %43 : vector<18x64xf32>
    %c1 = arith.constant 1 : index
    %c0_25 = arith.constant 0 : index
    %c0_26 = arith.constant 0 : index
    %45 = vector.load %arg5[%c1, %c0_25, %c0_26] : memref<16x18x162xbf16, #tpu.memory_space<vmem>>, vector<1x18x162xbf16>
    %46 = vector.shape_cast %45 : vector<1x18x162xbf16> to vector<18x162xbf16>
    %cst_27 = arith.constant dense<0.000000e+00> : vector<18x32xf32>
    %47 = tpu.matmul %46, %35, %cst_27 {dimension_numbers = #tpu.dot_dimension_numbers<[1], [0], [0], [1], [0, 0, 1, 1], [], []>} : vector<18x162xbf16>, vector<162x32xbf16>, vector<18x32xf32> -> vector<18x32xf32>
    %48 = arith.truncf %47 : vector<18x32xf32> to vector<18x32xbf16>
    %c1_28 = arith.constant 1 : index
    %c0_29 = arith.constant 0 : index
    %c0_30 = arith.constant 0 : index
    %49 = vector.load %arg6[%c1_28, %c0_29, %c0_30] : memref<16x32x64xbf16, #tpu.memory_space<vmem>>, vector<1x32x64xbf16>
    %50 = vector.shape_cast %49 : vector<1x32x64xbf16> to vector<32x64xbf16>
    %cst_31 = arith.constant dense<0.000000e+00> : vector<18x64xf32>
    %51 = tpu.matmul %48, %50, %cst_31 {dimension_numbers = #tpu.dot_dimension_numbers<[1], [0], [0], [1], [0, 0, 1, 1], [], []>} : vector<18x32xbf16>, vector<32x64xbf16>, vector<18x64xf32> -> vector<18x64xf32>
    %52 = arith.addf %44, %51 : vector<18x64xf32>
    %c2 = arith.constant 2 : index
    %c0_32 = arith.constant 0 : index
    %c0_33 = arith.constant 0 : index
    %53 = vector.load %arg5[%c2, %c0_32, %c0_33] : memref<16x18x162xbf16, #tpu.memory_space<vmem>>, vector<1x18x162xbf16>
    %54 = vector.shape_cast %53 : vector<1x18x162xbf16> to vector<18x162xbf16>
    %cst_34 = arith.constant dense<0.000000e+00> : vector<18x32xf32>
    %55 = tpu.matmul %54, %35, %cst_34 {dimension_numbers = #tpu.dot_dimension_numbers<[1], [0], [0], [1], [0, 0, 1, 1], [], []>} : vector<18x162xbf16>, vector<162x32xbf16>, vector<18x32xf32> -> vector<18x32xf32>
    %56 = arith.truncf %55 : vector<18x32xf32> to vector<18x32xbf16>
    %c2_35 = arith.constant 2 : index
    %c0_36 = arith.constant 0 : index
    %c0_37 = arith.constant 0 : index
    %57 = vector.load %arg6[%c2_35, %c0_36, %c0_37] : memref<16x32x64xbf16, #tpu.memory_space<vmem>>, vector<1x32x64xbf16>
    %58 = vector.shape_cast %57 : vector<1x32x64xbf16> to vector<32x64xbf16>
    %cst_38 = arith.constant dense<0.000000e+00> : vector<18x64xf32>
    %59 = tpu.matmul %56, %58, %cst_38 {dimension_numbers = #tpu.dot_dimension_numbers<[1], [0], [0], [1], [0, 0, 1, 1], [], []>} : vector<18x32xbf16>, vector<32x64xbf16>, vector<18x64xf32> -> vector<18x64xf32>
    %60 = arith.addf %52, %59 : vector<18x64xf32>
    %c3 = arith.constant 3 : index
    %c0_39 = arith.constant 0 : index
    %c0_40 = arith.constant 0 : index
    %61 = vector.load %arg5[%c3, %c0_39, %c0_40] : memref<16x18x162xbf16, #tpu.memory_space<vmem>>, vector<1x18x162xbf16>
    %62 = vector.shape_cast %61 : vector<1x18x162xbf16> to vector<18x162xbf16>
    %cst_41 = arith.constant dense<0.000000e+00> : vector<18x32xf32>
    %63 = tpu.matmul %62, %35, %cst_41 {dimension_numbers = #tpu.dot_dimension_numbers<[1], [0], [0], [1], [0, 0, 1, 1], [], []>} : vector<18x162xbf16>, vector<162x32xbf16>, vector<18x32xf32> -> vector<18x32xf32>
    %64 = arith.truncf %63 : vector<18x32xf32> to vector<18x32xbf16>
    %c3_42 = arith.constant 3 : index
    %c0_43 = arith.constant 0 : index
    %c0_44 = arith.constant 0 : index
    %65 = vector.load %arg6[%c3_42, %c0_43, %c0_44] : memref<16x32x64xbf16, #tpu.memory_space<vmem>>, vector<1x32x64xbf16>
    %66 = vector.shape_cast %65 : vector<1x32x64xbf16> to vector<32x64xbf16>
    %cst_45 = arith.constant dense<0.000000e+00> : vector<18x64xf32>
    %67 = tpu.matmul %64, %66, %cst_45 {dimension_numbers = #tpu.dot_dimension_numbers<[1], [0], [0], [1], [0, 0, 1, 1], [], []>} : vector<18x32xbf16>, vector<32x64xbf16>, vector<18x64xf32> -> vector<18x64xf32>
    %68 = arith.addf %60, %67 : vector<18x64xf32>
    %c4 = arith.constant 4 : index
    %c0_46 = arith.constant 0 : index
    %c0_47 = arith.constant 0 : index
    %69 = vector.load %arg5[%c4, %c0_46, %c0_47] : memref<16x18x162xbf16, #tpu.memory_space<vmem>>, vector<1x18x162xbf16>
    %70 = vector.shape_cast %69 : vector<1x18x162xbf16> to vector<18x162xbf16>
    %cst_48 = arith.constant dense<0.000000e+00> : vector<18x32xf32>
    %71 = tpu.matmul %70, %35, %cst_48 {dimension_numbers = #tpu.dot_dimension_numbers<[1], [0], [0], [1], [0, 0, 1, 1], [], []>} : vector<18x162xbf16>, vector<162x32xbf16>, vector<18x32xf32> -> vector<18x32xf32>
    %72 = arith.truncf %71 : vector<18x32xf32> to vector<18x32xbf16>
    %c4_49 = arith.constant 4 : index
    %c0_50 = arith.constant 0 : index
    %c0_51 = arith.constant 0 : index
    %73 = vector.load %arg6[%c4_49, %c0_50, %c0_51] : memref<16x32x64xbf16, #tpu.memory_space<vmem>>, vector<1x32x64xbf16>
    %74 = vector.shape_cast %73 : vector<1x32x64xbf16> to vector<32x64xbf16>
    %cst_52 = arith.constant dense<0.000000e+00> : vector<18x64xf32>
    %75 = tpu.matmul %72, %74, %cst_52 {dimension_numbers = #tpu.dot_dimension_numbers<[1], [0], [0], [1], [0, 0, 1, 1], [], []>} : vector<18x32xbf16>, vector<32x64xbf16>, vector<18x64xf32> -> vector<18x64xf32>
    %76 = arith.addf %68, %75 : vector<18x64xf32>
    %c5 = arith.constant 5 : index
    %c0_53 = arith.constant 0 : index
    %c0_54 = arith.constant 0 : index
    %77 = vector.load %arg5[%c5, %c0_53, %c0_54] : memref<16x18x162xbf16, #tpu.memory_space<vmem>>, vector<1x18x162xbf16>
    %78 = vector.shape_cast %77 : vector<1x18x162xbf16> to vector<18x162xbf16>
    %cst_55 = arith.constant dense<0.000000e+00> : vector<18x32xf32>
    %79 = tpu.matmul %78, %35, %cst_55 {dimension_numbers = #tpu.dot_dimension_numbers<[1], [0], [0], [1], [0, 0, 1, 1], [], []>} : vector<18x162xbf16>, vector<162x32xbf16>, vector<18x32xf32> -> vector<18x32xf32>
    %80 = arith.truncf %79 : vector<18x32xf32> to vector<18x32xbf16>
    %c5_56 = arith.constant 5 : index
    %c0_57 = arith.constant 0 : index
    %c0_58 = arith.constant 0 : index
    %81 = vector.load %arg6[%c5_56, %c0_57, %c0_58] : memref<16x32x64xbf16, #tpu.memory_space<vmem>>, vector<1x32x64xbf16>
    %82 = vector.shape_cast %81 : vector<1x32x64xbf16> to vector<32x64xbf16>
    %cst_59 = arith.constant dense<0.000000e+00> : vector<18x64xf32>
    %83 = tpu.matmul %80, %82, %cst_59 {dimension_numbers = #tpu.dot_dimension_numbers<[1], [0], [0], [1], [0, 0, 1, 1], [], []>} : vector<18x32xbf16>, vector<32x64xbf16>, vector<18x64xf32> -> vector<18x64xf32>
    %84 = arith.addf %76, %83 : vector<18x64xf32>
    %c6 = arith.constant 6 : index
    %c0_60 = arith.constant 0 : index
    %c0_61 = arith.constant 0 : index
    %85 = vector.load %arg5[%c6, %c0_60, %c0_61] : memref<16x18x162xbf16, #tpu.memory_space<vmem>>, vector<1x18x162xbf16>
    %86 = vector.shape_cast %85 : vector<1x18x162xbf16> to vector<18x162xbf16>
    %cst_62 = arith.constant dense<0.000000e+00> : vector<18x32xf32>
    %87 = tpu.matmul %86, %35, %cst_62 {dimension_numbers = #tpu.dot_dimension_numbers<[1], [0], [0], [1], [0, 0, 1, 1], [], []>} : vector<18x162xbf16>, vector<162x32xbf16>, vector<18x32xf32> -> vector<18x32xf32>
    %88 = arith.truncf %87 : vector<18x32xf32> to vector<18x32xbf16>
    %c6_63 = arith.constant 6 : index
    %c0_64 = arith.constant 0 : index
    %c0_65 = arith.constant 0 : index
    %89 = vector.load %arg6[%c6_63, %c0_64, %c0_65] : memref<16x32x64xbf16, #tpu.memory_space<vmem>>, vector<1x32x64xbf16>
    %90 = vector.shape_cast %89 : vector<1x32x64xbf16> to vector<32x64xbf16>
    %cst_66 = arith.constant dense<0.000000e+00> : vector<18x64xf32>
    %91 = tpu.matmul %88, %90, %cst_66 {dimension_numbers = #tpu.dot_dimension_numbers<[1], [0], [0], [1], [0, 0, 1, 1], [], []>} : vector<18x32xbf16>, vector<32x64xbf16>, vector<18x64xf32> -> vector<18x64xf32>
    %92 = arith.addf %84, %91 : vector<18x64xf32>
    %c7 = arith.constant 7 : index
    %c0_67 = arith.constant 0 : index
    %c0_68 = arith.constant 0 : index
    %93 = vector.load %arg5[%c7, %c0_67, %c0_68] : memref<16x18x162xbf16, #tpu.memory_space<vmem>>, vector<1x18x162xbf16>
    %94 = vector.shape_cast %93 : vector<1x18x162xbf16> to vector<18x162xbf16>
    %cst_69 = arith.constant dense<0.000000e+00> : vector<18x32xf32>
    %95 = tpu.matmul %94, %35, %cst_69 {dimension_numbers = #tpu.dot_dimension_numbers<[1], [0], [0], [1], [0, 0, 1, 1], [], []>} : vector<18x162xbf16>, vector<162x32xbf16>, vector<18x32xf32> -> vector<18x32xf32>
    %96 = arith.truncf %95 : vector<18x32xf32> to vector<18x32xbf16>
    %c7_70 = arith.constant 7 : index
    %c0_71 = arith.constant 0 : index
    %c0_72 = arith.constant 0 : index
    %97 = vector.load %arg6[%c7_70, %c0_71, %c0_72] : memref<16x32x64xbf16, #tpu.memory_space<vmem>>, vector<1x32x64xbf16>
    %98 = vector.shape_cast %97 : vector<1x32x64xbf16> to vector<32x64xbf16>
    %cst_73 = arith.constant dense<0.000000e+00> : vector<18x64xf32>
    %99 = tpu.matmul %96, %98, %cst_73 {dimension_numbers = #tpu.dot_dimension_numbers<[1], [0], [0], [1], [0, 0, 1, 1], [], []>} : vector<18x32xbf16>, vector<32x64xbf16>, vector<18x64xf32> -> vector<18x64xf32>
    %100 = arith.addf %92, %99 : vector<18x64xf32>
    %c8 = arith.constant 8 : index
    %c0_74 = arith.constant 0 : index
    %c0_75 = arith.constant 0 : index
    %101 = vector.load %arg5[%c8, %c0_74, %c0_75] : memref<16x18x162xbf16, #tpu.memory_space<vmem>>, vector<1x18x162xbf16>
    %102 = vector.shape_cast %101 : vector<1x18x162xbf16> to vector<18x162xbf16>
    %cst_76 = arith.constant dense<0.000000e+00> : vector<18x32xf32>
    %103 = tpu.matmul %102, %35, %cst_76 {dimension_numbers = #tpu.dot_dimension_numbers<[1], [0], [0], [1], [0, 0, 1, 1], [], []>} : vector<18x162xbf16>, vector<162x32xbf16>, vector<18x32xf32> -> vector<18x32xf32>
    %104 = arith.truncf %103 : vector<18x32xf32> to vector<18x32xbf16>
    %c8_77 = arith.constant 8 : index
    %c0_78 = arith.constant 0 : index
    %c0_79 = arith.constant 0 : index
    %105 = vector.load %arg6[%c8_77, %c0_78, %c0_79] : memref<16x32x64xbf16, #tpu.memory_space<vmem>>, vector<1x32x64xbf16>
    %106 = vector.shape_cast %105 : vector<1x32x64xbf16> to vector<32x64xbf16>
    %cst_80 = arith.constant dense<0.000000e+00> : vector<18x64xf32>
    %107 = tpu.matmul %104, %106, %cst_80 {dimension_numbers = #tpu.dot_dimension_numbers<[1], [0], [0], [1], [0, 0, 1, 1], [], []>} : vector<18x32xbf16>, vector<32x64xbf16>, vector<18x64xf32> -> vector<18x64xf32>
    %108 = arith.addf %100, %107 : vector<18x64xf32>
    %c9 = arith.constant 9 : index
    %c0_81 = arith.constant 0 : index
    %c0_82 = arith.constant 0 : index
    %109 = vector.load %arg5[%c9, %c0_81, %c0_82] : memref<16x18x162xbf16, #tpu.memory_space<vmem>>, vector<1x18x162xbf16>
    %110 = vector.shape_cast %109 : vector<1x18x162xbf16> to vector<18x162xbf16>
    %cst_83 = arith.constant dense<0.000000e+00> : vector<18x32xf32>
    %111 = tpu.matmul %110, %35, %cst_83 {dimension_numbers = #tpu.dot_dimension_numbers<[1], [0], [0], [1], [0, 0, 1, 1], [], []>} : vector<18x162xbf16>, vector<162x32xbf16>, vector<18x32xf32> -> vector<18x32xf32>
    %112 = arith.truncf %111 : vector<18x32xf32> to vector<18x32xbf16>
    %c9_84 = arith.constant 9 : index
    %c0_85 = arith.constant 0 : index
    %c0_86 = arith.constant 0 : index
    %113 = vector.load %arg6[%c9_84, %c0_85, %c0_86] : memref<16x32x64xbf16, #tpu.memory_space<vmem>>, vector<1x32x64xbf16>
    %114 = vector.shape_cast %113 : vector<1x32x64xbf16> to vector<32x64xbf16>
    %cst_87 = arith.constant dense<0.000000e+00> : vector<18x64xf32>
    %115 = tpu.matmul %112, %114, %cst_87 {dimension_numbers = #tpu.dot_dimension_numbers<[1], [0], [0], [1], [0, 0, 1, 1], [], []>} : vector<18x32xbf16>, vector<32x64xbf16>, vector<18x64xf32> -> vector<18x64xf32>
    %116 = arith.addf %108, %115 : vector<18x64xf32>
    %c10 = arith.constant 10 : index
    %c0_88 = arith.constant 0 : index
    %c0_89 = arith.constant 0 : index
    %117 = vector.load %arg5[%c10, %c0_88, %c0_89] : memref<16x18x162xbf16, #tpu.memory_space<vmem>>, vector<1x18x162xbf16>
    %118 = vector.shape_cast %117 : vector<1x18x162xbf16> to vector<18x162xbf16>
    %cst_90 = arith.constant dense<0.000000e+00> : vector<18x32xf32>
    %119 = tpu.matmul %118, %35, %cst_90 {dimension_numbers = #tpu.dot_dimension_numbers<[1], [0], [0], [1], [0, 0, 1, 1], [], []>} : vector<18x162xbf16>, vector<162x32xbf16>, vector<18x32xf32> -> vector<18x32xf32>
    %120 = arith.truncf %119 : vector<18x32xf32> to vector<18x32xbf16>
    %c10_91 = arith.constant 10 : index
    %c0_92 = arith.constant 0 : index
    %c0_93 = arith.constant 0 : index
    %121 = vector.load %arg6[%c10_91, %c0_92, %c0_93] : memref<16x32x64xbf16, #tpu.memory_space<vmem>>, vector<1x32x64xbf16>
    %122 = vector.shape_cast %121 : vector<1x32x64xbf16> to vector<32x64xbf16>
    %cst_94 = arith.constant dense<0.000000e+00> : vector<18x64xf32>
    %123 = tpu.matmul %120, %122, %cst_94 {dimension_numbers = #tpu.dot_dimension_numbers<[1], [0], [0], [1], [0, 0, 1, 1], [], []>} : vector<18x32xbf16>, vector<32x64xbf16>, vector<18x64xf32> -> vector<18x64xf32>
    %124 = arith.addf %116, %123 : vector<18x64xf32>
    %c11 = arith.constant 11 : index
    %c0_95 = arith.constant 0 : index
    %c0_96 = arith.constant 0 : index
    %125 = vector.load %arg5[%c11, %c0_95, %c0_96] : memref<16x18x162xbf16, #tpu.memory_space<vmem>>, vector<1x18x162xbf16>
    %126 = vector.shape_cast %125 : vector<1x18x162xbf16> to vector<18x162xbf16>
    %cst_97 = arith.constant dense<0.000000e+00> : vector<18x32xf32>
    %127 = tpu.matmul %126, %35, %cst_97 {dimension_numbers = #tpu.dot_dimension_numbers<[1], [0], [0], [1], [0, 0, 1, 1], [], []>} : vector<18x162xbf16>, vector<162x32xbf16>, vector<18x32xf32> -> vector<18x32xf32>
    %128 = arith.truncf %127 : vector<18x32xf32> to vector<18x32xbf16>
    %c11_98 = arith.constant 11 : index
    %c0_99 = arith.constant 0 : index
    %c0_100 = arith.constant 0 : index
    %129 = vector.load %arg6[%c11_98, %c0_99, %c0_100] : memref<16x32x64xbf16, #tpu.memory_space<vmem>>, vector<1x32x64xbf16>
    %130 = vector.shape_cast %129 : vector<1x32x64xbf16> to vector<32x64xbf16>
    %cst_101 = arith.constant dense<0.000000e+00> : vector<18x64xf32>
    %131 = tpu.matmul %128, %130, %cst_101 {dimension_numbers = #tpu.dot_dimension_numbers<[1], [0], [0], [1], [0, 0, 1, 1], [], []>} : vector<18x32xbf16>, vector<32x64xbf16>, vector<18x64xf32> -> vector<18x64xf32>
    %132 = arith.addf %124, %131 : vector<18x64xf32>
    %c12 = arith.constant 12 : index
    %c0_102 = arith.constant 0 : index
    %c0_103 = arith.constant 0 : index
    %133 = vector.load %arg5[%c12, %c0_102, %c0_103] : memref<16x18x162xbf16, #tpu.memory_space<vmem>>, vector<1x18x162xbf16>
    %134 = vector.shape_cast %133 : vector<1x18x162xbf16> to vector<18x162xbf16>
    %cst_104 = arith.constant dense<0.000000e+00> : vector<18x32xf32>
    %135 = tpu.matmul %134, %35, %cst_104 {dimension_numbers = #tpu.dot_dimension_numbers<[1], [0], [0], [1], [0, 0, 1, 1], [], []>} : vector<18x162xbf16>, vector<162x32xbf16>, vector<18x32xf32> -> vector<18x32xf32>
    %136 = arith.truncf %135 : vector<18x32xf32> to vector<18x32xbf16>
    %c12_105 = arith.constant 12 : index
    %c0_106 = arith.constant 0 : index
    %c0_107 = arith.constant 0 : index
    %137 = vector.load %arg6[%c12_105, %c0_106, %c0_107] : memref<16x32x64xbf16, #tpu.memory_space<vmem>>, vector<1x32x64xbf16>
    %138 = vector.shape_cast %137 : vector<1x32x64xbf16> to vector<32x64xbf16>
    %cst_108 = arith.constant dense<0.000000e+00> : vector<18x64xf32>
    %139 = tpu.matmul %136, %138, %cst_108 {dimension_numbers = #tpu.dot_dimension_numbers<[1], [0], [0], [1], [0, 0, 1, 1], [], []>} : vector<18x32xbf16>, vector<32x64xbf16>, vector<18x64xf32> -> vector<18x64xf32>
    %140 = arith.addf %132, %139 : vector<18x64xf32>
    %c13 = arith.constant 13 : index
    %c0_109 = arith.constant 0 : index
    %c0_110 = arith.constant 0 : index
    %141 = vector.load %arg5[%c13, %c0_109, %c0_110] : memref<16x18x162xbf16, #tpu.memory_space<vmem>>, vector<1x18x162xbf16>
    %142 = vector.shape_cast %141 : vector<1x18x162xbf16> to vector<18x162xbf16>
    %cst_111 = arith.constant dense<0.000000e+00> : vector<18x32xf32>
    %143 = tpu.matmul %142, %35, %cst_111 {dimension_numbers = #tpu.dot_dimension_numbers<[1], [0], [0], [1], [0, 0, 1, 1], [], []>} : vector<18x162xbf16>, vector<162x32xbf16>, vector<18x32xf32> -> vector<18x32xf32>
    %144 = arith.truncf %143 : vector<18x32xf32> to vector<18x32xbf16>
    %c13_112 = arith.constant 13 : index
    %c0_113 = arith.constant 0 : index
    %c0_114 = arith.constant 0 : index
    %145 = vector.load %arg6[%c13_112, %c0_113, %c0_114] : memref<16x32x64xbf16, #tpu.memory_space<vmem>>, vector<1x32x64xbf16>
    %146 = vector.shape_cast %145 : vector<1x32x64xbf16> to vector<32x64xbf16>
    %cst_115 = arith.constant dense<0.000000e+00> : vector<18x64xf32>
    %147 = tpu.matmul %144, %146, %cst_115 {dimension_numbers = #tpu.dot_dimension_numbers<[1], [0], [0], [1], [0, 0, 1, 1], [], []>} : vector<18x32xbf16>, vector<32x64xbf16>, vector<18x64xf32> -> vector<18x64xf32>
    %148 = arith.addf %140, %147 : vector<18x64xf32>
    %c14 = arith.constant 14 : index
    %c0_116 = arith.constant 0 : index
    %c0_117 = arith.constant 0 : index
    %149 = vector.load %arg5[%c14, %c0_116, %c0_117] : memref<16x18x162xbf16, #tpu.memory_space<vmem>>, vector<1x18x162xbf16>
    %150 = vector.shape_cast %149 : vector<1x18x162xbf16> to vector<18x162xbf16>
    %cst_118 = arith.constant dense<0.000000e+00> : vector<18x32xf32>
    %151 = tpu.matmul %150, %35, %cst_118 {dimension_numbers = #tpu.dot_dimension_numbers<[1], [0], [0], [1], [0, 0, 1, 1], [], []>} : vector<18x162xbf16>, vector<162x32xbf16>, vector<18x32xf32> -> vector<18x32xf32>
    %152 = arith.truncf %151 : vector<18x32xf32> to vector<18x32xbf16>
    %c14_119 = arith.constant 14 : index
    %c0_120 = arith.constant 0 : index
    %c0_121 = arith.constant 0 : index
    %153 = vector.load %arg6[%c14_119, %c0_120, %c0_121] : memref<16x32x64xbf16, #tpu.memory_space<vmem>>, vector<1x32x64xbf16>
    %154 = vector.shape_cast %153 : vector<1x32x64xbf16> to vector<32x64xbf16>
    %cst_122 = arith.constant dense<0.000000e+00> : vector<18x64xf32>
    %155 = tpu.matmul %152, %154, %cst_122 {dimension_numbers = #tpu.dot_dimension_numbers<[1], [0], [0], [1], [0, 0, 1, 1], [], []>} : vector<18x32xbf16>, vector<32x64xbf16>, vector<18x64xf32> -> vector<18x64xf32>
    %156 = arith.addf %148, %155 : vector<18x64xf32>
    %c15 = arith.constant 15 : index
    %c0_123 = arith.constant 0 : index
    %c0_124 = arith.constant 0 : index
    %157 = vector.load %arg5[%c15, %c0_123, %c0_124] : memref<16x18x162xbf16, #tpu.memory_space<vmem>>, vector<1x18x162xbf16>
    %158 = vector.shape_cast %157 : vector<1x18x162xbf16> to vector<18x162xbf16>
    %cst_125 = arith.constant dense<0.000000e+00> : vector<18x32xf32>
    %159 = tpu.matmul %158, %35, %cst_125 {dimension_numbers = #tpu.dot_dimension_numbers<[1], [0], [0], [1], [0, 0, 1, 1], [], []>} : vector<18x162xbf16>, vector<162x32xbf16>, vector<18x32xf32> -> vector<18x32xf32>
    %160 = arith.truncf %159 : vector<18x32xf32> to vector<18x32xbf16>
    %c15_126 = arith.constant 15 : index
    %c0_127 = arith.constant 0 : index
    %c0_128 = arith.constant 0 : index
    %161 = vector.load %arg6[%c15_126, %c0_127, %c0_128] : memref<16x32x64xbf16, #tpu.memory_space<vmem>>, vector<1x32x64xbf16>
    %162 = vector.shape_cast %161 : vector<1x32x64xbf16> to vector<32x64xbf16>
    %cst_129 = arith.constant dense<0.000000e+00> : vector<18x64xf32>
    %163 = tpu.matmul %160, %162, %cst_129 {dimension_numbers = #tpu.dot_dimension_numbers<[1], [0], [0], [1], [0, 0, 1, 1], [], []>} : vector<18x32xbf16>, vector<32x64xbf16>, vector<18x64xf32> -> vector<18x64xf32>
    %164 = arith.addf %156, %163 : vector<18x64xf32>
    %c0_130 = arith.constant 0 : index
    %c0_131 = arith.constant 0 : index
    %165 = vector.load %arg7[%c0_130, %c0_131] : memref<1x64xf32, #tpu.memory_space<vmem>>, vector<1x64xf32>
    %166 = vector.broadcast %165 : vector<1x64xf32> to vector<18x64xf32>
    %167 = arith.addf %164, %166 : vector<18x64xf32>
    %c0_132 = arith.constant 0 : index
    %c0_133 = arith.constant 0 : index
    %168 = vector.load %arg8[%c0_132, %c0_133] : memref<1x64xf32, #tpu.memory_space<vmem>>, vector<1x64xf32>
    %c0_134 = arith.constant 0 : index
    %c0_135 = arith.constant 0 : index
    %169 = vector.load %arg9[%c0_134, %c0_135] : memref<1x64xf32, #tpu.memory_space<vmem>>, vector<1x64xf32>
    %cst_136 = arith.constant dense<0.000000e+00> : vector<64xf32>
    %170 = vector.multi_reduction <add>, %167, %cst_136 [0] : vector<18x64xf32> to vector<64xf32>
    %171 = vector.shape_cast %170 : vector<64xf32> to vector<1x64xf32>
    %172 = arith.mulf %167, %167 : vector<18x64xf32>
    %cst_137 = arith.constant dense<0.000000e+00> : vector<64xf32>
    %173 = vector.multi_reduction <add>, %172, %cst_137 [0] : vector<18x64xf32> to vector<64xf32>
    %174 = vector.shape_cast %173 : vector<64xf32> to vector<1x64xf32>
    %cst_138 = arith.constant 0.055555556 : f32
    %175 = vector.broadcast %cst_138 : f32 to vector<1x64xf32>
    %176 = arith.mulf %171, %175 : vector<1x64xf32>
    %cst_139 = arith.constant 0.055555556 : f32
    %177 = vector.broadcast %cst_139 : f32 to vector<1x64xf32>
    %178 = arith.mulf %174, %177 : vector<1x64xf32>
    %179 = arith.mulf %176, %176 : vector<1x64xf32>
    %180 = arith.subf %178, %179 : vector<1x64xf32>
    %181 = vector.broadcast %176 : vector<1x64xf32> to vector<18x64xf32>
    %182 = arith.subf %167, %181 : vector<18x64xf32>
    %cst_140 = arith.constant 9.99999974E-6 : f32
    %183 = vector.broadcast %cst_140 : f32 to vector<1x64xf32>
    %184 = arith.addf %180, %183 : vector<1x64xf32>
    %185 = math.rsqrt %184 : vector<1x64xf32>
    %186 = vector.broadcast %185 : vector<1x64xf32> to vector<18x64xf32>
    %187 = arith.mulf %182, %186 : vector<18x64xf32>
    %188 = vector.broadcast %168 : vector<1x64xf32> to vector<18x64xf32>
    %189 = arith.mulf %187, %188 : vector<18x64xf32>
    %190 = vector.broadcast %169 : vector<1x64xf32> to vector<18x64xf32>
    %191 = arith.addf %189, %190 : vector<18x64xf32>
    %cst_141 = arith.constant 0.000000e+00 : f32
    %192 = vector.broadcast %cst_141 : f32 to vector<18x64xf32>
    %193 = arith.cmpf oge, %191, %192 : vector<18x64xf32>
    %cst_142 = arith.constant 0.00999999977 : f32
    %194 = vector.broadcast %cst_142 : f32 to vector<18x64xf32>
    %195 = arith.mulf %194, %191 : vector<18x64xf32>
    %196 = arith.select %193, %191, %195 : vector<18x64xi1>, vector<18x64xf32>
    %197 = arith.truncf %196 : vector<18x64xf32> to vector<18x64xbf16>
    %cst_143 = arith.constant 0.000000e+00 : f32
    %198 = vector.broadcast %cst_143 : f32 to vector<2x64xf32>
    %c0_144 = arith.constant 0 : index
    %c0_145 = arith.constant 0 : index
    %c0_146 = arith.constant 0 : index
    %199 = vector.load %arg10[%c0_144, %c0_145, %c0_146] : memref<9x2x18xbf16, #tpu.memory_space<vmem>>, vector<1x2x18xbf16>
    %200 = vector.shape_cast %199 : vector<1x2x18xbf16> to vector<2x18xbf16>
    %cst_147 = arith.constant dense<0.000000e+00> : vector<2x64xf32>
    %201 = tpu.matmul %200, %197, %cst_147 {dimension_numbers = #tpu.dot_dimension_numbers<[1], [0], [0], [1], [0, 0, 1, 1], [], []>} : vector<2x18xbf16>, vector<18x64xbf16>, vector<2x64xf32> -> vector<2x64xf32>
    %202 = arith.truncf %201 : vector<2x64xf32> to vector<2x64xbf16>
    %c0_148 = arith.constant 0 : index
    %c0_149 = arith.constant 0 : index
    %c0_150 = arith.constant 0 : index
    %203 = vector.load %arg11[%c0_148, %c0_149, %c0_150] : memref<9x64x64xbf16, #tpu.memory_space<vmem>>, vector<1x64x64xbf16>
    %204 = vector.shape_cast %203 : vector<1x64x64xbf16> to vector<64x64xbf16>
    %cst_151 = arith.constant dense<0.000000e+00> : vector<2x64xf32>
    %205 = tpu.matmul %202, %204, %cst_151 {dimension_numbers = #tpu.dot_dimension_numbers<[1], [0], [0], [1], [0, 0, 1, 1], [], []>} : vector<2x64xbf16>, vector<64x64xbf16>, vector<2x64xf32> -> vector<2x64xf32>
    %206 = arith.addf %198, %205 : vector<2x64xf32>
    %c1_152 = arith.constant 1 : index
    %c0_153 = arith.constant 0 : index
    %c0_154 = arith.constant 0 : index
    %207 = vector.load %arg10[%c1_152, %c0_153, %c0_154] : memref<9x2x18xbf16, #tpu.memory_space<vmem>>, vector<1x2x18xbf16>
    %208 = vector.shape_cast %207 : vector<1x2x18xbf16> to vector<2x18xbf16>
    %cst_155 = arith.constant dense<0.000000e+00> : vector<2x64xf32>
    %209 = tpu.matmul %208, %197, %cst_155 {dimension_numbers = #tpu.dot_dimension_numbers<[1], [0], [0], [1], [0, 0, 1, 1], [], []>} : vector<2x18xbf16>, vector<18x64xbf16>, vector<2x64xf32> -> vector<2x64xf32>
    %210 = arith.truncf %209 : vector<2x64xf32> to vector<2x64xbf16>
    %c1_156 = arith.constant 1 : index
    %c0_157 = arith.constant 0 : index
    %c0_158 = arith.constant 0 : index
    %211 = vector.load %arg11[%c1_156, %c0_157, %c0_158] : memref<9x64x64xbf16, #tpu.memory_space<vmem>>, vector<1x64x64xbf16>
    %212 = vector.shape_cast %211 : vector<1x64x64xbf16> to vector<64x64xbf16>
    %cst_159 = arith.constant dense<0.000000e+00> : vector<2x64xf32>
    %213 = tpu.matmul %210, %212, %cst_159 {dimension_numbers = #tpu.dot_dimension_numbers<[1], [0], [0], [1], [0, 0, 1, 1], [], []>} : vector<2x64xbf16>, vector<64x64xbf16>, vector<2x64xf32> -> vector<2x64xf32>
    %214 = arith.addf %206, %213 : vector<2x64xf32>
    %c2_160 = arith.constant 2 : index
    %c0_161 = arith.constant 0 : index
    %c0_162 = arith.constant 0 : index
    %215 = vector.load %arg10[%c2_160, %c0_161, %c0_162] : memref<9x2x18xbf16, #tpu.memory_space<vmem>>, vector<1x2x18xbf16>
    %216 = vector.shape_cast %215 : vector<1x2x18xbf16> to vector<2x18xbf16>
    %cst_163 = arith.constant dense<0.000000e+00> : vector<2x64xf32>
    %217 = tpu.matmul %216, %197, %cst_163 {dimension_numbers = #tpu.dot_dimension_numbers<[1], [0], [0], [1], [0, 0, 1, 1], [], []>} : vector<2x18xbf16>, vector<18x64xbf16>, vector<2x64xf32> -> vector<2x64xf32>
    %218 = arith.truncf %217 : vector<2x64xf32> to vector<2x64xbf16>
    %c2_164 = arith.constant 2 : index
    %c0_165 = arith.constant 0 : index
    %c0_166 = arith.constant 0 : index
    %219 = vector.load %arg11[%c2_164, %c0_165, %c0_166] : memref<9x64x64xbf16, #tpu.memory_space<vmem>>, vector<1x64x64xbf16>
    %220 = vector.shape_cast %219 : vector<1x64x64xbf16> to vector<64x64xbf16>
    %cst_167 = arith.constant dense<0.000000e+00> : vector<2x64xf32>
    %221 = tpu.matmul %218, %220, %cst_167 {dimension_numbers = #tpu.dot_dimension_numbers<[1], [0], [0], [1], [0, 0, 1, 1], [], []>} : vector<2x64xbf16>, vector<64x64xbf16>, vector<2x64xf32> -> vector<2x64xf32>
    %222 = arith.addf %214, %221 : vector<2x64xf32>
    %c3_168 = arith.constant 3 : index
    %c0_169 = arith.constant 0 : index
    %c0_170 = arith.constant 0 : index
    %223 = vector.load %arg10[%c3_168, %c0_169, %c0_170] : memref<9x2x18xbf16, #tpu.memory_space<vmem>>, vector<1x2x18xbf16>
    %224 = vector.shape_cast %223 : vector<1x2x18xbf16> to vector<2x18xbf16>
    %cst_171 = arith.constant dense<0.000000e+00> : vector<2x64xf32>
    %225 = tpu.matmul %224, %197, %cst_171 {dimension_numbers = #tpu.dot_dimension_numbers<[1], [0], [0], [1], [0, 0, 1, 1], [], []>} : vector<2x18xbf16>, vector<18x64xbf16>, vector<2x64xf32> -> vector<2x64xf32>
    %226 = arith.truncf %225 : vector<2x64xf32> to vector<2x64xbf16>
    %c3_172 = arith.constant 3 : index
    %c0_173 = arith.constant 0 : index
    %c0_174 = arith.constant 0 : index
    %227 = vector.load %arg11[%c3_172, %c0_173, %c0_174] : memref<9x64x64xbf16, #tpu.memory_space<vmem>>, vector<1x64x64xbf16>
    %228 = vector.shape_cast %227 : vector<1x64x64xbf16> to vector<64x64xbf16>
    %cst_175 = arith.constant dense<0.000000e+00> : vector<2x64xf32>
    %229 = tpu.matmul %226, %228, %cst_175 {dimension_numbers = #tpu.dot_dimension_numbers<[1], [0], [0], [1], [0, 0, 1, 1], [], []>} : vector<2x64xbf16>, vector<64x64xbf16>, vector<2x64xf32> -> vector<2x64xf32>
    %230 = arith.addf %222, %229 : vector<2x64xf32>
    %c4_176 = arith.constant 4 : index
    %c0_177 = arith.constant 0 : index
    %c0_178 = arith.constant 0 : index
    %231 = vector.load %arg10[%c4_176, %c0_177, %c0_178] : memref<9x2x18xbf16, #tpu.memory_space<vmem>>, vector<1x2x18xbf16>
    %232 = vector.shape_cast %231 : vector<1x2x18xbf16> to vector<2x18xbf16>
    %cst_179 = arith.constant dense<0.000000e+00> : vector<2x64xf32>
    %233 = tpu.matmul %232, %197, %cst_179 {dimension_numbers = #tpu.dot_dimension_numbers<[1], [0], [0], [1], [0, 0, 1, 1], [], []>} : vector<2x18xbf16>, vector<18x64xbf16>, vector<2x64xf32> -> vector<2x64xf32>
    %234 = arith.truncf %233 : vector<2x64xf32> to vector<2x64xbf16>
    %c4_180 = arith.constant 4 : index
    %c0_181 = arith.constant 0 : index
    %c0_182 = arith.constant 0 : index
    %235 = vector.load %arg11[%c4_180, %c0_181, %c0_182] : memref<9x64x64xbf16, #tpu.memory_space<vmem>>, vector<1x64x64xbf16>
    %236 = vector.shape_cast %235 : vector<1x64x64xbf16> to vector<64x64xbf16>
    %cst_183 = arith.constant dense<0.000000e+00> : vector<2x64xf32>
    %237 = tpu.matmul %234, %236, %cst_183 {dimension_numbers = #tpu.dot_dimension_numbers<[1], [0], [0], [1], [0, 0, 1, 1], [], []>} : vector<2x64xbf16>, vector<64x64xbf16>, vector<2x64xf32> -> vector<2x64xf32>
    %238 = arith.addf %230, %237 : vector<2x64xf32>
    %c5_184 = arith.constant 5 : index
    %c0_185 = arith.constant 0 : index
    %c0_186 = arith.constant 0 : index
    %239 = vector.load %arg10[%c5_184, %c0_185, %c0_186] : memref<9x2x18xbf16, #tpu.memory_space<vmem>>, vector<1x2x18xbf16>
    %240 = vector.shape_cast %239 : vector<1x2x18xbf16> to vector<2x18xbf16>
    %cst_187 = arith.constant dense<0.000000e+00> : vector<2x64xf32>
    %241 = tpu.matmul %240, %197, %cst_187 {dimension_numbers = #tpu.dot_dimension_numbers<[1], [0], [0], [1], [0, 0, 1, 1], [], []>} : vector<2x18xbf16>, vector<18x64xbf16>, vector<2x64xf32> -> vector<2x64xf32>
    %242 = arith.truncf %241 : vector<2x64xf32> to vector<2x64xbf16>
    %c5_188 = arith.constant 5 : index
    %c0_189 = arith.constant 0 : index
    %c0_190 = arith.constant 0 : index
    %243 = vector.load %arg11[%c5_188, %c0_189, %c0_190] : memref<9x64x64xbf16, #tpu.memory_space<vmem>>, vector<1x64x64xbf16>
    %244 = vector.shape_cast %243 : vector<1x64x64xbf16> to vector<64x64xbf16>
    %cst_191 = arith.constant dense<0.000000e+00> : vector<2x64xf32>
    %245 = tpu.matmul %242, %244, %cst_191 {dimension_numbers = #tpu.dot_dimension_numbers<[1], [0], [0], [1], [0, 0, 1, 1], [], []>} : vector<2x64xbf16>, vector<64x64xbf16>, vector<2x64xf32> -> vector<2x64xf32>
    %246 = arith.addf %238, %245 : vector<2x64xf32>
    %c6_192 = arith.constant 6 : index
    %c0_193 = arith.constant 0 : index
    %c0_194 = arith.constant 0 : index
    %247 = vector.load %arg10[%c6_192, %c0_193, %c0_194] : memref<9x2x18xbf16, #tpu.memory_space<vmem>>, vector<1x2x18xbf16>
    %248 = vector.shape_cast %247 : vector<1x2x18xbf16> to vector<2x18xbf16>
    %cst_195 = arith.constant dense<0.000000e+00> : vector<2x64xf32>
    %249 = tpu.matmul %248, %197, %cst_195 {dimension_numbers = #tpu.dot_dimension_numbers<[1], [0], [0], [1], [0, 0, 1, 1], [], []>} : vector<2x18xbf16>, vector<18x64xbf16>, vector<2x64xf32> -> vector<2x64xf32>
    %250 = arith.truncf %249 : vector<2x64xf32> to vector<2x64xbf16>
    %c6_196 = arith.constant 6 : index
    %c0_197 = arith.constant 0 : index
    %c0_198 = arith.constant 0 : index
    %251 = vector.load %arg11[%c6_196, %c0_197, %c0_198] : memref<9x64x64xbf16, #tpu.memory_space<vmem>>, vector<1x64x64xbf16>
    %252 = vector.shape_cast %251 : vector<1x64x64xbf16> to vector<64x64xbf16>
    %cst_199 = arith.constant dense<0.000000e+00> : vector<2x64xf32>
    %253 = tpu.matmul %250, %252, %cst_199 {dimension_numbers = #tpu.dot_dimension_numbers<[1], [0], [0], [1], [0, 0, 1, 1], [], []>} : vector<2x64xbf16>, vector<64x64xbf16>, vector<2x64xf32> -> vector<2x64xf32>
    %254 = arith.addf %246, %253 : vector<2x64xf32>
    %c7_200 = arith.constant 7 : index
    %c0_201 = arith.constant 0 : index
    %c0_202 = arith.constant 0 : index
    %255 = vector.load %arg10[%c7_200, %c0_201, %c0_202] : memref<9x2x18xbf16, #tpu.memory_space<vmem>>, vector<1x2x18xbf16>
    %256 = vector.shape_cast %255 : vector<1x2x18xbf16> to vector<2x18xbf16>
    %cst_203 = arith.constant dense<0.000000e+00> : vector<2x64xf32>
    %257 = tpu.matmul %256, %197, %cst_203 {dimension_numbers = #tpu.dot_dimension_numbers<[1], [0], [0], [1], [0, 0, 1, 1], [], []>} : vector<2x18xbf16>, vector<18x64xbf16>, vector<2x64xf32> -> vector<2x64xf32>
    %258 = arith.truncf %257 : vector<2x64xf32> to vector<2x64xbf16>
    %c7_204 = arith.constant 7 : index
    %c0_205 = arith.constant 0 : index
    %c0_206 = arith.constant 0 : index
    %259 = vector.load %arg11[%c7_204, %c0_205, %c0_206] : memref<9x64x64xbf16, #tpu.memory_space<vmem>>, vector<1x64x64xbf16>
    %260 = vector.shape_cast %259 : vector<1x64x64xbf16> to vector<64x64xbf16>
    %cst_207 = arith.constant dense<0.000000e+00> : vector<2x64xf32>
    %261 = tpu.matmul %258, %260, %cst_207 {dimension_numbers = #tpu.dot_dimension_numbers<[1], [0], [0], [1], [0, 0, 1, 1], [], []>} : vector<2x64xbf16>, vector<64x64xbf16>, vector<2x64xf32> -> vector<2x64xf32>
    %262 = arith.addf %254, %261 : vector<2x64xf32>
    %c8_208 = arith.constant 8 : index
    %c0_209 = arith.constant 0 : index
    %c0_210 = arith.constant 0 : index
    %263 = vector.load %arg10[%c8_208, %c0_209, %c0_210] : memref<9x2x18xbf16, #tpu.memory_space<vmem>>, vector<1x2x18xbf16>
    %264 = vector.shape_cast %263 : vector<1x2x18xbf16> to vector<2x18xbf16>
    %cst_211 = arith.constant dense<0.000000e+00> : vector<2x64xf32>
    %265 = tpu.matmul %264, %197, %cst_211 {dimension_numbers = #tpu.dot_dimension_numbers<[1], [0], [0], [1], [0, 0, 1, 1], [], []>} : vector<2x18xbf16>, vector<18x64xbf16>, vector<2x64xf32> -> vector<2x64xf32>
    %266 = arith.truncf %265 : vector<2x64xf32> to vector<2x64xbf16>
    %c8_212 = arith.constant 8 : index
    %c0_213 = arith.constant 0 : index
    %c0_214 = arith.constant 0 : index
    %267 = vector.load %arg11[%c8_212, %c0_213, %c0_214] : memref<9x64x64xbf16, #tpu.memory_space<vmem>>, vector<1x64x64xbf16>
    %268 = vector.shape_cast %267 : vector<1x64x64xbf16> to vector<64x64xbf16>
    %cst_215 = arith.constant dense<0.000000e+00> : vector<2x64xf32>
    %269 = tpu.matmul %266, %268, %cst_215 {dimension_numbers = #tpu.dot_dimension_numbers<[1], [0], [0], [1], [0, 0, 1, 1], [], []>} : vector<2x64xbf16>, vector<64x64xbf16>, vector<2x64xf32> -> vector<2x64xf32>
    %270 = arith.addf %262, %269 : vector<2x64xf32>
    %c0_216 = arith.constant 0 : index
    %c0_217 = arith.constant 0 : index
    %271 = vector.load %arg12[%c0_216, %c0_217] : memref<1x64xf32, #tpu.memory_space<vmem>>, vector<1x64xf32>
    %272 = vector.broadcast %271 : vector<1x64xf32> to vector<2x64xf32>
    %273 = arith.addf %270, %272 : vector<2x64xf32>
    %c0_218 = arith.constant 0 : index
    %c0_219 = arith.constant 0 : index
    %274 = vector.load %arg13[%c0_218, %c0_219] : memref<1x64xf32, #tpu.memory_space<vmem>>, vector<1x64xf32>
    %c0_220 = arith.constant 0 : index
    %c0_221 = arith.constant 0 : index
    %275 = vector.load %arg14[%c0_220, %c0_221] : memref<1x64xf32, #tpu.memory_space<vmem>>, vector<1x64xf32>
    %cst_222 = arith.constant dense<0.000000e+00> : vector<64xf32>
    %276 = vector.multi_reduction <add>, %273, %cst_222 [0] : vector<2x64xf32> to vector<64xf32>
    %277 = vector.shape_cast %276 : vector<64xf32> to vector<1x64xf32>
    %278 = arith.mulf %273, %273 : vector<2x64xf32>
    %cst_223 = arith.constant dense<0.000000e+00> : vector<64xf32>
    %279 = vector.multi_reduction <add>, %278, %cst_223 [0] : vector<2x64xf32> to vector<64xf32>
    %280 = vector.shape_cast %279 : vector<64xf32> to vector<1x64xf32>
    %cst_224 = arith.constant 5.000000e-01 : f32
    %281 = vector.broadcast %cst_224 : f32 to vector<1x64xf32>
    %282 = arith.mulf %277, %281 : vector<1x64xf32>
    %cst_225 = arith.constant 5.000000e-01 : f32
    %283 = vector.broadcast %cst_225 : f32 to vector<1x64xf32>
    %284 = arith.mulf %280, %283 : vector<1x64xf32>
    %285 = arith.mulf %282, %282 : vector<1x64xf32>
    %286 = arith.subf %284, %285 : vector<1x64xf32>
    %287 = vector.broadcast %282 : vector<1x64xf32> to vector<2x64xf32>
    %288 = arith.subf %273, %287 : vector<2x64xf32>
    %cst_226 = arith.constant 9.99999974E-6 : f32
    %289 = vector.broadcast %cst_226 : f32 to vector<1x64xf32>
    %290 = arith.addf %286, %289 : vector<1x64xf32>
    %291 = math.rsqrt %290 : vector<1x64xf32>
    %292 = vector.broadcast %291 : vector<1x64xf32> to vector<2x64xf32>
    %293 = arith.mulf %288, %292 : vector<2x64xf32>
    %294 = vector.broadcast %274 : vector<1x64xf32> to vector<2x64xf32>
    %295 = arith.mulf %293, %294 : vector<2x64xf32>
    %296 = vector.broadcast %275 : vector<1x64xf32> to vector<2x64xf32>
    %297 = arith.addf %295, %296 : vector<2x64xf32>
    %cst_227 = arith.constant 0.000000e+00 : f32
    %298 = vector.broadcast %cst_227 : f32 to vector<2x64xf32>
    %299 = arith.cmpf oge, %297, %298 : vector<2x64xf32>
    %cst_228 = arith.constant 0.00999999977 : f32
    %300 = vector.broadcast %cst_228 : f32 to vector<2x64xf32>
    %301 = arith.mulf %300, %297 : vector<2x64xf32>
    %302 = arith.select %299, %297, %301 : vector<2x64xi1>, vector<2x64xf32>
    %303 = arith.truncf %302 : vector<2x64xf32> to vector<2x64xbf16>
    %c0_229 = arith.constant 0 : index
    %c0_230 = arith.constant 0 : index
    %304 = vector.load %arg15[%c0_229, %c0_230] : memref<64x512xbf16, #tpu.memory_space<vmem>>, vector<64x512xbf16>
    %cst_231 = arith.constant dense<0.000000e+00> : vector<2x512xf32>
    %305 = tpu.matmul %303, %304, %cst_231 {dimension_numbers = #tpu.dot_dimension_numbers<[1], [0], [0], [1], [0, 0, 1, 1], [], []>} : vector<2x64xbf16>, vector<64x512xbf16>, vector<2x512xf32> -> vector<2x512xf32>
    %c0_232 = arith.constant 0 : index
    %c0_233 = arith.constant 0 : index
    %306 = vector.load %arg16[%c0_232, %c0_233] : memref<1x512xf32, #tpu.memory_space<vmem>>, vector<1x512xf32>
    %307 = vector.broadcast %306 : vector<1x512xf32> to vector<2x512xf32>
    %308 = arith.addf %305, %307 : vector<2x512xf32>
    %cst_234 = arith.constant 0.000000e+00 : f32
    %309 = vector.broadcast %cst_234 : f32 to vector<2x512xf32>
    %310 = arith.cmpf oge, %308, %309 : vector<2x512xf32>
    %cst_235 = arith.constant 0.00999999977 : f32
    %311 = vector.broadcast %cst_235 : f32 to vector<2x512xf32>
    %312 = arith.mulf %311, %308 : vector<2x512xf32>
    %313 = arith.select %310, %308, %312 : vector<2x512xi1>, vector<2x512xf32>
    %314 = arith.truncf %313 : vector<2x512xf32> to vector<2x512xbf16>
    %c0_236 = arith.constant 0 : index
    %c0_237 = arith.constant 0 : index
    %315 = vector.load %arg17[%c0_236, %c0_237] : memref<512x5xbf16, #tpu.memory_space<vmem>>, vector<512x5xbf16>
    %cst_238 = arith.constant dense<0.000000e+00> : vector<2x5xf32>
    %316 = tpu.matmul %314, %315, %cst_238 {dimension_numbers = #tpu.dot_dimension_numbers<[1], [0], [0], [1], [0, 0, 1, 1], [], []>} : vector<2x512xbf16>, vector<512x5xbf16>, vector<2x5xf32> -> vector<2x5xf32>
    %c0_239 = arith.constant 0 : index
    %c0_240 = arith.constant 0 : index
    %317 = vector.load %arg18[%c0_239, %c0_240] : memref<1x5xf32, #tpu.memory_space<vmem>>, vector<1x5xf32>
    %318 = vector.broadcast %317 : vector<1x5xf32> to vector<2x5xf32>
    %319 = arith.addf %316, %318 : vector<2x5xf32>
    %c0_241 = arith.constant 0 : index
    %c0_242 = arith.constant 0 : index
    %320 = vector.load %arg19[%c0_241, %c0_242] : memref<2x5xf32, #tpu.memory_space<vmem>>, vector<2x5xf32>
    tpu.vector_store %arg19[%c0_241, %c0_242], %319 {strides = array<i32>} : memref<2x5xf32, #tpu.memory_space<vmem>>, vector<2x5xf32>,
    return
  }
}

</mosaic_0001>

<llo_original>
// kernel: network_forward.1
$region0: #{network_forward.1}
  #allocation0 [shape = 'u32[]', space=smem, size = 0x4, offset = 0x4, fixed_abs, tag = 'smem constant byte address 0x4 - core index']
  #allocation1 [shape = 'u32[144,128]{1,0:T(1,128)}', space=vmem, size = 0x12000, scoped, tag = 'internal scratch']
  %s0 = inlined_call_operand.vmem [shape: bf16[162,256], index: 0, kind: input, shape index: {}]
  %s1 = inlined_call_operand.vmem [shape: bf16[256,32], index: 1, kind: input, shape index: {}]
  %s2 = inlined_call_operand.vmem [shape: f32[1,32], index: 2, kind: input, shape index: {}]
  %s3 = inlined_call_operand.vmem [shape: f32[1,32], index: 3, kind: input, shape index: {}]
  %s4 = inlined_call_operand.vmem [shape: f32[1,32], index: 4, kind: input, shape index: {}]
  %s5 = inlined_call_operand.vmem [shape: bf16[16,18,162], index: 5, kind: input, shape index: {}]
  %s6 = inlined_call_operand.vmem [shape: bf16[16,32,64], index: 6, kind: input, shape index: {}]
  %s7 = inlined_call_operand.vmem [shape: f32[1,64], index: 7, kind: input, shape index: {}]
  %s8 = inlined_call_operand.vmem [shape: f32[1,64], index: 8, kind: input, shape index: {}]
  %s9 = inlined_call_operand.vmem [shape: f32[1,64], index: 9, kind: input, shape index: {}]
  %s10 = inlined_call_operand.vmem [shape: bf16[9,2,18], index: 10, kind: input, shape index: {}]
  %s11 = inlined_call_operand.vmem [shape: bf16[9,64,64], index: 11, kind: input, shape index: {}]
  %s12 = inlined_call_operand.vmem [shape: f32[1,64], index: 12, kind: input, shape index: {}]
  %s13 = inlined_call_operand.vmem [shape: f32[1,64], index: 13, kind: input, shape index: {}]
  %s14 = inlined_call_operand.vmem [shape: f32[1,64], index: 14, kind: input, shape index: {}]
  %s15 = inlined_call_operand.vmem [shape: bf16[64,512], index: 15, kind: input, shape index: {}]
  %s16 = inlined_call_operand.vmem [shape: f32[1,512], index: 16, kind: input, shape index: {}]
  %s17 = inlined_call_operand.vmem [shape: bf16[512,5], index: 17, kind: input, shape index: {}]
  %s18 = inlined_call_operand.vmem [shape: f32[1,5], index: 18, kind: input, shape index: {}]
  %s19 = inlined_call_operand.hbm [shape: f32[2,5], index: 19, kind: output, shape index: {}]
  %s20 = sld [smem:[#allocation0]]
  $region86: #{network_forward.1} parent=0
    _
  %s22 = ssub.s32 1, %s20
  %s23 = scalar_select 0, %s22, %s20
  $region1: #{network_forward.1} parent=0
    #allocation2 [shape = 'u8[1024]{0}', space=vmem, size = 0x400, scoped, tag = 'output window, operand 0, single buffered']
    #allocation3 [shape = 's32[1]{0}', space=sflag, size = 0x4, scoped, tag = 'scoped memory for network_forward.1']
    %24 = vsyncpa [#allocation3], 0
    // Predicated region
    $region2: #{network_forward.1} parent=1 // pred_check
      _
    $region3: #{network_forward.1} parent=1 // pred_check_branch
      %26 = sbr.rel (0) target = $region5
    $region4: #{network_forward.1} parent=1 // pred_region
      _
    $region5: #{network_forward.1} parent=1 // pred_fallthru
      _
    // Predicated region
    $region6: #{network_forward.1} parent=1 // pred_check
      _
    $region7: #{network_forward.1} parent=1 // pred_check_branch
      %28 = sbr.rel (0) target = $region9
    $region8: #{network_forward.1} parent=1 // pred_region
      _
    $region9: #{network_forward.1} parent=1 // pred_fallthru
      _
    // Predicated region
    $region10: #{network_forward.1} parent=1 // pred_check
      _
    $region11: #{network_forward.1} parent=1 // pred_check_branch
      %30 = sbr.rel (0) target = $region13
    $region12: #{network_forward.1} parent=1 // pred_region
      _
    $region13: #{network_forward.1} parent=1 // pred_fallthru
      _
    // Predicated region
    $region14: #{network_forward.1} parent=1 // pred_check
      _
    $region15: #{network_forward.1} parent=1 // pred_check_branch
      %32 = sbr.rel (0) target = $region17
    $region16: #{network_forward.1} parent=1 // pred_region
      _
    $region17: #{network_forward.1} parent=1 // pred_fallthru
      _
    // Predicated region
    $region18: #{network_forward.1} parent=1 // pred_check
      _
    $region19: #{network_forward.1} parent=1 // pred_check_branch
      %34 = sbr.rel (0) target = $region21
    $region20: #{network_forward.1} parent=1 // pred_region
      _
    $region21: #{network_forward.1} parent=1 // pred_fallthru
      _
    // Predicated region
    $region22: #{network_forward.1} parent=1 // pred_check
      _
    $region23: #{network_forward.1} parent=1 // pred_check_branch
      %36 = sbr.rel (0) target = $region25
    $region24: #{network_forward.1} parent=1 // pred_region
      _
    $region25: #{network_forward.1} parent=1 // pred_fallthru
      _
    // Predicated region
    $region26: #{network_forward.1} parent=1 // pred_check
      _
    $region27: #{network_forward.1} parent=1 // pred_check_branch
      %38 = sbr.rel (0) target = $region29
    $region28: #{network_forward.1} parent=1 // pred_region
      _
    $region29: #{network_forward.1} parent=1 // pred_fallthru
      _
    // Predicated region
    $region30: #{network_forward.1} parent=1 // pred_check
      _
    $region31: #{network_forward.1} parent=1 // pred_check_branch
      %40 = sbr.rel (0) target = $region33
    $region32: #{network_forward.1} parent=1 // pred_region
      _
    $region33: #{network_forward.1} parent=1 // pred_fallthru
      _
    // Predicated region
    $region34: #{network_forward.1} parent=1 // pred_check
      _
    $region35: #{network_forward.1} parent=1 // pred_check_branch
      %42 = sbr.rel (0) target = $region37
    $region36: #{network_forward.1} parent=1 // pred_region
      _
    $region37: #{network_forward.1} parent=1 // pred_fallthru
      _
    // Predicated region
    $region38: #{network_forward.1} parent=1 // pred_check
      _
    $region39: #{network_forward.1} parent=1 // pred_check_branch
      %44 = sbr.rel (0) target = $region41
    $region40: #{network_forward.1} parent=1 // pred_region
      _
    $region41: #{network_forward.1} parent=1 // pred_fallthru
      _
    // Predicated region
    $region42: #{network_forward.1} parent=1 // pred_check
      _
    $region43: #{network_forward.1} parent=1 // pred_check_branch
      %46 = sbr.rel (0) target = $region45
    $region44: #{network_forward.1} parent=1 // pred_region
      _
    $region45: #{network_forward.1} parent=1 // pred_fallthru
      _
    // Predicated region
    $region46: #{network_forward.1} parent=1 // pred_check
      _
    $region47: #{network_forward.1} parent=1 // pred_check_branch
      %48 = sbr.rel (0) target = $region49
    $region48: #{network_forward.1} parent=1 // pred_region
      _
    $region49: #{network_forward.1} parent=1 // pred_fallthru
      _
    // Predicated region
    $region50: #{network_forward.1} parent=1 // pred_check
      _
    $region51: #{network_forward.1} parent=1 // pred_check_branch
      %50 = sbr.rel (0) target = $region53
    $region52: #{network_forward.1} parent=1 // pred_region
      _
    $region53: #{network_forward.1} parent=1 // pred_fallthru
      _
    // Predicated region
    $region54: #{network_forward.1} parent=1 // pred_check
      _
    $region55: #{network_forward.1} parent=1 // pred_check_branch
      %52 = sbr.rel (0) target = $region57
    $region56: #{network_forward.1} parent=1 // pred_region
      _
    $region57: #{network_forward.1} parent=1 // pred_fallthru
      _
    // Predicated region
    $region58: #{network_forward.1} parent=1 // pred_check
      _
    $region59: #{network_forward.1} parent=1 // pred_check_branch
      %54 = sbr.rel (0) target = $region61
    $region60: #{network_forward.1} parent=1 // pred_region
      _
    $region61: #{network_forward.1} parent=1 // pred_fallthru
      _
    // Predicated region
    $region62: #{network_forward.1} parent=1 // pred_check
      _
    $region63: #{network_forward.1} parent=1 // pred_check_branch
      %56 = sbr.rel (0) target = $region65
    $region64: #{network_forward.1} parent=1 // pred_region
      _
    $region65: #{network_forward.1} parent=1 // pred_fallthru
      _
    // Predicated region
    $region66: #{network_forward.1} parent=1 // pred_check
      _
    $region67: #{network_forward.1} parent=1 // pred_check_branch
      %58 = sbr.rel (0) target = $region69
    $region68: #{network_forward.1} parent=1 // pred_region
      _
    $region69: #{network_forward.1} parent=1 // pred_fallthru
      _
    // Predicated region
    $region70: #{network_forward.1} parent=1 // pred_check
      _
    $region71: #{network_forward.1} parent=1 // pred_check_branch
      %60 = sbr.rel (0) target = $region73
    $region72: #{network_forward.1} parent=1 // pred_region
      _
    $region73: #{network_forward.1} parent=1 // pred_fallthru
      _
    // Predicated region
    $region74: #{network_forward.1} parent=1 // pred_check
      _
    $region75: #{network_forward.1} parent=1 // pred_check_branch
      %62 = sbr.rel (0) target = $region77
    $region76: #{network_forward.1} parent=1 // pred_region
      _
    $region77: #{network_forward.1} parent=1 // pred_fallthru
      _
    %v64 = vld [vmem:[%s0] sm:$0xff]
    %v65 = vld [vmem:[%s0 + $0x8] sm:$0xff]
    %v66 = vld [vmem:[%s0 + $0x10] sm:$0xff]
    %v67 = vld [vmem:[%s0 + $0x18] sm:$0xff]
    %v68 = vld [vmem:[%s0 + $0x20] sm:$0xff]
    %v69 = vld [vmem:[%s0 + $0x28] sm:$0xff]
    %v70 = vld [vmem:[%s0 + $0x30] sm:$0xff]
    %v71 = vld [vmem:[%s0 + $0x38] sm:$0xff]
    %v72 = vld [vmem:[%s0 + $0x40] sm:$0xff]
    %v73 = vld [vmem:[%s0 + $0x48] sm:$0xff]
    %v74 = vld [vmem:[%s0 + $0x50] sm:$0xff]
    %v75 = vld [vmem:[%s0 + $0x58] sm:$0xff]
    %v76 = vld [vmem:[%s0 + $0x60] sm:$0xff]
    %v77 = vld [vmem:[%s0 + $0x68] sm:$0xff]
    %v78 = vld [vmem:[%s0 + $0x70] sm:$0xff]
    %v79 = vld [vmem:[%s0 + $0x78] sm:$0xff]
    %v80 = vld [vmem:[%s0 + $0x80] sm:$0xff]
    %v81 = vld [vmem:[%s0 + $0x88] sm:$0xff]
    %v82 = vld [vmem:[%s0 + $0x90] sm:$0xff]
    %v83 = vld [vmem:[%s0 + $0x98] sm:$0xff]
    %v84 = vld [vmem:[%s0 + $0xa0] sm:$0x11]
    %v85 = vld [vmem:[%s1] sm:$0xf]
    %v86 = vld [vmem:[%s1 + $0x4] sm:$0xf]
    %v87 = vld [vmem:[%s1 + $0x8] sm:$0xf]
    %v88 = vld [vmem:[%s1 + $0xc] sm:$0xf]
    %v89 = vld [vmem:[%s1 + $0x10] sm:$0xf]
    %v90 = vld [vmem:[%s1 + $0x14] sm:$0xf]
    %v91 = vld [vmem:[%s1 + $0x18] sm:$0xf]
    %v92 = vld [vmem:[%s1 + $0x1c] sm:$0xf]
    %v93 = vld [vmem:[%s1 + $0x20] sm:$0xf]
    %v94 = vld [vmem:[%s1 + $0x24] sm:$0xf]
    %v95 = vld [vmem:[%s1 + $0x28] sm:$0xf]
    %v96 = vld [vmem:[%s1 + $0x2c] sm:$0xf]
    %v97 = vld [vmem:[%s1 + $0x30] sm:$0xf]
    %v98 = vld [vmem:[%s1 + $0x34] sm:$0xf]
    %v99 = vld [vmem:[%s1 + $0x38] sm:$0xf]
    %v100 = vld [vmem:[%s1 + $0x3c] sm:$0xf]
    %v101 = vld [vmem:[%s1 + $0x40] sm:$0xf]
    %v102 = vld [vmem:[%s1 + $0x44] sm:$0xf]
    %v103 = vld [vmem:[%s1 + $0x48] sm:$0xf]
    %v104 = vld [vmem:[%s1 + $0x4c] sm:$0xf]
    %v105 = vld [vmem:[%s1 + $0x50] sm:$0xf]
    %v106 = vld [vmem:[%s1 + $0x54] sm:$0xf]
    %v107 = vld [vmem:[%s1 + $0x58] sm:$0xf]
    %v108 = vld [vmem:[%s1 + $0x5c] sm:$0xf]
    %v109 = vld [vmem:[%s1 + $0x60] sm:$0xf]
    %v110 = vld [vmem:[%s1 + $0x64] sm:$0xf]
    %v111 = vld [vmem:[%s1 + $0x68] sm:$0xf]
    %v112 = vld [vmem:[%s1 + $0x6c] sm:$0xf]
    %v113 = vld [vmem:[%s1 + $0x70] sm:$0xf]
    %v114 = vld [vmem:[%s1 + $0x74] sm:$0xf]
    %v115 = vld [vmem:[%s1 + $0x78] sm:$0xf]
    %v116 = vld [vmem:[%s1 + $0x7c] sm:$0xf]
    %v117 = vld [vmem:[%s2] sm:$0x1]
    %v119 = vlaneseq
    %v120 = vshrl.u32 %v119, 7
    %v121 = vsub.s32 0, %v120
    %v122 = vrot.slane %v117, %v121
    %v145 = vunpack.c.l.b16 %v64
    %v146 = vunpack.c.h.b16 %v64
    %v147 = vunpack.c.l.b16 %v65
    %v148 = vunpack.c.h.b16 %v65
    %v149 = vunpack.c.l.b16 %v66
    %v150 = vunpack.c.h.b16 %v66
    %v151 = vunpack.c.l.b16 %v67
    %v152 = vunpack.c.h.b16 %v67
    %v153 = vunpack.c.l.b16 %v68
    %v154 = vunpack.c.h.b16 %v68
    %v155 = vunpack.c.l.b16 %v69
    %v156 = vunpack.c.h.b16 %v69
    %v157 = vunpack.c.l.b16 %v70
    %v158 = vunpack.c.h.b16 %v70
    %v159 = vunpack.c.l.b16 %v71
    %v160 = vunpack.c.h.b16 %v71
    %v161 = vunpack.c.l.b16 %v72
    %v162 = vunpack.c.h.b16 %v72
    %v163 = vunpack.c.l.b16 %v73
    %v164 = vunpack.c.h.b16 %v73
    %v165 = vunpack.c.l.b16 %v74
    %v166 = vunpack.c.h.b16 %v74
    %v167 = vunpack.c.l.b16 %v75
    %v168 = vunpack.c.h.b16 %v75
    %v169 = vunpack.c.l.b16 %v76
    %v170 = vunpack.c.h.b16 %v76
    %v171 = vunpack.c.l.b16 %v77
    %v172 = vunpack.c.h.b16 %v77
    %v173 = vunpack.c.l.b16 %v78
    %v174 = vunpack.c.h.b16 %v78
    %v175 = vunpack.c.l.b16 %v79
    %v176 = vunpack.c.h.b16 %v79
    %v177 = vunpack.c.l.b16 %v80
    %v178 = vunpack.c.h.b16 %v80
    %v179 = vunpack.c.l.b16 %v81
    %v180 = vunpack.c.h.b16 %v81
    %v181 = vunpack.c.l.b16 %v82
    %v182 = vunpack.c.h.b16 %v82
    %v183 = vunpack.c.l.b16 %v83
    %v184 = vunpack.c.h.b16 %v83
    %v185 = vunpack.c.l.b16 %v84
    %v186 = vunpack.c.h.b16 %v84
    %v187 = vpack.c.b16 %v147, %v145
    %v188 = vpack.c.b16 %v148, %v146
    %v189 = vpack.c.b16 %v151, %v149
    %v190 = vpack.c.b16 %v152, %v150
    %v191 = vpack.c.b16 %v155, %v153
    %v192 = vpack.c.b16 %v156, %v154
    %v193 = vpack.c.b16 %v159, %v157
    %v194 = vpack.c.b16 %v160, %v158
    %v195 = vpack.c.b16 %v163, %v161
    %v196 = vpack.c.b16 %v164, %v162
    %v197 = vpack.c.b16 %v167, %v165
    %v198 = vpack.c.b16 %v168, %v166
    %v199 = vpack.c.b16 %v171, %v169
    %v200 = vpack.c.b16 %v172, %v170
    %v201 = vpack.c.b16 %v175, %v173
    %v202 = vpack.c.b16 %v176, %v174
    %v203 = vpack.c.b16 %v179, %v177
    %v204 = vpack.c.b16 %v180, %v178
    %v205 = vpack.c.b16 %v183, %v181
    %v206 = vpack.c.b16 %v184, %v182
    %v207 = vpack.c.b16 %v185, %v185
    %v208 = vpack.c.b16 %v186, %v186
    %v263 = vunpack.c.l.b16 %v85
    %v264 = vunpack.c.l.b16 %v86
    %v265 = vunpack.c.l.b16 %v87
    %v266 = vunpack.c.l.b16 %v88
    %v267 = vunpack.c.l.b16 %v89
    %v268 = vunpack.c.l.b16 %v90
    %v269 = vunpack.c.l.b16 %v91
    %v270 = vunpack.c.l.b16 %v92
    %v271 = vunpack.c.l.b16 %v93
    %v272 = vunpack.c.l.b16 %v94
    %v273 = vunpack.c.l.b16 %v95
    %v274 = vunpack.c.l.b16 %v96
    %v275 = vunpack.c.l.b16 %v97
    %v276 = vunpack.c.l.b16 %v98
    %v277 = vunpack.c.l.b16 %v99
    %v278 = vunpack.c.l.b16 %v100
    %v279 = vunpack.c.l.b16 %v101
    %v280 = vunpack.c.l.b16 %v102
    %v281 = vunpack.c.l.b16 %v103
    %v282 = vunpack.c.l.b16 %v104
    %v283 = vunpack.c.l.b16 %v105
    %v284 = vunpack.c.l.b16 %v106
    %v285 = vunpack.c.l.b16 %v107
    %v286 = vunpack.c.l.b16 %v108
    %v287 = vunpack.c.l.b16 %v109
    %v288 = vunpack.c.l.b16 %v110
    %v289 = vunpack.c.l.b16 %v111
    %v290 = vunpack.c.l.b16 %v112
    %v291 = vunpack.c.l.b16 %v113
    %v292 = vunpack.c.l.b16 %v114
    %v293 = vunpack.c.l.b16 %v115
    %v294 = vunpack.c.l.b16 %v116
    %v295 = vpack.c.b16 %v264, %v263
    %v296 = vpack.c.b16 %v266, %v265
    %v297 = vpack.c.b16 %v268, %v267
    %v298 = vpack.c.b16 %v270, %v269
    %v299 = vpack.c.b16 %v272, %v271
    %v300 = vpack.c.b16 %v274, %v273
    %v301 = vpack.c.b16 %v276, %v275
    %v302 = vpack.c.b16 %v278, %v277
    %v303 = vpack.c.b16 %v280, %v279
    %v304 = vpack.c.b16 %v282, %v281
    %v305 = vpack.c.b16 %v284, %v283
    %v306 = vpack.c.b16 %v286, %v285
    %v307 = vpack.c.b16 %v288, %v287
    %v308 = vpack.c.b16 %v290, %v289
    %v309 = vpack.c.b16 %v292, %v291
    %v310 = vpack.c.b16 %v294, %v293
    %327 = vmatprep.subr.bf16.mxu0 0
    %328 = vmatpush1.bf16.msra.mxu0 %v295
    %329 = vmatprep.subr.bf16.mxu0 0
    %330 = vmatpush1.bf16.msra.mxu0 %v296
    %331 = vmatprep.subr.bf16.mxu0 0
    %332 = vmatpush1.bf16.msra.mxu0 %v297
    %333 = vmatprep.subr.bf16.mxu0 0
    %334 = vmatpush1.bf16.msra.mxu0 %v298
    %335 = vmatprep.subr.bf16.mxu0 0
    %336 = vmatpush1.bf16.msra.mxu0 %v299
    %337 = vmatprep.subr.bf16.mxu0 0
    %338 = vmatpush1.bf16.msra.mxu0 %v300
    %339 = vmatprep.subr.bf16.mxu0 0
    %340 = vmatpush1.bf16.msra.mxu0 %v301
    %341 = vmatprep.subr.bf16.mxu0 0
    %342 = vmatpush1.bf16.msra.mxu0 %v302
    %343 = vmatprep.subr.bf16.mxu0 0
    %344 = vmatpush1.bf16.msra.mxu0 %v303
    %345 = vmatprep.subr.bf16.mxu0 0
    %346 = vmatpush1.bf16.msra.mxu0 %v304
    %347 = vmatprep.subr.bf16.mxu0 0
    %348 = vmatpush1.bf16.msra.mxu0 %v305
    %349 = vmatprep.subr.bf16.mxu0 0
    %350 = vmatpush1.bf16.msra.mxu0 %v306
    %351 = vmatprep.subr.bf16.mxu0 0
    %352 = vmatpush1.bf16.msra.mxu0 %v307
    %353 = vmatprep.subr.bf16.mxu0 0
    %354 = vmatpush1.bf16.msra.mxu0 %v308
    %355 = vmatprep.subr.bf16.mxu0 0
    %356 = vmatpush1.bf16.msra.mxu0 %v309
    %357 = vmatprep.subr.bf16.mxu0 0
    %358 = vmatpush1.bf16.msra.mxu0 %v310
    %359 = vmatprep.mubr.bf16.mxu0 %v188
    %360 = vmatmul.mubr.bf16.gmra.mrb[0].mxu0 %v187
    %v361 = vpop.f32.mrb[0].mxu0
    %v362 = vadd.f32 %v122, %v361
    %v363 = vpop.f32.mrb[0].mxu0
    %v364 = vpop.f32.mrb[0].mxu0
    %v365 = vadd.f32 %v122, %v364
    %v366 = vpop.f32.mrb[0].mxu0
    %367 = vmatprep.mubr.bf16.mxu0 %v190
    %368 = vmatmul.mubr.bf16.gmra.mrb[0].mxu0 %v189
    %v369 = vpop.f32.mrb[0].mxu0
    %v370 = vadd.f32 %v122, %v369
    %v371 = vpop.f32.mrb[0].mxu0
    %v372 = vpop.f32.mrb[0].mxu0
    %v373 = vadd.f32 %v122, %v372
    %v374 = vpop.f32.mrb[0].mxu0
    %375 = vmatprep.mubr.bf16.mxu0 %v192
    %376 = vmatmul.mubr.bf16.gmra.mrb[0].mxu0 %v191
    %v377 = vpop.f32.mrb[0].mxu0
    %v378 = vadd.f32 %v122, %v377
    %v379 = vpop.f32.mrb[0].mxu0
    %v380 = vpop.f32.mrb[0].mxu0
    %v381 = vadd.f32 %v122, %v380
    %v382 = vpop.f32.mrb[0].mxu0
    %383 = vmatprep.mubr.bf16.mxu0 %v194
    %384 = vmatmul.mubr.bf16.gmra.mrb[0].mxu0 %v193
    %v385 = vpop.f32.mrb[0].mxu0
    %v386 = vadd.f32 %v122, %v385
    %v387 = vpop.f32.mrb[0].mxu0
    %v388 = vpop.f32.mrb[0].mxu0
    %v389 = vadd.f32 %v122, %v388
    %v390 = vpop.f32.mrb[0].mxu0
    %391 = vmatprep.mubr.bf16.mxu0 %v196
    %392 = vmatmul.mubr.bf16.gmra.mrb[0].mxu0 %v195
    %v393 = vpop.f32.mrb[0].mxu0
    %v394 = vadd.f32 %v122, %v393
    %v395 = vpop.f32.mrb[0].mxu0
    %v396 = vpop.f32.mrb[0].mxu0
    %v397 = vadd.f32 %v122, %v396
    %v398 = vpop.f32.mrb[0].mxu0
    %399 = vmatprep.mubr.bf16.mxu0 %v198
    %400 = vmatmul.mubr.bf16.gmra.mrb[0].mxu0 %v197
    %v401 = vpop.f32.mrb[0].mxu0
    %v402 = vadd.f32 %v122, %v401
    %v403 = vpop.f32.mrb[0].mxu0
    %v404 = vpop.f32.mrb[0].mxu0
    %v405 = vadd.f32 %v122, %v404
    %v406 = vpop.f32.mrb[0].mxu0
    %407 = vmatprep.mubr.bf16.mxu0 %v200
    %408 = vmatmul.mubr.bf16.gmra.mrb[0].mxu0 %v199
    %v409 = vpop.f32.mrb[0].mxu0
    %v410 = vadd.f32 %v122, %v409
    %v411 = vpop.f32.mrb[0].mxu0
    %v412 = vpop.f32.mrb[0].mxu0
    %v413 = vadd.f32 %v122, %v412
    %v414 = vpop.f32.mrb[0].mxu0
    %415 = vmatprep.mubr.bf16.mxu0 %v202
    %416 = vmatmul.mubr.bf16.gmra.mrb[0].mxu0 %v201
    %v417 = vpop.f32.mrb[0].mxu0
    %v418 = vadd.f32 %v122, %v417
    %v419 = vpop.f32.mrb[0].mxu0
    %v420 = vpop.f32.mrb[0].mxu0
    %v421 = vadd.f32 %v122, %v420
    %v422 = vpop.f32.mrb[0].mxu0
    %423 = vmatprep.mubr.bf16.mxu0 %v204
    %424 = vmatmul.mubr.bf16.gmra.mrb[0].mxu0 %v203
    %v425 = vpop.f32.mrb[0].mxu0
    %v426 = vadd.f32 %v122, %v425
    %v427 = vpop.f32.mrb[0].mxu0
    %v428 = vpop.f32.mrb[0].mxu0
    %v429 = vadd.f32 %v122, %v428
    %v430 = vpop.f32.mrb[0].mxu0
    %431 = vmatprep.mubr.bf16.mxu0 %v206
    %432 = vmatmul.mubr.bf16.gmra.mrb[0].mxu0 %v205
    %v433 = vpop.f32.mrb[0].mxu0
    %v434 = vadd.f32 %v122, %v433
    %v435 = vpop.f32.mrb[0].mxu0
    %v436 = vpop.f32.mrb[0].mxu0
    %v437 = vadd.f32 %v122, %v436
    %v438 = vpop.f32.mrb[0].mxu0
    %439 = vmatprep.mubr.bf16.mxu0 %v208
    %440 = vmatmul.mubr.bf16.gmra.mrb[0].mxu0 %v207
    %v441 = vpop.f32.mrb[0].mxu0
    %v442 = vadd.f32 %v122, %v441
    %v443 = vpop.f32.mrb[0].mxu0
    %v444 = vpop.f32.mrb[0].mxu0
    %v445 = vpop.f32.mrb[0].mxu0
    %446 = vdwg.mxu0
    %v447 = vld [vmem:[%s3] sm:$0x1]
    %v448 = vld [vmem:[%s4] sm:$0x1]
    %vm449 = vcmask 261120
    %v450 = vsel %vm449, %v362, 0.0
    %v451 = vsel %vm449, %v365, 0.0
    %v452 = vadd.f32 %v450, %v451
    %v453 = vsel %vm449, %v370, 0.0
    %v454 = vadd.f32 %v452, %v453
    %v455 = vsel %vm449, %v373, 0.0
    %v456 = vadd.f32 %v454, %v455
    %v457 = vsel %vm449, %v378, 0.0
    %v458 = vadd.f32 %v456, %v457
    %v459 = vsel %vm449, %v381, 0.0
    %v460 = vadd.f32 %v458, %v459
    %v461 = vsel %vm449, %v386, 0.0
    %v462 = vadd.f32 %v460, %v461
    %v463 = vsel %vm449, %v389, 0.0
    %v464 = vadd.f32 %v462, %v463
    %v465 = vsel %vm449, %v394, 0.0
    %v466 = vadd.f32 %v464, %v465
    %v467 = vsel %vm449, %v397, 0.0
    %v468 = vadd.f32 %v466, %v467
    %v469 = vsel %vm449, %v402, 0.0
    %v470 = vadd.f32 %v468, %v469
    %v471 = vsel %vm449, %v405, 0.0
    %v472 = vadd.f32 %v470, %v471
    %v473 = vsel %vm449, %v410, 0.0
    %v474 = vadd.f32 %v472, %v473
    %v475 = vsel %vm449, %v413, 0.0
    %v476 = vadd.f32 %v474, %v475
    %v477 = vsel %vm449, %v418, 0.0
    %v478 = vadd.f32 %v476, %v477
    %v479 = vsel %vm449, %v421, 0.0
    %v480 = vadd.f32 %v478, %v479
    %v481 = vsel %vm449, %v426, 0.0
    %v482 = vadd.f32 %v480, %v481
    %v483 = vsel %vm449, %v429, 0.0
    %v484 = vadd.f32 %v482, %v483
    %v485 = vsel %vm449, %v434, 0.0
    %v486 = vadd.f32 %v484, %v485
    %v487 = vsel %vm449, %v437, 0.0
    %v488 = vadd.f32 %v486, %v487
    %vm489 = vcmask 254976
    %v490 = vsel %vm489, %v442, 0.0
    %v491 = vadd.f32 %v488, %v490
    %v492 = vrot.slane %v491, 4
    %v493 = vadd.f32 %v491, %v492
    %v494 = vrot.slane %v493, 2
    %v495 = vadd.f32 %v493, %v494
    %v496 = vrot.slane %v495, 1
    %v497 = vadd.f32 %v495, %v496
    %v498 = vmul.f32 %v362, %v362
    %v499 = vmul.f32 %v365, %v365
    %v500 = vmul.f32 %v370, %v370
    %v501 = vmul.f32 %v373, %v373
    %v502 = vmul.f32 %v378, %v378
    %v503 = vmul.f32 %v381, %v381
    %v504 = vmul.f32 %v386, %v386
    %v505 = vmul.f32 %v389, %v389
    %v506 = vmul.f32 %v394, %v394
    %v507 = vmul.f32 %v397, %v397
    %v508 = vmul.f32 %v402, %v402
    %v509 = vmul.f32 %v405, %v405
    %v510 = vmul.f32 %v410, %v410
    %v511 = vmul.f32 %v413, %v413
    %v512 = vmul.f32 %v418, %v418
    %v513 = vmul.f32 %v421, %v421
    %v514 = vmul.f32 %v426, %v426
    %v515 = vmul.f32 %v429, %v429
    %v516 = vmul.f32 %v434, %v434
    %v517 = vmul.f32 %v437, %v437
    %v518 = vmul.f32 %v442, %v442
    %v519 = vsel %vm449, %v498, 0.0
    %v520 = vsel %vm449, %v499, 0.0
    %v521 = vadd.f32 %v519, %v520
    %v522 = vsel %vm449, %v500, 0.0
    %v523 = vadd.f32 %v521, %v522
    %v524 = vsel %vm449, %v501, 0.0
    %v525 = vadd.f32 %v523, %v524
    %v526 = vsel %vm449, %v502, 0.0
    %v527 = vadd.f32 %v525, %v526
    %v528 = vsel %vm449, %v503, 0.0
    %v529 = vadd.f32 %v527, %v528
    %v530 = vsel %vm449, %v504, 0.0
    %v531 = vadd.f32 %v529, %v530
    %v532 = vsel %vm449, %v505, 0.0
    %v533 = vadd.f32 %v531, %v532
    %v534 = vsel %vm449, %v506, 0.0
    %v535 = vadd.f32 %v533, %v534
    %v536 = vsel %vm449, %v507, 0.0
    %v537 = vadd.f32 %v535, %v536
    %v538 = vsel %vm449, %v508, 0.0
    %v539 = vadd.f32 %v537, %v538
    %v540 = vsel %vm449, %v509, 0.0
    %v541 = vadd.f32 %v539, %v540
    %v542 = vsel %vm449, %v510, 0.0
    %v543 = vadd.f32 %v541, %v542
    %v544 = vsel %vm449, %v511, 0.0
    %v545 = vadd.f32 %v543, %v544
    %v546 = vsel %vm449, %v512, 0.0
    %v547 = vadd.f32 %v545, %v546
    %v548 = vsel %vm449, %v513, 0.0
    %v549 = vadd.f32 %v547, %v548
    %v550 = vsel %vm449, %v514, 0.0
    %v551 = vadd.f32 %v549, %v550
    %v552 = vsel %vm449, %v515, 0.0
    %v553 = vadd.f32 %v551, %v552
    %v554 = vsel %vm449, %v516, 0.0
    %v555 = vadd.f32 %v553, %v554
    %v556 = vsel %vm449, %v517, 0.0
    %v557 = vadd.f32 %v555, %v556
    %v558 = vsel %vm489, %v518, 0.0
    %v559 = vadd.f32 %v557, %v558
    %v560 = vrot.slane %v559, 4
    %v561 = vadd.f32 %v559, %v560
    %v562 = vrot.slane %v561, 2
    %v563 = vadd.f32 %v561, %v562
    %v564 = vrot.slane %v563, 1
    %v565 = vadd.f32 %v563, %v564
    %v566 = vmul.f32 %v497, 0.0061728396
    %v567 = vmul.f32 %v565, 0.0061728396
    %v568 = vmul.f32 %v566, %v566
    %v569 = vsub.f32 %v567, %v568
    %v570 = vsub.f32 %v362, %v566
    %v571 = vsub.f32 %v365, %v566
    %v572 = vsub.f32 %v370, %v566
    %v573 = vsub.f32 %v373, %v566
    %v574 = vsub.f32 %v378, %v566
    %v575 = vsub.f32 %v381, %v566
    %v576 = vsub.f32 %v386, %v566
    %v577 = vsub.f32 %v389, %v566
    %v578 = vsub.f32 %v394, %v566
    %v579 = vsub.f32 %v397, %v566
    %v580 = vsub.f32 %v402, %v566
    %v581 = vsub.f32 %v405, %v566
    %v582 = vsub.f32 %v410, %v566
    %v583 = vsub.f32 %v413, %v566
    %v584 = vsub.f32 %v418, %v566
    %v585 = vsub.f32 %v421, %v566
    %v586 = vsub.f32 %v426, %v566
    %v587 = vsub.f32 %v429, %v566
    %v588 = vsub.f32 %v434, %v566
    %v589 = vsub.f32 %v437, %v566
    %v590 = vsub.f32 %v442, %v566
    %v591 = vadd.f32 %v569, 1e-05
    %v592 = vrsqrt.pop %v591
    %v593 = vmul.f32 %v570, %v592
    %v594 = vmul.f32 %v571, %v592
    %v595 = vmul.f32 %v572, %v592
    %v596 = vmul.f32 %v573, %v592
    %v597 = vmul.f32 %v574, %v592
    %v598 = vmul.f32 %v575, %v592
    %v599 = vmul.f32 %v576, %v592
    %v600 = vmul.f32 %v577, %v592
    %v601 = vmul.f32 %v578, %v592
    %v602 = vmul.f32 %v579, %v592
    %v603 = vmul.f32 %v580, %v592
    %v604 = vmul.f32 %v581, %v592
    %v605 = vmul.f32 %v582, %v592
    %v606 = vmul.f32 %v583, %v592
    %v607 = vmul.f32 %v584, %v592
    %v608 = vmul.f32 %v585, %v592
    %v609 = vmul.f32 %v586, %v592
    %v610 = vmul.f32 %v587, %v592
    %v611 = vmul.f32 %v588, %v592
    %v612 = vmul.f32 %v589, %v592
    %v613 = vmul.f32 %v590, %v592
    %v615 = vlaneseq
    %v616 = vshrl.u32 %v615, 7
    %v617 = vsub.s32 0, %v616
    %v618 = vrot.slane %v447, %v617
    %v620 = vmul.f32 %v593, %v618
    %v621 = vmul.f32 %v594, %v618
    %v622 = vmul.f32 %v595, %v618
    %v623 = vmul.f32 %v596, %v618
    %v624 = vmul.f32 %v597, %v618
    %v625 = vmul.f32 %v598, %v618
    %v626 = vmul.f32 %v599, %v618
    %v627 = vmul.f32 %v600, %v618
    %v628 = vmul.f32 %v601, %v618
    %v629 = vmul.f32 %v602, %v618
    %v630 = vmul.f32 %v603, %v618
    %v631 = vmul.f32 %v604, %v618
    %v632 = vmul.f32 %v605, %v618
    %v633 = vmul.f32 %v606, %v618
    %v634 = vmul.f32 %v607, %v618
    %v635 = vmul.f32 %v608, %v618
    %v636 = vmul.f32 %v609, %v618
    %v637 = vmul.f32 %v610, %v618
    %v638 = vmul.f32 %v611, %v618
    %v639 = vmul.f32 %v612, %v618
    %v640 = vmul.f32 %v613, %v618
    %v642 = vlaneseq
    %v643 = vshrl.u32 %v642, 7
    %v644 = vsub.s32 0, %v643
    %v645 = vrot.slane %v448, %v644
    %v647 = vadd.f32 %v620, %v645
    %v648 = vadd.f32 %v621, %v645
    %v649 = vadd.f32 %v622, %v645
    %v650 = vadd.f32 %v623, %v645
    %v651 = vadd.f32 %v624, %v645
    %v652 = vadd.f32 %v625, %v645
    %v653 = vadd.f32 %v626, %v645
    %v654 = vadd.f32 %v627, %v645
    %v655 = vadd.f32 %v628, %v645
    %v656 = vadd.f32 %v629, %v645
    %v657 = vadd.f32 %v630, %v645
    %v658 = vadd.f32 %v631, %v645
    %v659 = vadd.f32 %v632, %v645
    %v660 = vadd.f32 %v633, %v645
    %v661 = vadd.f32 %v634, %v645
    %v662 = vadd.f32 %v635, %v645
    %v663 = vadd.f32 %v636, %v645
    %v664 = vadd.f32 %v637, %v645
    %v665 = vadd.f32 %v638, %v645
    %v666 = vadd.f32 %v639, %v645
    %v667 = vadd.f32 %v640, %v645
    %vm668 = vcmp.ge.f32.partialorder %v647, 0.0
    %vm669 = vcmp.ge.f32.partialorder %v648, 0.0
    %vm670 = vcmp.ge.f32.partialorder %v649, 0.0
    %vm671 = vcmp.ge.f32.partialorder %v650, 0.0
    %vm672 = vcmp.ge.f32.partialorder %v651, 0.0
    %vm673 = vcmp.ge.f32.partialorder %v652, 0.0
    %vm674 = vcmp.ge.f32.partialorder %v653, 0.0
    %vm675 = vcmp.ge.f32.partialorder %v654, 0.0
    %vm676 = vcmp.ge.f32.partialorder %v655, 0.0
    %vm677 = vcmp.ge.f32.partialorder %v656, 0.0
    %vm678 = vcmp.ge.f32.partialorder %v657, 0.0
    %vm679 = vcmp.ge.f32.partialorder %v658, 0.0
    %vm680 = vcmp.ge.f32.partialorder %v659, 0.0
    %vm681 = vcmp.ge.f32.partialorder %v660, 0.0
    %vm682 = vcmp.ge.f32.partialorder %v661, 0.0
    %vm683 = vcmp.ge.f32.partialorder %v662, 0.0
    %vm684 = vcmp.ge.f32.partialorder %v663, 0.0
    %vm685 = vcmp.ge.f32.partialorder %v664, 0.0
    %vm686 = vcmp.ge.f32.partialorder %v665, 0.0
    %vm687 = vcmp.ge.f32.partialorder %v666, 0.0
    %vm688 = vcmp.ge.f32.partialorder %v667, 0.0
    %v689 = vmul.f32 %v647, 0.01
    %v690 = vmul.f32 %v648, 0.01
    %v691 = vmul.f32 %v649, 0.01
    %v692 = vmul.f32 %v650, 0.01
    %v693 = vmul.f32 %v651, 0.01
    %v694 = vmul.f32 %v652, 0.01
    %v695 = vmul.f32 %v653, 0.01
    %v696 = vmul.f32 %v654, 0.01
    %v697 = vmul.f32 %v655, 0.01
    %v698 = vmul.f32 %v656, 0.01
    %v699 = vmul.f32 %v657, 0.01
    %v700 = vmul.f32 %v658, 0.01
    %v701 = vmul.f32 %v659, 0.01
    %v702 = vmul.f32 %v660, 0.01
    %v703 = vmul.f32 %v661, 0.01
    %v704 = vmul.f32 %v662, 0.01
    %v705 = vmul.f32 %v663, 0.01
    %v706 = vmul.f32 %v664, 0.01
    %v707 = vmul.f32 %v665, 0.01
    %v708 = vmul.f32 %v666, 0.01
    %v709 = vmul.f32 %v667, 0.01
    %v710 = vsel %vm668, %v647, %v689
    %v711 = vsel %vm669, %v648, %v690
    %v712 = vsel %vm670, %v649, %v691
    %v713 = vsel %vm671, %v650, %v692
    %v714 = vsel %vm672, %v651, %v693
    %v715 = vsel %vm673, %v652, %v694
    %v716 = vsel %vm674, %v653, %v695
    %v717 = vsel %vm675, %v654, %v696
    %v718 = vsel %vm676, %v655, %v697
    %v719 = vsel %vm677, %v656, %v698
    %v720 = vsel %vm678, %v657, %v699
    %v721 = vsel %vm679, %v658, %v700
    %v722 = vsel %vm680, %v659, %v701
    %v723 = vsel %vm681, %v660, %v702
    %v724 = vsel %vm682, %v661, %v703
    %v725 = vsel %vm683, %v662, %v704
    %v726 = vsel %vm684, %v663, %v705
    %v727 = vsel %vm685, %v664, %v706
    %v728 = vsel %vm686, %v665, %v707
    %v729 = vsel %vm687, %v666, %v708
    %v730 = vsel %vm688, %v667, %v709
    %v731 = vpack.c.bf16 %v711, %v710
    %v732 = vpack.c.bf16 %v713, %v712
    %v733 = vpack.c.bf16 %v715, %v714
    %v734 = vpack.c.bf16 %v717, %v716
    %v735 = vpack.c.bf16 %v719, %v718
    %v736 = vpack.c.bf16 %v721, %v720
    %v737 = vpack.c.bf16 %v723, %v722
    %v738 = vpack.c.bf16 %v725, %v724
    %v739 = vpack.c.bf16 %v727, %v726
    %v740 = vpack.c.bf16 %v729, %v728
    %v741 = vpack.c.bf16 %v730, %v730
    %v742 = vld [vmem:[%s5] sm:$0xff]
    %v743 = vld [vmem:[%s5 + $0x8] sm:$0xff]
    %v744 = vld [vmem:[%s5 + $0x10] sm:$0x11]
    %v748 = vunpack.c.l.b16 %v742
    %v749 = vunpack.c.h.b16 %v742
    %v750 = vunpack.c.l.b16 %v743
    %v751 = vunpack.c.h.b16 %v743
    %v752 = vunpack.c.l.b16 %v744
    %v753 = vunpack.c.h.b16 %v744
    %v754 = vpack.c.b16 %v750, %v748
    %v755 = vpack.c.b16 %v751, %v749
    %v756 = vpack.c.b16 %v752, %v752
    %v757 = vpack.c.b16 %v753, %v753
    %vm760 = vcmask 277504
    %v762 = vsel %vm760, %v755, 0
    %v765 = vsel %vm760, %v757, 0
    %vm767 = vcmask 1040384
    %v769 = vsel %vm767, %v741, 0
    %771 = vmatprep.subr.bf16.mxu0 0
    %772 = vmatpush1.bf16.msra.mxu0 %v731
    %773 = vmatprep.subr.bf16.mxu0 0
    %774 = vmatpush1.bf16.msra.mxu0 %v732
    %775 = vmatprep.subr.bf16.mxu0 0
    %776 = vmatpush1.bf16.msra.mxu0 %v733
    %777 = vmatprep.subr.bf16.mxu0 0
    %778 = vmatpush1.bf16.msra.mxu0 %v734
    %779 = vmatprep.subr.bf16.mxu0 0
    %780 = vmatpush1.bf16.msra.mxu0 %v735
    %781 = vmatprep.subr.bf16.mxu0 0
    %782 = vmatpush1.bf16.msra.mxu0 %v736
    %783 = vmatprep.subr.bf16.mxu0 0
    %784 = vmatpush1.bf16.msra.mxu0 %v737
    %785 = vmatprep.subr.bf16.mxu0 0
    %786 = vmatpush1.bf16.msra.mxu0 %v738
    %787 = vmatprep.subr.bf16.mxu0 0
    %788 = vmatpush1.bf16.msra.mxu0 %v739
    %789 = vmatprep.subr.bf16.mxu0 0
    %790 = vmatpush1.bf16.msra.mxu0 %v740
    %791 = vmatprep.subr.bf16.mxu0 0
    %792 = vmatpush1.bf16.msra.mxu0 %v769
    %793 = vmatprep.subr.bf16.mxu0 0
    %794 = vmatpush1.bf16.msra.mxu0 0
    %795 = vmatprep.subr.bf16.mxu0 0
    %796 = vmatpush1.bf16.msra.mxu0 0
    %797 = vmatprep.subr.bf16.mxu0 0
    %798 = vmatpush1.bf16.msra.mxu0 0
    %799 = vmatprep.subr.bf16.mxu0 0
    %800 = vmatpush1.bf16.msra.mxu0 0
    %801 = vmatprep.subr.bf16.mxu0 0
    %802 = vmatpush1.bf16.msra.mxu0 0
    %803 = vmatprep.mubr.bf16.mxu0 %v762
    %804 = vmatmul.mubr.bf16.gmra.mrb[0].mxu0 %v754
    %v805 = vpop.f32.mrb[0].mxu0
    %v806 = vadd.f32 0.0, %v805
    %v807 = vpop.f32.mrb[0].mxu0
    %v808 = vpop.f32.mrb[0].mxu0
    %v809 = vadd.f32 0.0, %v808
    %v810 = vpop.f32.mrb[0].mxu0
    %811 = vmatprep.mubr.bf16.mxu0 %v765
    %812 = vmatmul.mubr.bf16.gmra.mrb[0].mxu0 %v756
    %v813 = vpop.f32.mrb[0].mxu0
    %v814 = vadd.f32 0.0, %v813
    %v815 = vpop.f32.mrb[0].mxu0
    %v816 = vpop.f32.mrb[0].mxu0
    %v817 = vpop.f32.mrb[0].mxu0
    %818 = vdwg.mxu0
    %v819 = vpack.c.bf16 %v809, %v806
    %v820 = vpack.c.bf16 %v814, %v814
    %v821 = vld [vmem:[%s6] sm:$0xf]
    %v822 = vld [vmem:[%s6 + $0x4] sm:$0xf]
    %v823 = vld [vmem:[%s6 + $0x8] sm:$0xf]
    %v824 = vld [vmem:[%s6 + $0xc] sm:$0xf]
    %s825 = scalar_lea.vmem %s5, 24
    %v826 = vld [vmem:[%s825] sm:$0xff]
    %v827 = vld [vmem:[%s825 + $0x8] sm:$0xff]
    %v828 = vld [vmem:[%s825 + $0x10] sm:$0x11]
    %v832 = vunpack.c.l.b16 %v826
    %v833 = vunpack.c.h.b16 %v826
    %v834 = vunpack.c.l.b16 %v827
    %v835 = vunpack.c.h.b16 %v827
    %v836 = vunpack.c.l.b16 %v828
    %v837 = vunpack.c.h.b16 %v828
    %v838 = vpack.c.b16 %v834, %v832
    %v839 = vpack.c.b16 %v835, %v833
    %v840 = vpack.c.b16 %v836, %v836
    %v841 = vpack.c.b16 %v837, %v837
    %v845 = vsel %vm760, %v839, 0
    %v848 = vsel %vm760, %v841, 0
    %850 = vmatprep.subr.bf16.mxu0 0
    %851 = vmatpush1.bf16.msra.mxu0 %v731
    %852 = vmatprep.subr.bf16.mxu0 0
    %853 = vmatpush1.bf16.msra.mxu0 %v732
    %854 = vmatprep.subr.bf16.mxu0 0
    %855 = vmatpush1.bf16.msra.mxu0 %v733
    %856 = vmatprep.subr.bf16.mxu0 0
    %857 = vmatpush1.bf16.msra.mxu0 %v734
    %858 = vmatprep.subr.bf16.mxu0 0
    %859 = vmatpush1.bf16.msra.mxu0 %v735
    %860 = vmatprep.subr.bf16.mxu0 0
    %861 = vmatpush1.bf16.msra.mxu0 %v736
    %862 = vmatprep.subr.bf16.mxu0 0
    %863 = vmatpush1.bf16.msra.mxu0 %v737
    %864 = vmatprep.subr.bf16.mxu0 0
    %865 = vmatpush1.bf16.msra.mxu0 %v738
    %866 = vmatprep.subr.bf16.mxu0 0
    %867 = vmatpush1.bf16.msra.mxu0 %v739
    %868 = vmatprep.subr.bf16.mxu0 0
    %869 = vmatpush1.bf16.msra.mxu0 %v740
    %870 = vmatprep.subr.bf16.mxu0 0
    %871 = vmatpush1.bf16.msra.mxu0 %v769
    %872 = vmatprep.subr.bf16.mxu0 0
    %873 = vmatpush1.bf16.msra.mxu0 0
    %874 = vmatprep.subr.bf16.mxu0 0
    %875 = vmatpush1.bf16.msra.mxu0 0
    %876 = vmatprep.subr.bf16.mxu0 0
    %877 = vmatpush1.bf16.msra.mxu0 0
    %878 = vmatprep.subr.bf16.mxu0 0
    %879 = vmatpush1.bf16.msra.mxu0 0
    %880 = vmatprep.subr.bf16.mxu0 0
    %881 = vmatpush1.bf16.msra.mxu0 0
    %882 = vmatprep.mubr.bf16.mxu0 %v845
    %883 = vmatmul.mubr.bf16.gmra.mrb[0].mxu0 %v838
    %v884 = vpop.f32.mrb[0].mxu0
    %v885 = vadd.f32 0.0, %v884
    %v886 = vpop.f32.mrb[0].mxu0
    %v887 = vpop.f32.mrb[0].mxu0
    %v888 = vadd.f32 0.0, %v887
    %v889 = vpop.f32.mrb[0].mxu0
    %890 = vmatprep.mubr.bf16.mxu0 %v848
    %891 = vmatmul.mubr.bf16.gmra.mrb[0].mxu0 %v840
    %v892 = vpop.f32.mrb[0].mxu0
    %v893 = vadd.f32 0.0, %v892
    %v894 = vpop.f32.mrb[0].mxu0
    %v895 = vpop.f32.mrb[0].mxu0
    %v896 = vpop.f32.mrb[0].mxu0
    %897 = vdwg.mxu0
    %v898 = vpack.c.bf16 %v888, %v885
    %v899 = vpack.c.bf16 %v893, %v893
    %s900 = scalar_lea.vmem %s6, 16
    %v901 = vld [vmem:[%s900] sm:$0xf]
    %v902 = vld [vmem:[%s900 + $0x4] sm:$0xf]
    %v903 = vld [vmem:[%s900 + $0x8] sm:$0xf]
    %v904 = vld [vmem:[%s900 + $0xc] sm:$0xf]
    %v909 = vunpack.c.l.b16 %v901
    %v910 = vunpack.c.l.b16 %v902
    %v911 = vunpack.c.l.b16 %v903
    %v912 = vunpack.c.l.b16 %v904
    %v913 = vpack.c.b16 %v910, %v909
    %v914 = vpack.c.b16 %v912, %v911
    %v918 = vsel %vm449, %v898, 0
    %v921 = vsel %vm449, %v899, 0
    %923 = vmatprep.subr.bf16.mxu0 0
    %924 = vmatpush1.bf16.msra.mxu0 %v913
    %925 = vmatprep.subr.bf16.mxu0 0
    %926 = vmatpush1.bf16.msra.mxu0 %v914
    %927 = vmatprep.subr.bf16.mxu0 0
    %928 = vmatpush1.bf16.msra.mxu0 0
    %929 = vmatprep.subr.bf16.mxu0 0
    %930 = vmatpush1.bf16.msra.mxu0 0
    %931 = vmatprep.subr.bf16.mxu0 0
    %932 = vmatpush1.bf16.msra.mxu0 0
    %933 = vmatprep.subr.bf16.mxu0 0
    %934 = vmatpush1.bf16.msra.mxu0 0
    %935 = vmatprep.subr.bf16.mxu0 0
    %936 = vmatpush1.bf16.msra.mxu0 0
    %937 = vmatprep.subr.bf16.mxu0 0
    %938 = vmatpush1.bf16.msra.mxu0 0
    %939 = vmatprep.subr.bf16.mxu0 0
    %940 = vmatpush1.bf16.msra.mxu0 0
    %941 = vmatprep.subr.bf16.mxu0 0
    %942 = vmatpush1.bf16.msra.mxu0 0
    %943 = vmatprep.subr.bf16.mxu0 0
    %944 = vmatpush1.bf16.msra.mxu0 0
    %945 = vmatprep.subr.bf16.mxu0 0
    %946 = vmatpush1.bf16.msra.mxu0 0
    %947 = vmatprep.subr.bf16.mxu0 0
    %948 = vmatpush1.bf16.msra.mxu0 0
    %949 = vmatprep.subr.bf16.mxu0 0
    %950 = vmatpush1.bf16.msra.mxu0 0
    %951 = vmatprep.subr.bf16.mxu0 0
    %952 = vmatpush1.bf16.msra.mxu0 0
    %953 = vmatprep.subr.bf16.mxu0 0
    %954 = vmatpush1.bf16.msra.mxu0 0
    %955 = vmatprep.mubr.bf16.mxu0 0
    %956 = vmatmul.mubr.bf16.gmra.mrb[0].mxu0 %v918
    %v957 = vpop.f32.mrb[0].mxu0
    %v958 = vadd.f32 0.0, %v957
    %v959 = vpop.f32.mrb[0].mxu0
    %v960 = vpop.f32.mrb[0].mxu0
    %v961 = vadd.f32 0.0, %v960
    %v962 = vpop.f32.mrb[0].mxu0
    %963 = vmatprep.mubr.bf16.mxu0 0
    %964 = vmatmul.mubr.bf16.gmra.mrb[0].mxu0 %v921
    %v965 = vpop.f32.mrb[0].mxu0
    %v966 = vadd.f32 0.0, %v965
    %v967 = vpop.f32.mrb[0].mxu0
    %v968 = vpop.f32.mrb[0].mxu0
    %v969 = vpop.f32.mrb[0].mxu0
    %970 = vdwg.mxu0
    %v975 = vunpack.c.l.b16 %v821
    %v976 = vunpack.c.l.b16 %v822
    %v977 = vunpack.c.l.b16 %v823
    %v978 = vunpack.c.l.b16 %v824
    %v979 = vpack.c.b16 %v976, %v975
    %v980 = vpack.c.b16 %v978, %v977
    %v984 = vsel %vm449, %v819, 0
    %v987 = vsel %vm449, %v820, 0
    %989 = vmatprep.subr.bf16.mxu0 0
    %990 = vmatpush1.bf16.msra.mxu0 %v979
    %991 = vmatprep.subr.bf16.mxu0 0
    %992 = vmatpush1.bf16.msra.mxu0 %v980
    %993 = vmatprep.subr.bf16.mxu0 0
    %994 = vmatpush1.bf16.msra.mxu0 0
    %995 = vmatprep.subr.bf16.mxu0 0
    %996 = vmatpush1.bf16.msra.mxu0 0
    %997 = vmatprep.subr.bf16.mxu0 0
    %998 = vmatpush1.bf16.msra.mxu0 0
    %999 = vmatprep.subr.bf16.mxu0 0
    %1000 = vmatpush1.bf16.msra.mxu0 0
    %1001 = vmatprep.subr.bf16.mxu0 0
    %1002 = vmatpush1.bf16.msra.mxu0 0
    %1003 = vmatprep.subr.bf16.mxu0 0
    %1004 = vmatpush1.bf16.msra.mxu0 0
    %1005 = vmatprep.subr.bf16.mxu0 0
    %1006 = vmatpush1.bf16.msra.mxu0 0
    %1007 = vmatprep.subr.bf16.mxu0 0
    %1008 = vmatpush1.bf16.msra.mxu0 0
    %1009 = vmatprep.subr.bf16.mxu0 0
    %1010 = vmatpush1.bf16.msra.mxu0 0
    %1011 = vmatprep.subr.bf16.mxu0 0
    %1012 = vmatpush1.bf16.msra.mxu0 0
    %1013 = vmatprep.subr.bf16.mxu0 0
    %1014 = vmatpush1.bf16.msra.mxu0 0
    %1015 = vmatprep.subr.bf16.mxu0 0
    %1016 = vmatpush1.bf16.msra.mxu0 0
    %1017 = vmatprep.subr.bf16.mxu0 0
    %1018 = vmatpush1.bf16.msra.mxu0 0
    %1019 = vmatprep.subr.bf16.mxu0 0
    %1020 = vmatpush1.bf16.msra.mxu0 0
    %1021 = vmatprep.mubr.bf16.mxu0 0
    %1022 = vmatmul.mubr.bf16.gmra.mrb[0].mxu0 %v984
    %v1023 = vpop.f32.mrb[0].mxu0
    %v1024 = vadd.f32 %v958, %v1023
    %v1025 = vpop.f32.mrb[0].mxu0
    %v1026 = vpop.f32.mrb[0].mxu0
    %v1027 = vadd.f32 %v961, %v1026
    %v1028 = vpop.f32.mrb[0].mxu0
    %1029 = vmatprep.mubr.bf16.mxu0 0
    %1030 = vmatmul.mubr.bf16.gmra.mrb[0].mxu0 %v987
    %v1031 = vpop.f32.mrb[0].mxu0
    %v1032 = vadd.f32 %v966, %v1031
    %v1033 = vpop.f32.mrb[0].mxu0
    %v1034 = vpop.f32.mrb[0].mxu0
    %v1035 = vpop.f32.mrb[0].mxu0
    %1036 = vdwg.mxu0
    %s1037 = scalar_lea.vmem %s5, 48
    %v1038 = vld [vmem:[%s1037] sm:$0xff]
    %v1039 = vld [vmem:[%s1037 + $0x8] sm:$0xff]
    %v1040 = vld [vmem:[%s1037 + $0x10] sm:$0x11]
    %v1044 = vunpack.c.l.b16 %v1038
    %v1045 = vunpack.c.h.b16 %v1038
    %v1046 = vunpack.c.l.b16 %v1039
    %v1047 = vunpack.c.h.b16 %v1039
    %v1048 = vunpack.c.l.b16 %v1040
    %v1049 = vunpack.c.h.b16 %v1040
    %v1050 = vpack.c.b16 %v1046, %v1044
    %v1051 = vpack.c.b16 %v1047, %v1045
    %v1052 = vpack.c.b16 %v1048, %v1048
    %v1053 = vpack.c.b16 %v1049, %v1049
    %v1057 = vsel %vm760, %v1051, 0
    %v1060 = vsel %vm760, %v1053, 0
    %1062 = vmatprep.subr.bf16.mxu0 0
    %1063 = vmatpush1.bf16.msra.mxu0 %v731
    %1064 = vmatprep.subr.bf16.mxu0 0
    %1065 = vmatpush1.bf16.msra.mxu0 %v732
    %1066 = vmatprep.subr.bf16.mxu0 0
    %1067 = vmatpush1.bf16.msra.mxu0 %v733
    %1068 = vmatprep.subr.bf16.mxu0 0
    %1069 = vmatpush1.bf16.msra.mxu0 %v734
    %1070 = vmatprep.subr.bf16.mxu0 0
    %1071 = vmatpush1.bf16.msra.mxu0 %v735
    %1072 = vmatprep.subr.bf16.mxu0 0
    %1073 = vmatpush1.bf16.msra.mxu0 %v736
    %1074 = vmatprep.subr.bf16.mxu0 0
    %1075 = vmatpush1.bf16.msra.mxu0 %v737
    %1076 = vmatprep.subr.bf16.mxu0 0
    %1077 = vmatpush1.bf16.msra.mxu0 %v738
    %1078 = vmatprep.subr.bf16.mxu0 0
    %1079 = vmatpush1.bf16.msra.mxu0 %v739
    %1080 = vmatprep.subr.bf16.mxu0 0
    %1081 = vmatpush1.bf16.msra.mxu0 %v740
    %1082 = vmatprep.subr.bf16.mxu0 0
    %1083 = vmatpush1.bf16.msra.mxu0 %v769
    %1084 = vmatprep.subr.bf16.mxu0 0
    %1085 = vmatpush1.bf16.msra.mxu0 0
    %1086 = vmatprep.subr.bf16.mxu0 0
    %1087 = vmatpush1.bf16.msra.mxu0 0
    %1088 = vmatprep.subr.bf16.mxu0 0
    %1089 = vmatpush1.bf16.msra.mxu0 0
    %1090 = vmatprep.subr.bf16.mxu0 0
    %1091 = vmatpush1.bf16.msra.mxu0 0
    %1092 = vmatprep.subr.bf16.mxu0 0
    %1093 = vmatpush1.bf16.msra.mxu0 0
    %1094 = vmatprep.mubr.bf16.mxu0 %v1057
    %1095 = vmatmul.mubr.bf16.gmra.mrb[0].mxu0 %v1050
    %v1096 = vpop.f32.mrb[0].mxu0
    %v1097 = vadd.f32 0.0, %v1096
    %v1098 = vpop.f32.mrb[0].mxu0
    %v1099 = vpop.f32.mrb[0].mxu0
    %v1100 = vadd.f32 0.0, %v1099
    %v1101 = vpop.f32.mrb[0].mxu0
    %1102 = vmatprep.mubr.bf16.mxu0 %v1060
    %1103 = vmatmul.mubr.bf16.gmra.mrb[0].mxu0 %v1052
    %v1104 = vpop.f32.mrb[0].mxu0
    %v1105 = vadd.f32 0.0, %v1104
    %v1106 = vpop.f32.mrb[0].mxu0
    %v1107 = vpop.f32.mrb[0].mxu0
    %v1108 = vpop.f32.mrb[0].mxu0
    %1109 = vdwg.mxu0
    %v1110 = vpack.c.bf16 %v1100, %v1097
    %v1111 = vpack.c.bf16 %v1105, %v1105
    %s1112 = scalar_lea.vmem %s6, 32
    %v1113 = vld [vmem:[%s1112] sm:$0xf]
    %v1114 = vld [vmem:[%s1112 + $0x4] sm:$0xf]
    %v1115 = vld [vmem:[%s1112 + $0x8] sm:$0xf]
    %v1116 = vld [vmem:[%s1112 + $0xc] sm:$0xf]
    %v1121 = vunpack.c.l.b16 %v1113
    %v1122 = vunpack.c.l.b16 %v1114
    %v1123 = vunpack.c.l.b16 %v1115
    %v1124 = vunpack.c.l.b16 %v1116
    %v1125 = vpack.c.b16 %v1122, %v1121
    %v1126 = vpack.c.b16 %v1124, %v1123
    %v1130 = vsel %vm449, %v1110, 0
    %v1133 = vsel %vm449, %v1111, 0
    %1135 = vmatprep.subr.bf16.mxu0 0
    %1136 = vmatpush1.bf16.msra.mxu0 %v1125
    %1137 = vmatprep.subr.bf16.mxu0 0
    %1138 = vmatpush1.bf16.msra.mxu0 %v1126
    %1139 = vmatprep.subr.bf16.mxu0 0
    %1140 = vmatpush1.bf16.msra.mxu0 0
    %1141 = vmatprep.subr.bf16.mxu0 0
    %1142 = vmatpush1.bf16.msra.mxu0 0
    %1143 = vmatprep.subr.bf16.mxu0 0
    %1144 = vmatpush1.bf16.msra.mxu0 0
    %1145 = vmatprep.subr.bf16.mxu0 0
    %1146 = vmatpush1.bf16.msra.mxu0 0
    %1147 = vmatprep.subr.bf16.mxu0 0
    %1148 = vmatpush1.bf16.msra.mxu0 0
    %1149 = vmatprep.subr.bf16.mxu0 0
    %1150 = vmatpush1.bf16.msra.mxu0 0
    %1151 = vmatprep.subr.bf16.mxu0 0
    %1152 = vmatpush1.bf16.msra.mxu0 0
    %1153 = vmatprep.subr.bf16.mxu0 0
    %1154 = vmatpush1.bf16.msra.mxu0 0
    %1155 = vmatprep.subr.bf16.mxu0 0
    %1156 = vmatpush1.bf16.msra.mxu0 0
    %1157 = vmatprep.subr.bf16.mxu0 0
    %1158 = vmatpush1.bf16.msra.mxu0 0
    %1159 = vmatprep.subr.bf16.mxu0 0
    %1160 = vmatpush1.bf16.msra.mxu0 0
    %1161 = vmatprep.subr.bf16.mxu0 0
    %1162 = vmatpush1.bf16.msra.mxu0 0
    %1163 = vmatprep.subr.bf16.mxu0 0
    %1164 = vmatpush1.bf16.msra.mxu0 0
    %1165 = vmatprep.subr.bf16.mxu0 0
    %1166 = vmatpush1.bf16.msra.mxu0 0
    %1167 = vmatprep.mubr.bf16.mxu0 0
    %1168 = vmatmul.mubr.bf16.gmra.mrb[0].mxu0 %v1130
    %v1169 = vpop.f32.mrb[0].mxu0
    %v1170 = vadd.f32 0.0, %v1169
    %v1171 = vpop.f32.mrb[0].mxu0
    %v1172 = vpop.f32.mrb[0].mxu0
    %v1173 = vadd.f32 0.0, %v1172
    %v1174 = vpop.f32.mrb[0].mxu0
    %1175 = vmatprep.mubr.bf16.mxu0 0
    %1176 = vmatmul.mubr.bf16.gmra.mrb[0].mxu0 %v1133
    %v1177 = vpop.f32.mrb[0].mxu0
    %v1178 = vadd.f32 0.0, %v1177
    %v1179 = vpop.f32.mrb[0].mxu0
    %v1180 = vpop.f32.mrb[0].mxu0
    %v1181 = vpop.f32.mrb[0].mxu0
    %1182 = vdwg.mxu0
    %v1183 = vadd.f32 %v1024, %v1170
    %v1184 = vadd.f32 %v1027, %v1173
    %v1185 = vadd.f32 %v1032, %v1178
    %s1186 = scalar_lea.vmem %s5, 72
    %v1187 = vld [vmem:[%s1186] sm:$0xff]
    %v1188 = vld [vmem:[%s1186 + $0x8] sm:$0xff]
    %v1189 = vld [vmem:[%s1186 + $0x10] sm:$0x11]
    %v1193 = vunpack.c.l.b16 %v1187
    %v1194 = vunpack.c.h.b16 %v1187
    %v1195 = vunpack.c.l.b16 %v1188
    %v1196 = vunpack.c.h.b16 %v1188
    %v1197 = vunpack.c.l.b16 %v1189
    %v1198 = vunpack.c.h.b16 %v1189
    %v1199 = vpack.c.b16 %v1195, %v1193
    %v1200 = vpack.c.b16 %v1196, %v1194
    %v1201 = vpack.c.b16 %v1197, %v1197
    %v1202 = vpack.c.b16 %v1198, %v1198
    %v1206 = vsel %vm760, %v1200, 0
    %v1209 = vsel %vm760, %v1202, 0
    %1211 = vmatprep.subr.bf16.mxu0 0
    %1212 = vmatpush1.bf16.msra.mxu0 %v731
    %1213 = vmatprep.subr.bf16.mxu0 0
    %1214 = vmatpush1.bf16.msra.mxu0 %v732
    %1215 = vmatprep.subr.bf16.mxu0 0
    %1216 = vmatpush1.bf16.msra.mxu0 %v733
    %1217 = vmatprep.subr.bf16.mxu0 0
    %1218 = vmatpush1.bf16.msra.mxu0 %v734
    %1219 = vmatprep.subr.bf16.mxu0 0
    %1220 = vmatpush1.bf16.msra.mxu0 %v735
    %1221 = vmatprep.subr.bf16.mxu0 0
    %1222 = vmatpush1.bf16.msra.mxu0 %v736
    %1223 = vmatprep.subr.bf16.mxu0 0
    %1224 = vmatpush1.bf16.msra.mxu0 %v737
    %1225 = vmatprep.subr.bf16.mxu0 0
    %1226 = vmatpush1.bf16.msra.mxu0 %v738
    %1227 = vmatprep.subr.bf16.mxu0 0
    %1228 = vmatpush1.bf16.msra.mxu0 %v739
    %1229 = vmatprep.subr.bf16.mxu0 0
    %1230 = vmatpush1.bf16.msra.mxu0 %v740
    %1231 = vmatprep.subr.bf16.mxu0 0
    %1232 = vmatpush1.bf16.msra.mxu0 %v769
    %1233 = vmatprep.subr.bf16.mxu0 0
    %1234 = vmatpush1.bf16.msra.mxu0 0
    %1235 = vmatprep.subr.bf16.mxu0 0
    %1236 = vmatpush1.bf16.msra.mxu0 0
    %1237 = vmatprep.subr.bf16.mxu0 0
    %1238 = vmatpush1.bf16.msra.mxu0 0
    %1239 = vmatprep.subr.bf16.mxu0 0
    %1240 = vmatpush1.bf16.msra.mxu0 0
    %1241 = vmatprep.subr.bf16.mxu0 0
    %1242 = vmatpush1.bf16.msra.mxu0 0
    %1243 = vmatprep.mubr.bf16.mxu0 %v1206
    %1244 = vmatmul.mubr.bf16.gmra.mrb[0].mxu0 %v1199
    %v1245 = vpop.f32.mrb[0].mxu0
    %v1246 = vadd.f32 0.0, %v1245
    %v1247 = vpop.f32.mrb[0].mxu0
    %v1248 = vpop.f32.mrb[0].mxu0
    %v1249 = vadd.f32 0.0, %v1248
    %v1250 = vpop.f32.mrb[0].mxu0
    %1251 = vmatprep.mubr.bf16.mxu0 %v1209
    %1252 = vmatmul.mubr.bf16.gmra.mrb[0].mxu0 %v1201
    %v1253 = vpop.f32.mrb[0].mxu0
    %v1254 = vadd.f32 0.0, %v1253
    %v1255 = vpop.f32.mrb[0].mxu0
    %v1256 = vpop.f32.mrb[0].mxu0
    %v1257 = vpop.f32.mrb[0].mxu0
    %1258 = vdwg.mxu0
    %v1259 = vpack.c.bf16 %v1249, %v1246
    %v1260 = vpack.c.bf16 %v1254, %v1254
    %s1261 = scalar_lea.vmem %s6, 48
    %v1262 = vld [vmem:[%s1261] sm:$0xf]
    %v1263 = vld [vmem:[%s1261 + $0x4] sm:$0xf]
    %v1264 = vld [vmem:[%s1261 + $0x8] sm:$0xf]
    %v1265 = vld [vmem:[%s1261 + $0xc] sm:$0xf]
    %v1270 = vunpack.c.l.b16 %v1262
    %v1271 = vunpack.c.l.b16 %v1263
    %v1272 = vunpack.c.l.b16 %v1264
    %v1273 = vunpack.c.l.b16 %v1265
    %v1274 = vpack.c.b16 %v1271, %v1270
    %v1275 = vpack.c.b16 %v1273, %v1272
    %v1279 = vsel %vm449, %v1259, 0
    %v1282 = vsel %vm449, %v1260, 0
    %1284 = vmatprep.subr.bf16.mxu0 0
    %1285 = vmatpush1.bf16.msra.mxu0 %v1274
    %1286 = vmatprep.subr.bf16.mxu0 0
    %1287 = vmatpush1.bf16.msra.mxu0 %v1275
    %1288 = vmatprep.subr.bf16.mxu0 0
    %1289 = vmatpush1.bf16.msra.mxu0 0
    %1290 = vmatprep.subr.bf16.mxu0 0
    %1291 = vmatpush1.bf16.msra.mxu0 0
    %1292 = vmatprep.subr.bf16.mxu0 0
    %1293 = vmatpush1.bf16.msra.mxu0 0
    %1294 = vmatprep.subr.bf16.mxu0 0
    %1295 = vmatpush1.bf16.msra.mxu0 0
    %1296 = vmatprep.subr.bf16.mxu0 0
    %1297 = vmatpush1.bf16.msra.mxu0 0
    %1298 = vmatprep.subr.bf16.mxu0 0
    %1299 = vmatpush1.bf16.msra.mxu0 0
    %1300 = vmatprep.subr.bf16.mxu0 0
    %1301 = vmatpush1.bf16.msra.mxu0 0
    %1302 = vmatprep.subr.bf16.mxu0 0
    %1303 = vmatpush1.bf16.msra.mxu0 0
    %1304 = vmatprep.subr.bf16.mxu0 0
    %1305 = vmatpush1.bf16.msra.mxu0 0
    %1306 = vmatprep.subr.bf16.mxu0 0
    %1307 = vmatpush1.bf16.msra.mxu0 0
    %1308 = vmatprep.subr.bf16.mxu0 0
    %1309 = vmatpush1.bf16.msra.mxu0 0
    %1310 = vmatprep.subr.bf16.mxu0 0
    %1311 = vmatpush1.bf16.msra.mxu0 0
    %1312 = vmatprep.subr.bf16.mxu0 0
    %1313 = vmatpush1.bf16.msra.mxu0 0
    %1314 = vmatprep.subr.bf16.mxu0 0
    %1315 = vmatpush1.bf16.msra.mxu0 0
    %1316 = vmatprep.mubr.bf16.mxu0 0
    %1317 = vmatmul.mubr.bf16.gmra.mrb[0].mxu0 %v1279
    %v1318 = vpop.f32.mrb[0].mxu0
    %v1319 = vadd.f32 0.0, %v1318
    %v1320 = vpop.f32.mrb[0].mxu0
    %v1321 = vpop.f32.mrb[0].mxu0
    %v1322 = vadd.f32 0.0, %v1321
    %v1323 = vpop.f32.mrb[0].mxu0
    %1324 = vmatprep.mubr.bf16.mxu0 0
    %1325 = vmatmul.mubr.bf16.gmra.mrb[0].mxu0 %v1282
    %v1326 = vpop.f32.mrb[0].mxu0
    %v1327 = vadd.f32 0.0, %v1326
    %v1328 = vpop.f32.mrb[0].mxu0
    %v1329 = vpop.f32.mrb[0].mxu0
    %v1330 = vpop.f32.mrb[0].mxu0
    %1331 = vdwg.mxu0
    %v1332 = vadd.f32 %v1183, %v1319
    %v1333 = vadd.f32 %v1184, %v1322
    %v1334 = vadd.f32 %v1185, %v1327
    %s1335 = scalar_lea.vmem %s5, 96
    %v1336 = vld [vmem:[%s1335] sm:$0xff]
    %v1337 = vld [vmem:[%s1335 + $0x8] sm:$0xff]
    %v1338 = vld [vmem:[%s1335 + $0x10] sm:$0x11]
    %v1342 = vunpack.c.l.b16 %v1336
    %v1343 = vunpack.c.h.b16 %v1336
    %v1344 = vunpack.c.l.b16 %v1337
    %v1345 = vunpack.c.h.b16 %v1337
    %v1346 = vunpack.c.l.b16 %v1338
    %v1347 = vunpack.c.h.b16 %v1338
    %v1348 = vpack.c.b16 %v1344, %v1342
    %v1349 = vpack.c.b16 %v1345, %v1343
    %v1350 = vpack.c.b16 %v1346, %v1346
    %v1351 = vpack.c.b16 %v1347, %v1347
    %v1355 = vsel %vm760, %v1349, 0
    %v1358 = vsel %vm760, %v1351, 0
    %1360 = vmatprep.subr.bf16.mxu0 0
    %1361 = vmatpush1.bf16.msra.mxu0 %v731
    %1362 = vmatprep.subr.bf16.mxu0 0
    %1363 = vmatpush1.bf16.msra.mxu0 %v732
    %1364 = vmatprep.subr.bf16.mxu0 0
    %1365 = vmatpush1.bf16.msra.mxu0 %v733
    %1366 = vmatprep.subr.bf16.mxu0 0
    %1367 = vmatpush1.bf16.msra.mxu0 %v734
    %1368 = vmatprep.subr.bf16.mxu0 0
    %1369 = vmatpush1.bf16.msra.mxu0 %v735
    %1370 = vmatprep.subr.bf16.mxu0 0
    %1371 = vmatpush1.bf16.msra.mxu0 %v736
    %1372 = vmatprep.subr.bf16.mxu0 0
    %1373 = vmatpush1.bf16.msra.mxu0 %v737
    %1374 = vmatprep.subr.bf16.mxu0 0
    %1375 = vmatpush1.bf16.msra.mxu0 %v738
    %1376 = vmatprep.subr.bf16.mxu0 0
    %1377 = vmatpush1.bf16.msra.mxu0 %v739
    %1378 = vmatprep.subr.bf16.mxu0 0
    %1379 = vmatpush1.bf16.msra.mxu0 %v740
    %1380 = vmatprep.subr.bf16.mxu0 0
    %1381 = vmatpush1.bf16.msra.mxu0 %v769
    %1382 = vmatprep.subr.bf16.mxu0 0
    %1383 = vmatpush1.bf16.msra.mxu0 0
    %1384 = vmatprep.subr.bf16.mxu0 0
    %1385 = vmatpush1.bf16.msra.mxu0 0
    %1386 = vmatprep.subr.bf16.mxu0 0
    %1387 = vmatpush1.bf16.msra.mxu0 0
    %1388 = vmatprep.subr.bf16.mxu0 0
    %1389 = vmatpush1.bf16.msra.mxu0 0
    %1390 = vmatprep.subr.bf16.mxu0 0
    %1391 = vmatpush1.bf16.msra.mxu0 0
    %1392 = vmatprep.mubr.bf16.mxu0 %v1355
    %1393 = vmatmul.mubr.bf16.gmra.mrb[0].mxu0 %v1348
    %v1394 = vpop.f32.mrb[0].mxu0
    %v1395 = vadd.f32 0.0, %v1394
    %v1396 = vpop.f32.mrb[0].mxu0
    %v1397 = vpop.f32.mrb[0].mxu0
    %v1398 = vadd.f32 0.0, %v1397
    %v1399 = vpop.f32.mrb[0].mxu0
    %1400 = vmatprep.mubr.bf16.mxu0 %v1358
    %1401 = vmatmul.mubr.bf16.gmra.mrb[0].mxu0 %v1350
    %v1402 = vpop.f32.mrb[0].mxu0
    %v1403 = vadd.f32 0.0, %v1402
    %v1404 = vpop.f32.mrb[0].mxu0
    %v1405 = vpop.f32.mrb[0].mxu0
    %v1406 = vpop.f32.mrb[0].mxu0
    %1407 = vdwg.mxu0
    %v1408 = vpack.c.bf16 %v1398, %v1395
    %v1409 = vpack.c.bf16 %v1403, %v1403
    %s1410 = scalar_lea.vmem %s6, 64
    %v1411 = vld [vmem:[%s1410] sm:$0xf]
    %v1412 = vld [vmem:[%s1410 + $0x4] sm:$0xf]
    %v1413 = vld [vmem:[%s1410 + $0x8] sm:$0xf]
    %v1414 = vld [vmem:[%s1410 + $0xc] sm:$0xf]
    %v1419 = vunpack.c.l.b16 %v1411
    %v1420 = vunpack.c.l.b16 %v1412
    %v1421 = vunpack.c.l.b16 %v1413
    %v1422 = vunpack.c.l.b16 %v1414
    %v1423 = vpack.c.b16 %v1420, %v1419
    %v1424 = vpack.c.b16 %v1422, %v1421
    %v1428 = vsel %vm449, %v1408, 0
    %v1431 = vsel %vm449, %v1409, 0
    %1433 = vmatprep.subr.bf16.mxu0 0
    %1434 = vmatpush1.bf16.msra.mxu0 %v1423
    %1435 = vmatprep.subr.bf16.mxu0 0
    %1436 = vmatpush1.bf16.msra.mxu0 %v1424
    %1437 = vmatprep.subr.bf16.mxu0 0
    %1438 = vmatpush1.bf16.msra.mxu0 0
    %1439 = vmatprep.subr.bf16.mxu0 0
    %1440 = vmatpush1.bf16.msra.mxu0 0
    %1441 = vmatprep.subr.bf16.mxu0 0
    %1442 = vmatpush1.bf16.msra.mxu0 0
    %1443 = vmatprep.subr.bf16.mxu0 0
    %1444 = vmatpush1.bf16.msra.mxu0 0
    %1445 = vmatprep.subr.bf16.mxu0 0
    %1446 = vmatpush1.bf16.msra.mxu0 0
    %1447 = vmatprep.subr.bf16.mxu0 0
    %1448 = vmatpush1.bf16.msra.mxu0 0
    %1449 = vmatprep.subr.bf16.mxu0 0
    %1450 = vmatpush1.bf16.msra.mxu0 0
    %1451 = vmatprep.subr.bf16.mxu0 0
    %1452 = vmatpush1.bf16.msra.mxu0 0
    %1453 = vmatprep.subr.bf16.mxu0 0
    %1454 = vmatpush1.bf16.msra.mxu0 0
    %1455 = vmatprep.subr.bf16.mxu0 0
    %1456 = vmatpush1.bf16.msra.mxu0 0
    %1457 = vmatprep.subr.bf16.mxu0 0
    %1458 = vmatpush1.bf16.msra.mxu0 0
    %1459 = vmatprep.subr.bf16.mxu0 0
    %1460 = vmatpush1.bf16.msra.mxu0 0
    %1461 = vmatprep.subr.bf16.mxu0 0
    %1462 = vmatpush1.bf16.msra.mxu0 0
    %1463 = vmatprep.subr.bf16.mxu0 0
    %1464 = vmatpush1.bf16.msra.mxu0 0
    %1465 = vmatprep.mubr.bf16.mxu0 0
    %1466 = vmatmul.mubr.bf16.gmra.mrb[0].mxu0 %v1428
    %v1467 = vpop.f32.mrb[0].mxu0
    %v1468 = vadd.f32 0.0, %v1467
    %v1469 = vpop.f32.mrb[0].mxu0
    %v1470 = vpop.f32.mrb[0].mxu0
    %v1471 = vadd.f32 0.0, %v1470
    %v1472 = vpop.f32.mrb[0].mxu0
    %1473 = vmatprep.mubr.bf16.mxu0 0
    %1474 = vmatmul.mubr.bf16.gmra.mrb[0].mxu0 %v1431
    %v1475 = vpop.f32.mrb[0].mxu0
    %v1476 = vadd.f32 0.0, %v1475
    %v1477 = vpop.f32.mrb[0].mxu0
    %v1478 = vpop.f32.mrb[0].mxu0
    %v1479 = vpop.f32.mrb[0].mxu0
    %1480 = vdwg.mxu0
    %v1481 = vadd.f32 %v1332, %v1468
    %v1482 = vadd.f32 %v1333, %v1471
    %v1483 = vadd.f32 %v1334, %v1476
    %s1484 = scalar_lea.vmem %s5, 120
    %v1485 = vld [vmem:[%s1484] sm:$0xff]
    %v1486 = vld [vmem:[%s1484 + $0x8] sm:$0xff]
    %v1487 = vld [vmem:[%s1484 + $0x10] sm:$0x11]
    %v1491 = vunpack.c.l.b16 %v1485
    %v1492 = vunpack.c.h.b16 %v1485
    %v1493 = vunpack.c.l.b16 %v1486
    %v1494 = vunpack.c.h.b16 %v1486
    %v1495 = vunpack.c.l.b16 %v1487
    %v1496 = vunpack.c.h.b16 %v1487
    %v1497 = vpack.c.b16 %v1493, %v1491
    %v1498 = vpack.c.b16 %v1494, %v1492
    %v1499 = vpack.c.b16 %v1495, %v1495
    %v1500 = vpack.c.b16 %v1496, %v1496
    %v1504 = vsel %vm760, %v1498, 0
    %v1507 = vsel %vm760, %v1500, 0
    %1509 = vmatprep.subr.bf16.mxu0 0
    %1510 = vmatpush1.bf16.msra.mxu0 %v731
    %1511 = vmatprep.subr.bf16.mxu0 0
    %1512 = vmatpush1.bf16.msra.mxu0 %v732
    %1513 = vmatprep.subr.bf16.mxu0 0
    %1514 = vmatpush1.bf16.msra.mxu0 %v733
    %1515 = vmatprep.subr.bf16.mxu0 0
    %1516 = vmatpush1.bf16.msra.mxu0 %v734
    %1517 = vmatprep.subr.bf16.mxu0 0
    %1518 = vmatpush1.bf16.msra.mxu0 %v735
    %1519 = vmatprep.subr.bf16.mxu0 0
    %1520 = vmatpush1.bf16.msra.mxu0 %v736
    %1521 = vmatprep.subr.bf16.mxu0 0
    %1522 = vmatpush1.bf16.msra.mxu0 %v737
    %1523 = vmatprep.subr.bf16.mxu0 0
    %1524 = vmatpush1.bf16.msra.mxu0 %v738
    %1525 = vmatprep.subr.bf16.mxu0 0
    %1526 = vmatpush1.bf16.msra.mxu0 %v739
    %1527 = vmatprep.subr.bf16.mxu0 0
    %1528 = vmatpush1.bf16.msra.mxu0 %v740
    %1529 = vmatprep.subr.bf16.mxu0 0
    %1530 = vmatpush1.bf16.msra.mxu0 %v769
    %1531 = vmatprep.subr.bf16.mxu0 0
    %1532 = vmatpush1.bf16.msra.mxu0 0
    %1533 = vmatprep.subr.bf16.mxu0 0
    %1534 = vmatpush1.bf16.msra.mxu0 0
    %1535 = vmatprep.subr.bf16.mxu0 0
    %1536 = vmatpush1.bf16.msra.mxu0 0
    %1537 = vmatprep.subr.bf16.mxu0 0
    %1538 = vmatpush1.bf16.msra.mxu0 0
    %1539 = vmatprep.subr.bf16.mxu0 0
    %1540 = vmatpush1.bf16.msra.mxu0 0
    %1541 = vmatprep.mubr.bf16.mxu0 %v1504
    %1542 = vmatmul.mubr.bf16.gmra.mrb[0].mxu0 %v1497
    %v1543 = vpop.f32.mrb[0].mxu0
    %v1544 = vadd.f32 0.0, %v1543
    %v1545 = vpop.f32.mrb[0].mxu0
    %v1546 = vpop.f32.mrb[0].mxu0
    %v1547 = vadd.f32 0.0, %v1546
    %v1548 = vpop.f32.mrb[0].mxu0
    %1549 = vmatprep.mubr.bf16.mxu0 %v1507
    %1550 = vmatmul.mubr.bf16.gmra.mrb[0].mxu0 %v1499
    %v1551 = vpop.f32.mrb[0].mxu0
    %v1552 = vadd.f32 0.0, %v1551
    %v1553 = vpop.f32.mrb[0].mxu0
    %v1554 = vpop.f32.mrb[0].mxu0
    %v1555 = vpop.f32.mrb[0].mxu0
    %1556 = vdwg.mxu0
    %v1557 = vpack.c.bf16 %v1547, %v1544
    %v1558 = vpack.c.bf16 %v1552, %v1552
    %s1559 = scalar_lea.vmem %s6, 80
    %v1560 = vld [vmem:[%s1559] sm:$0xf]
    %v1561 = vld [vmem:[%s1559 + $0x4] sm:$0xf]
    %v1562 = vld [vmem:[%s1559 + $0x8] sm:$0xf]
    %v1563 = vld [vmem:[%s1559 + $0xc] sm:$0xf]
    %v1568 = vunpack.c.l.b16 %v1560
    %v1569 = vunpack.c.l.b16 %v1561
    %v1570 = vunpack.c.l.b16 %v1562
    %v1571 = vunpack.c.l.b16 %v1563
    %v1572 = vpack.c.b16 %v1569, %v1568
    %v1573 = vpack.c.b16 %v1571, %v1570
    %v1577 = vsel %vm449, %v1557, 0
    %v1580 = vsel %vm449, %v1558, 0
    %1582 = vmatprep.subr.bf16.mxu0 0
    %1583 = vmatpush1.bf16.msra.mxu0 %v1572
    %1584 = vmatprep.subr.bf16.mxu0 0
    %1585 = vmatpush1.bf16.msra.mxu0 %v1573
    %1586 = vmatprep.subr.bf16.mxu0 0
    %1587 = vmatpush1.bf16.msra.mxu0 0
    %1588 = vmatprep.subr.bf16.mxu0 0
    %1589 = vmatpush1.bf16.msra.mxu0 0
    %1590 = vmatprep.subr.bf16.mxu0 0
    %1591 = vmatpush1.bf16.msra.mxu0 0
    %1592 = vmatprep.subr.bf16.mxu0 0
    %1593 = vmatpush1.bf16.msra.mxu0 0
    %1594 = vmatprep.subr.bf16.mxu0 0
    %1595 = vmatpush1.bf16.msra.mxu0 0
    %1596 = vmatprep.subr.bf16.mxu0 0
    %1597 = vmatpush1.bf16.msra.mxu0 0
    %1598 = vmatprep.subr.bf16.mxu0 0
    %1599 = vmatpush1.bf16.msra.mxu0 0
    %1600 = vmatprep.subr.bf16.mxu0 0
    %1601 = vmatpush1.bf16.msra.mxu0 0
    %1602 = vmatprep.subr.bf16.mxu0 0
    %1603 = vmatpush1.bf16.msra.mxu0 0
    %1604 = vmatprep.subr.bf16.mxu0 0
    %1605 = vmatpush1.bf16.msra.mxu0 0
    %1606 = vmatprep.subr.bf16.mxu0 0
    %1607 = vmatpush1.bf16.msra.mxu0 0
    %1608 = vmatprep.subr.bf16.mxu0 0
    %1609 = vmatpush1.bf16.msra.mxu0 0
    %1610 = vmatprep.subr.bf16.mxu0 0
    %1611 = vmatpush1.bf16.msra.mxu0 0
    %1612 = vmatprep.subr.bf16.mxu0 0
    %1613 = vmatpush1.bf16.msra.mxu0 0
    %1614 = vmatprep.mubr.bf16.mxu0 0
    %1615 = vmatmul.mubr.bf16.gmra.mrb[0].mxu0 %v1577
    %v1616 = vpop.f32.mrb[0].mxu0
    %v1617 = vadd.f32 0.0, %v1616
    %v1618 = vpop.f32.mrb[0].mxu0
    %v1619 = vpop.f32.mrb[0].mxu0
    %v1620 = vadd.f32 0.0, %v1619
    %v1621 = vpop.f32.mrb[0].mxu0
    %1622 = vmatprep.mubr.bf16.mxu0 0
    %1623 = vmatmul.mubr.bf16.gmra.mrb[0].mxu0 %v1580
    %v1624 = vpop.f32.mrb[0].mxu0
    %v1625 = vadd.f32 0.0, %v1624
    %v1626 = vpop.f32.mrb[0].mxu0
    %v1627 = vpop.f32.mrb[0].mxu0
    %v1628 = vpop.f32.mrb[0].mxu0
    %1629 = vdwg.mxu0
    %v1630 = vadd.f32 %v1481, %v1617
    %v1631 = vadd.f32 %v1482, %v1620
    %v1632 = vadd.f32 %v1483, %v1625
    %s1633 = scalar_lea.vmem %s5, 144
    %v1634 = vld [vmem:[%s1633] sm:$0xff]
    %v1635 = vld [vmem:[%s1633 + $0x8] sm:$0xff]
    %v1636 = vld [vmem:[%s1633 + $0x10] sm:$0x11]
    %v1640 = vunpack.c.l.b16 %v1634
    %v1641 = vunpack.c.h.b16 %v1634
    %v1642 = vunpack.c.l.b16 %v1635
    %v1643 = vunpack.c.h.b16 %v1635
    %v1644 = vunpack.c.l.b16 %v1636
    %v1645 = vunpack.c.h.b16 %v1636
    %v1646 = vpack.c.b16 %v1642, %v1640
    %v1647 = vpack.c.b16 %v1643, %v1641
    %v1648 = vpack.c.b16 %v1644, %v1644
    %v1649 = vpack.c.b16 %v1645, %v1645
    %v1653 = vsel %vm760, %v1647, 0
    %v1656 = vsel %vm760, %v1649, 0
    %1658 = vmatprep.subr.bf16.mxu0 0
    %1659 = vmatpush1.bf16.msra.mxu0 %v731
    %1660 = vmatprep.subr.bf16.mxu0 0
    %1661 = vmatpush1.bf16.msra.mxu0 %v732
    %1662 = vmatprep.subr.bf16.mxu0 0
    %1663 = vmatpush1.bf16.msra.mxu0 %v733
    %1664 = vmatprep.subr.bf16.mxu0 0
    %1665 = vmatpush1.bf16.msra.mxu0 %v734
    %1666 = vmatprep.subr.bf16.mxu0 0
    %1667 = vmatpush1.bf16.msra.mxu0 %v735
    %1668 = vmatprep.subr.bf16.mxu0 0
    %1669 = vmatpush1.bf16.msra.mxu0 %v736
    %1670 = vmatprep.subr.bf16.mxu0 0
    %1671 = vmatpush1.bf16.msra.mxu0 %v737
    %1672 = vmatprep.subr.bf16.mxu0 0
    %1673 = vmatpush1.bf16.msra.mxu0 %v738
    %1674 = vmatprep.subr.bf16.mxu0 0
    %1675 = vmatpush1.bf16.msra.mxu0 %v739
    %1676 = vmatprep.subr.bf16.mxu0 0
    %1677 = vmatpush1.bf16.msra.mxu0 %v740
    %1678 = vmatprep.subr.bf16.mxu0 0
    %1679 = vmatpush1.bf16.msra.mxu0 %v769
    %1680 = vmatprep.subr.bf16.mxu0 0
    %1681 = vmatpush1.bf16.msra.mxu0 0
    %1682 = vmatprep.subr.bf16.mxu0 0
    %1683 = vmatpush1.bf16.msra.mxu0 0
    %1684 = vmatprep.subr.bf16.mxu0 0
    %1685 = vmatpush1.bf16.msra.mxu0 0
    %1686 = vmatprep.subr.bf16.mxu0 0
    %1687 = vmatpush1.bf16.msra.mxu0 0
    %1688 = vmatprep.subr.bf16.mxu0 0
    %1689 = vmatpush1.bf16.msra.mxu0 0
    %1690 = vmatprep.mubr.bf16.mxu0 %v1653
    %1691 = vmatmul.mubr.bf16.gmra.mrb[0].mxu0 %v1646
    %v1692 = vpop.f32.mrb[0].mxu0
    %v1693 = vadd.f32 0.0, %v1692
    %v1694 = vpop.f32.mrb[0].mxu0
    %v1695 = vpop.f32.mrb[0].mxu0
    %v1696 = vadd.f32 0.0, %v1695
    %v1697 = vpop.f32.mrb[0].mxu0
    %1698 = vmatprep.mubr.bf16.mxu0 %v1656
    %1699 = vmatmul.mubr.bf16.gmra.mrb[0].mxu0 %v1648
    %v1700 = vpop.f32.mrb[0].mxu0
    %v1701 = vadd.f32 0.0, %v1700
    %v1702 = vpop.f32.mrb[0].mxu0
    %v1703 = vpop.f32.mrb[0].mxu0
    %v1704 = vpop.f32.mrb[0].mxu0
    %1705 = vdwg.mxu0
    %v1706 = vpack.c.bf16 %v1696, %v1693
    %v1707 = vpack.c.bf16 %v1701, %v1701
    %s1708 = scalar_lea.vmem %s6, 96
    %v1709 = vld [vmem:[%s1708] sm:$0xf]
    %v1710 = vld [vmem:[%s1708 + $0x4] sm:$0xf]
    %v1711 = vld [vmem:[%s1708 + $0x8] sm:$0xf]
    %v1712 = vld [vmem:[%s1708 + $0xc] sm:$0xf]
    %v1717 = vunpack.c.l.b16 %v1709
    %v1718 = vunpack.c.l.b16 %v1710
    %v1719 = vunpack.c.l.b16 %v1711
    %v1720 = vunpack.c.l.b16 %v1712
    %v1721 = vpack.c.b16 %v1718, %v1717
    %v1722 = vpack.c.b16 %v1720, %v1719
    %v1726 = vsel %vm449, %v1706, 0
    %v1729 = vsel %vm449, %v1707, 0
    %1731 = vmatprep.subr.bf16.mxu0 0
    %1732 = vmatpush1.bf16.msra.mxu0 %v1721
    %1733 = vmatprep.subr.bf16.mxu0 0
    %1734 = vmatpush1.bf16.msra.mxu0 %v1722
    %1735 = vmatprep.subr.bf16.mxu0 0
    %1736 = vmatpush1.bf16.msra.mxu0 0
    %1737 = vmatprep.subr.bf16.mxu0 0
    %1738 = vmatpush1.bf16.msra.mxu0 0
    %1739 = vmatprep.subr.bf16.mxu0 0
    %1740 = vmatpush1.bf16.msra.mxu0 0
    %1741 = vmatprep.subr.bf16.mxu0 0
    %1742 = vmatpush1.bf16.msra.mxu0 0
    %1743 = vmatprep.subr.bf16.mxu0 0
    %1744 = vmatpush1.bf16.msra.mxu0 0
    %1745 = vmatprep.subr.bf16.mxu0 0
    %1746 = vmatpush1.bf16.msra.mxu0 0
    %1747 = vmatprep.subr.bf16.mxu0 0
    %1748 = vmatpush1.bf16.msra.mxu0 0
    %1749 = vmatprep.subr.bf16.mxu0 0
    %1750 = vmatpush1.bf16.msra.mxu0 0
    %1751 = vmatprep.subr.bf16.mxu0 0
    %1752 = vmatpush1.bf16.msra.mxu0 0
    %1753 = vmatprep.subr.bf16.mxu0 0
    %1754 = vmatpush1.bf16.msra.mxu0 0
    %1755 = vmatprep.subr.bf16.mxu0 0
    %1756 = vmatpush1.bf16.msra.mxu0 0
    %1757 = vmatprep.subr.bf16.mxu0 0
    %1758 = vmatpush1.bf16.msra.mxu0 0
    %1759 = vmatprep.subr.bf16.mxu0 0
    %1760 = vmatpush1.bf16.msra.mxu0 0
    %1761 = vmatprep.subr.bf16.mxu0 0
    %1762 = vmatpush1.bf16.msra.mxu0 0
    %1763 = vmatprep.mubr.bf16.mxu0 0
    %1764 = vmatmul.mubr.bf16.gmra.mrb[0].mxu0 %v1726
    %v1765 = vpop.f32.mrb[0].mxu0
    %v1766 = vadd.f32 0.0, %v1765
    %v1767 = vpop.f32.mrb[0].mxu0
    %v1768 = vpop.f32.mrb[0].mxu0
    %v1769 = vadd.f32 0.0, %v1768
    %v1770 = vpop.f32.mrb[0].mxu0
    %1771 = vmatprep.mubr.bf16.mxu0 0
    %1772 = vmatmul.mubr.bf16.gmra.mrb[0].mxu0 %v1729
    %v1773 = vpop.f32.mrb[0].mxu0
    %v1774 = vadd.f32 0.0, %v1773
    %v1775 = vpop.f32.mrb[0].mxu0
    %v1776 = vpop.f32.mrb[0].mxu0
    %v1777 = vpop.f32.mrb[0].mxu0
    %1778 = vdwg.mxu0
    %v1779 = vadd.f32 %v1630, %v1766
    %v1780 = vadd.f32 %v1631, %v1769
    %v1781 = vadd.f32 %v1632, %v1774
    %s1782 = scalar_lea.vmem %s5, 168
    %v1783 = vld [vmem:[%s1782] sm:$0xff]
    %v1784 = vld [vmem:[%s1782 + $0x8] sm:$0xff]
    %v1785 = vld [vmem:[%s1782 + $0x10] sm:$0x11]
    %v1789 = vunpack.c.l.b16 %v1783
    %v1790 = vunpack.c.h.b16 %v1783
    %v1791 = vunpack.c.l.b16 %v1784
    %v1792 = vunpack.c.h.b16 %v1784
    %v1793 = vunpack.c.l.b16 %v1785
    %v1794 = vunpack.c.h.b16 %v1785
    %v1795 = vpack.c.b16 %v1791, %v1789
    %v1796 = vpack.c.b16 %v1792, %v1790
    %v1797 = vpack.c.b16 %v1793, %v1793
    %v1798 = vpack.c.b16 %v1794, %v1794
    %v1802 = vsel %vm760, %v1796, 0
    %v1805 = vsel %vm760, %v1798, 0
    %1807 = vmatprep.subr.bf16.mxu0 0
    %1808 = vmatpush1.bf16.msra.mxu0 %v731
    %1809 = vmatprep.subr.bf16.mxu0 0
    %1810 = vmatpush1.bf16.msra.mxu0 %v732
    %1811 = vmatprep.subr.bf16.mxu0 0
    %1812 = vmatpush1.bf16.msra.mxu0 %v733
    %1813 = vmatprep.subr.bf16.mxu0 0
    %1814 = vmatpush1.bf16.msra.mxu0 %v734
    %1815 = vmatprep.subr.bf16.mxu0 0
    %1816 = vmatpush1.bf16.msra.mxu0 %v735
    %1817 = vmatprep.subr.bf16.mxu0 0
    %1818 = vmatpush1.bf16.msra.mxu0 %v736
    %1819 = vmatprep.subr.bf16.mxu0 0
    %1820 = vmatpush1.bf16.msra.mxu0 %v737
    %1821 = vmatprep.subr.bf16.mxu0 0
    %1822 = vmatpush1.bf16.msra.mxu0 %v738
    %1823 = vmatprep.subr.bf16.mxu0 0
    %1824 = vmatpush1.bf16.msra.mxu0 %v739
    %1825 = vmatprep.subr.bf16.mxu0 0
    %1826 = vmatpush1.bf16.msra.mxu0 %v740
    %1827 = vmatprep.subr.bf16.mxu0 0
    %1828 = vmatpush1.bf16.msra.mxu0 %v769
    %1829 = vmatprep.subr.bf16.mxu0 0
    %1830 = vmatpush1.bf16.msra.mxu0 0
    %1831 = vmatprep.subr.bf16.mxu0 0
    %1832 = vmatpush1.bf16.msra.mxu0 0
    %1833 = vmatprep.subr.bf16.mxu0 0
    %1834 = vmatpush1.bf16.msra.mxu0 0
    %1835 = vmatprep.subr.bf16.mxu0 0
    %1836 = vmatpush1.bf16.msra.mxu0 0
    %1837 = vmatprep.subr.bf16.mxu0 0
    %1838 = vmatpush1.bf16.msra.mxu0 0
    %1839 = vmatprep.mubr.bf16.mxu0 %v1802
    %1840 = vmatmul.mubr.bf16.gmra.mrb[0].mxu0 %v1795
    %v1841 = vpop.f32.mrb[0].mxu0
    %v1842 = vadd.f32 0.0, %v1841
    %v1843 = vpop.f32.mrb[0].mxu0
    %v1844 = vpop.f32.mrb[0].mxu0
    %v1845 = vadd.f32 0.0, %v1844
    %v1846 = vpop.f32.mrb[0].mxu0
    %1847 = vmatprep.mubr.bf16.mxu0 %v1805
    %1848 = vmatmul.mubr.bf16.gmra.mrb[0].mxu0 %v1797
    %v1849 = vpop.f32.mrb[0].mxu0
    %v1850 = vadd.f32 0.0, %v1849
    %v1851 = vpop.f32.mrb[0].mxu0
    %v1852 = vpop.f32.mrb[0].mxu0
    %v1853 = vpop.f32.mrb[0].mxu0
    %1854 = vdwg.mxu0
    %v1855 = vpack.c.bf16 %v1845, %v1842
    %v1856 = vpack.c.bf16 %v1850, %v1850
    %s1857 = scalar_lea.vmem %s6, 112
    %v1858 = vld [vmem:[%s1857] sm:$0xf]
    %v1859 = vld [vmem:[%s1857 + $0x4] sm:$0xf]
    %v1860 = vld [vmem:[%s1857 + $0x8] sm:$0xf]
    %v1861 = vld [vmem:[%s1857 + $0xc] sm:$0xf]
    %v1866 = vunpack.c.l.b16 %v1858
    %v1867 = vunpack.c.l.b16 %v1859
    %v1868 = vunpack.c.l.b16 %v1860
    %v1869 = vunpack.c.l.b16 %v1861
    %v1870 = vpack.c.b16 %v1867, %v1866
    %v1871 = vpack.c.b16 %v1869, %v1868
    %v1875 = vsel %vm449, %v1855, 0
    %v1878 = vsel %vm449, %v1856, 0
    %1880 = vmatprep.subr.bf16.mxu0 0
    %1881 = vmatpush1.bf16.msra.mxu0 %v1870
    %1882 = vmatprep.subr.bf16.mxu0 0
    %1883 = vmatpush1.bf16.msra.mxu0 %v1871
    %1884 = vmatprep.subr.bf16.mxu0 0
    %1885 = vmatpush1.bf16.msra.mxu0 0
    %1886 = vmatprep.subr.bf16.mxu0 0
    %1887 = vmatpush1.bf16.msra.mxu0 0
    %1888 = vmatprep.subr.bf16.mxu0 0
    %1889 = vmatpush1.bf16.msra.mxu0 0
    %1890 = vmatprep.subr.bf16.mxu0 0
    %1891 = vmatpush1.bf16.msra.mxu0 0
    %1892 = vmatprep.subr.bf16.mxu0 0
    %1893 = vmatpush1.bf16.msra.mxu0 0
    %1894 = vmatprep.subr.bf16.mxu0 0
    %1895 = vmatpush1.bf16.msra.mxu0 0
    %1896 = vmatprep.subr.bf16.mxu0 0
    %1897 = vmatpush1.bf16.msra.mxu0 0
    %1898 = vmatprep.subr.bf16.mxu0 0
    %1899 = vmatpush1.bf16.msra.mxu0 0
    %1900 = vmatprep.subr.bf16.mxu0 0
    %1901 = vmatpush1.bf16.msra.mxu0 0
    %1902 = vmatprep.subr.bf16.mxu0 0
    %1903 = vmatpush1.bf16.msra.mxu0 0
    %1904 = vmatprep.subr.bf16.mxu0 0
    %1905 = vmatpush1.bf16.msra.mxu0 0
    %1906 = vmatprep.subr.bf16.mxu0 0
    %1907 = vmatpush1.bf16.msra.mxu0 0
    %1908 = vmatprep.subr.bf16.mxu0 0
    %1909 = vmatpush1.bf16.msra.mxu0 0
    %1910 = vmatprep.subr.bf16.mxu0 0
    %1911 = vmatpush1.bf16.msra.mxu0 0
    %1912 = vmatprep.mubr.bf16.mxu0 0
    %1913 = vmatmul.mubr.bf16.gmra.mrb[0].mxu0 %v1875
    %v1914 = vpop.f32.mrb[0].mxu0
    %v1915 = vadd.f32 0.0, %v1914
    %v1916 = vpop.f32.mrb[0].mxu0
    %v1917 = vpop.f32.mrb[0].mxu0
    %v1918 = vadd.f32 0.0, %v1917
    %v1919 = vpop.f32.mrb[0].mxu0
    %1920 = vmatprep.mubr.bf16.mxu0 0
    %1921 = vmatmul.mubr.bf16.gmra.mrb[0].mxu0 %v1878
    %v1922 = vpop.f32.mrb[0].mxu0
    %v1923 = vadd.f32 0.0, %v1922
    %v1924 = vpop.f32.mrb[0].mxu0
    %v1925 = vpop.f32.mrb[0].mxu0
    %v1926 = vpop.f32.mrb[0].mxu0
    %1927 = vdwg.mxu0
    %v1928 = vadd.f32 %v1779, %v1915
    %v1929 = vadd.f32 %v1780, %v1918
    %v1930 = vadd.f32 %v1781, %v1923
    %s1931 = scalar_lea.vmem %s5, 192
    %v1932 = vld [vmem:[%s1931] sm:$0xff]
    %v1933 = vld [vmem:[%s1931 + $0x8] sm:$0xff]
    %v1934 = vld [vmem:[%s1931 + $0x10] sm:$0x11]
    %v1938 = vunpack.c.l.b16 %v1932
    %v1939 = vunpack.c.h.b16 %v1932
    %v1940 = vunpack.c.l.b16 %v1933
    %v1941 = vunpack.c.h.b16 %v1933
    %v1942 = vunpack.c.l.b16 %v1934
    %v1943 = vunpack.c.h.b16 %v1934
    %v1944 = vpack.c.b16 %v1940, %v1938
    %v1945 = vpack.c.b16 %v1941, %v1939
    %v1946 = vpack.c.b16 %v1942, %v1942
    %v1947 = vpack.c.b16 %v1943, %v1943
    %v1951 = vsel %vm760, %v1945, 0
    %v1954 = vsel %vm760, %v1947, 0
    %1956 = vmatprep.subr.bf16.mxu0 0
    %1957 = vmatpush1.bf16.msra.mxu0 %v731
    %1958 = vmatprep.subr.bf16.mxu0 0
    %1959 = vmatpush1.bf16.msra.mxu0 %v732
    %1960 = vmatprep.subr.bf16.mxu0 0
    %1961 = vmatpush1.bf16.msra.mxu0 %v733
    %1962 = vmatprep.subr.bf16.mxu0 0
    %1963 = vmatpush1.bf16.msra.mxu0 %v734
    %1964 = vmatprep.subr.bf16.mxu0 0
    %1965 = vmatpush1.bf16.msra.mxu0 %v735
    %1966 = vmatprep.subr.bf16.mxu0 0
    %1967 = vmatpush1.bf16.msra.mxu0 %v736
    %1968 = vmatprep.subr.bf16.mxu0 0
    %1969 = vmatpush1.bf16.msra.mxu0 %v737
    %1970 = vmatprep.subr.bf16.mxu0 0
    %1971 = vmatpush1.bf16.msra.mxu0 %v738
    %1972 = vmatprep.subr.bf16.mxu0 0
    %1973 = vmatpush1.bf16.msra.mxu0 %v739
    %1974 = vmatprep.subr.bf16.mxu0 0
    %1975 = vmatpush1.bf16.msra.mxu0 %v740
    %1976 = vmatprep.subr.bf16.mxu0 0
    %1977 = vmatpush1.bf16.msra.mxu0 %v769
    %1978 = vmatprep.subr.bf16.mxu0 0
    %1979 = vmatpush1.bf16.msra.mxu0 0
    %1980 = vmatprep.subr.bf16.mxu0 0
    %1981 = vmatpush1.bf16.msra.mxu0 0
    %1982 = vmatprep.subr.bf16.mxu0 0
    %1983 = vmatpush1.bf16.msra.mxu0 0
    %1984 = vmatprep.subr.bf16.mxu0 0
    %1985 = vmatpush1.bf16.msra.mxu0 0
    %1986 = vmatprep.subr.bf16.mxu0 0
    %1987 = vmatpush1.bf16.msra.mxu0 0
    %1988 = vmatprep.mubr.bf16.mxu0 %v1951
    %1989 = vmatmul.mubr.bf16.gmra.mrb[0].mxu0 %v1944
    %v1990 = vpop.f32.mrb[0].mxu0
    %v1991 = vadd.f32 0.0, %v1990
    %v1992 = vpop.f32.mrb[0].mxu0
    %v1993 = vpop.f32.mrb[0].mxu0
    %v1994 = vadd.f32 0.0, %v1993
    %v1995 = vpop.f32.mrb[0].mxu0
    %1996 = vmatprep.mubr.bf16.mxu0 %v1954
    %1997 = vmatmul.mubr.bf16.gmra.mrb[0].mxu0 %v1946
    %v1998 = vpop.f32.mrb[0].mxu0
    %v1999 = vadd.f32 0.0, %v1998
    %v2000 = vpop.f32.mrb[0].mxu0
    %v2001 = vpop.f32.mrb[0].mxu0
    %v2002 = vpop.f32.mrb[0].mxu0
    %2003 = vdwg.mxu0
    %v2004 = vpack.c.bf16 %v1994, %v1991
    %v2005 = vpack.c.bf16 %v1999, %v1999
    %s2006 = scalar_lea.vmem %s6, 128
    %v2007 = vld [vmem:[%s2006] sm:$0xf]
    %v2008 = vld [vmem:[%s2006 + $0x4] sm:$0xf]
    %v2009 = vld [vmem:[%s2006 + $0x8] sm:$0xf]
    %v2010 = vld [vmem:[%s2006 + $0xc] sm:$0xf]
    %v2015 = vunpack.c.l.b16 %v2007
    %v2016 = vunpack.c.l.b16 %v2008
    %v2017 = vunpack.c.l.b16 %v2009
    %v2018 = vunpack.c.l.b16 %v2010
    %v2019 = vpack.c.b16 %v2016, %v2015
    %v2020 = vpack.c.b16 %v2018, %v2017
    %v2024 = vsel %vm449, %v2004, 0
    %v2027 = vsel %vm449, %v2005, 0
    %2029 = vmatprep.subr.bf16.mxu0 0
    %2030 = vmatpush1.bf16.msra.mxu0 %v2019
    %2031 = vmatprep.subr.bf16.mxu0 0
    %2032 = vmatpush1.bf16.msra.mxu0 %v2020
    %2033 = vmatprep.subr.bf16.mxu0 0
    %2034 = vmatpush1.bf16.msra.mxu0 0
    %2035 = vmatprep.subr.bf16.mxu0 0
    %2036 = vmatpush1.bf16.msra.mxu0 0
    %2037 = vmatprep.subr.bf16.mxu0 0
    %2038 = vmatpush1.bf16.msra.mxu0 0
    %2039 = vmatprep.subr.bf16.mxu0 0
    %2040 = vmatpush1.bf16.msra.mxu0 0
    %2041 = vmatprep.subr.bf16.mxu0 0
    %2042 = vmatpush1.bf16.msra.mxu0 0
    %2043 = vmatprep.subr.bf16.mxu0 0
    %2044 = vmatpush1.bf16.msra.mxu0 0
    %2045 = vmatprep.subr.bf16.mxu0 0
    %2046 = vmatpush1.bf16.msra.mxu0 0
    %2047 = vmatprep.subr.bf16.mxu0 0
    %2048 = vmatpush1.bf16.msra.mxu0 0
    %2049 = vmatprep.subr.bf16.mxu0 0
    %2050 = vmatpush1.bf16.msra.mxu0 0
    %2051 = vmatprep.subr.bf16.mxu0 0
    %2052 = vmatpush1.bf16.msra.mxu0 0
    %2053 = vmatprep.subr.bf16.mxu0 0
    %2054 = vmatpush1.bf16.msra.mxu0 0
    %2055 = vmatprep.subr.bf16.mxu0 0
    %2056 = vmatpush1.bf16.msra.mxu0 0
    %2057 = vmatprep.subr.bf16.mxu0 0
    %2058 = vmatpush1.bf16.msra.mxu0 0
    %2059 = vmatprep.subr.bf16.mxu0 0
    %2060 = vmatpush1.bf16.msra.mxu0 0
    %2061 = vmatprep.mubr.bf16.mxu0 0
    %2062 = vmatmul.mubr.bf16.gmra.mrb[0].mxu0 %v2024
    %v2063 = vpop.f32.mrb[0].mxu0
    %v2064 = vadd.f32 0.0, %v2063
    %v2065 = vpop.f32.mrb[0].mxu0
    %v2066 = vpop.f32.mrb[0].mxu0
    %v2067 = vadd.f32 0.0, %v2066
    %v2068 = vpop.f32.mrb[0].mxu0
    %2069 = vmatprep.mubr.bf16.mxu0 0
    %2070 = vmatmul.mubr.bf16.gmra.mrb[0].mxu0 %v2027
    %v2071 = vpop.f32.mrb[0].mxu0
    %v2072 = vadd.f32 0.0, %v2071
    %v2073 = vpop.f32.mrb[0].mxu0
    %v2074 = vpop.f32.mrb[0].mxu0
    %v2075 = vpop.f32.mrb[0].mxu0
    %2076 = vdwg.mxu0
    %v2077 = vadd.f32 %v1928, %v2064
    %v2078 = vadd.f32 %v1929, %v2067
    %v2079 = vadd.f32 %v1930, %v2072
    %s2080 = scalar_lea.vmem %s5, 216
    %v2081 = vld [vmem:[%s2080] sm:$0xff]
    %v2082 = vld [vmem:[%s2080 + $0x8] sm:$0xff]
    %v2083 = vld [vmem:[%s2080 + $0x10] sm:$0x11]
    %v2087 = vunpack.c.l.b16 %v2081
    %v2088 = vunpack.c.h.b16 %v2081
    %v2089 = vunpack.c.l.b16 %v2082
    %v2090 = vunpack.c.h.b16 %v2082
    %v2091 = vunpack.c.l.b16 %v2083
    %v2092 = vunpack.c.h.b16 %v2083
    %v2093 = vpack.c.b16 %v2089, %v2087
    %v2094 = vpack.c.b16 %v2090, %v2088
    %v2095 = vpack.c.b16 %v2091, %v2091
    %v2096 = vpack.c.b16 %v2092, %v2092
    %v2100 = vsel %vm760, %v2094, 0
    %v2103 = vsel %vm760, %v2096, 0
    %2105 = vmatprep.subr.bf16.mxu0 0
    %2106 = vmatpush1.bf16.msra.mxu0 %v731
    %2107 = vmatprep.subr.bf16.mxu0 0
    %2108 = vmatpush1.bf16.msra.mxu0 %v732
    %2109 = vmatprep.subr.bf16.mxu0 0
    %2110 = vmatpush1.bf16.msra.mxu0 %v733
    %2111 = vmatprep.subr.bf16.mxu0 0
    %2112 = vmatpush1.bf16.msra.mxu0 %v734
    %2113 = vmatprep.subr.bf16.mxu0 0
    %2114 = vmatpush1.bf16.msra.mxu0 %v735
    %2115 = vmatprep.subr.bf16.mxu0 0
    %2116 = vmatpush1.bf16.msra.mxu0 %v736
    %2117 = vmatprep.subr.bf16.mxu0 0
    %2118 = vmatpush1.bf16.msra.mxu0 %v737
    %2119 = vmatprep.subr.bf16.mxu0 0
    %2120 = vmatpush1.bf16.msra.mxu0 %v738
    %2121 = vmatprep.subr.bf16.mxu0 0
    %2122 = vmatpush1.bf16.msra.mxu0 %v739
    %2123 = vmatprep.subr.bf16.mxu0 0
    %2124 = vmatpush1.bf16.msra.mxu0 %v740
    %2125 = vmatprep.subr.bf16.mxu0 0
    %2126 = vmatpush1.bf16.msra.mxu0 %v769
    %2127 = vmatprep.subr.bf16.mxu0 0
    %2128 = vmatpush1.bf16.msra.mxu0 0
    %2129 = vmatprep.subr.bf16.mxu0 0
    %2130 = vmatpush1.bf16.msra.mxu0 0
    %2131 = vmatprep.subr.bf16.mxu0 0
    %2132 = vmatpush1.bf16.msra.mxu0 0
    %2133 = vmatprep.subr.bf16.mxu0 0
    %2134 = vmatpush1.bf16.msra.mxu0 0
    %2135 = vmatprep.subr.bf16.mxu0 0
    %2136 = vmatpush1.bf16.msra.mxu0 0
    %2137 = vmatprep.mubr.bf16.mxu0 %v2100
    %2138 = vmatmul.mubr.bf16.gmra.mrb[0].mxu0 %v2093
    %v2139 = vpop.f32.mrb[0].mxu0
    %v2140 = vadd.f32 0.0, %v2139
    %v2141 = vpop.f32.mrb[0].mxu0
    %v2142 = vpop.f32.mrb[0].mxu0
    %v2143 = vadd.f32 0.0, %v2142
    %v2144 = vpop.f32.mrb[0].mxu0
    %2145 = vmatprep.mubr.bf16.mxu0 %v2103
    %2146 = vmatmul.mubr.bf16.gmra.mrb[0].mxu0 %v2095
    %v2147 = vpop.f32.mrb[0].mxu0
    %v2148 = vadd.f32 0.0, %v2147
    %v2149 = vpop.f32.mrb[0].mxu0
    %v2150 = vpop.f32.mrb[0].mxu0
    %v2151 = vpop.f32.mrb[0].mxu0
    %2152 = vdwg.mxu0
    %v2153 = vpack.c.bf16 %v2143, %v2140
    %v2154 = vpack.c.bf16 %v2148, %v2148
    %s2155 = scalar_lea.vmem %s6, 144
    %v2156 = vld [vmem:[%s2155] sm:$0xf]
    %v2157 = vld [vmem:[%s2155 + $0x4] sm:$0xf]
    %v2158 = vld [vmem:[%s2155 + $0x8] sm:$0xf]
    %v2159 = vld [vmem:[%s2155 + $0xc] sm:$0xf]
    %v2164 = vunpack.c.l.b16 %v2156
    %v2165 = vunpack.c.l.b16 %v2157
    %v2166 = vunpack.c.l.b16 %v2158
    %v2167 = vunpack.c.l.b16 %v2159
    %v2168 = vpack.c.b16 %v2165, %v2164
    %v2169 = vpack.c.b16 %v2167, %v2166
    %v2173 = vsel %vm449, %v2153, 0
    %v2176 = vsel %vm449, %v2154, 0
    %2178 = vmatprep.subr.bf16.mxu0 0
    %2179 = vmatpush1.bf16.msra.mxu0 %v2168
    %2180 = vmatprep.subr.bf16.mxu0 0
    %2181 = vmatpush1.bf16.msra.mxu0 %v2169
    %2182 = vmatprep.subr.bf16.mxu0 0
    %2183 = vmatpush1.bf16.msra.mxu0 0
    %2184 = vmatprep.subr.bf16.mxu0 0
    %2185 = vmatpush1.bf16.msra.mxu0 0
    %2186 = vmatprep.subr.bf16.mxu0 0
    %2187 = vmatpush1.bf16.msra.mxu0 0
    %2188 = vmatprep.subr.bf16.mxu0 0
    %2189 = vmatpush1.bf16.msra.mxu0 0
    %2190 = vmatprep.subr.bf16.mxu0 0
    %2191 = vmatpush1.bf16.msra.mxu0 0
    %2192 = vmatprep.subr.bf16.mxu0 0
    %2193 = vmatpush1.bf16.msra.mxu0 0
    %2194 = vmatprep.subr.bf16.mxu0 0
    %2195 = vmatpush1.bf16.msra.mxu0 0
    %2196 = vmatprep.subr.bf16.mxu0 0
    %2197 = vmatpush1.bf16.msra.mxu0 0
    %2198 = vmatprep.subr.bf16.mxu0 0
    %2199 = vmatpush1.bf16.msra.mxu0 0
    %2200 = vmatprep.subr.bf16.mxu0 0
    %2201 = vmatpush1.bf16.msra.mxu0 0
    %2202 = vmatprep.subr.bf16.mxu0 0
    %2203 = vmatpush1.bf16.msra.mxu0 0
    %2204 = vmatprep.subr.bf16.mxu0 0
    %2205 = vmatpush1.bf16.msra.mxu0 0
    %2206 = vmatprep.subr.bf16.mxu0 0
    %2207 = vmatpush1.bf16.msra.mxu0 0
    %2208 = vmatprep.subr.bf16.mxu0 0
    %2209 = vmatpush1.bf16.msra.mxu0 0
    %2210 = vmatprep.mubr.bf16.mxu0 0
    %2211 = vmatmul.mubr.bf16.gmra.mrb[0].mxu0 %v2173
    %v2212 = vpop.f32.mrb[0].mxu0
    %v2213 = vadd.f32 0.0, %v2212
    %v2214 = vpop.f32.mrb[0].mxu0
    %v2215 = vpop.f32.mrb[0].mxu0
    %v2216 = vadd.f32 0.0, %v2215
    %v2217 = vpop.f32.mrb[0].mxu0
    %2218 = vmatprep.mubr.bf16.mxu0 0
    %2219 = vmatmul.mubr.bf16.gmra.mrb[0].mxu0 %v2176
    %v2220 = vpop.f32.mrb[0].mxu0
    %v2221 = vadd.f32 0.0, %v2220
    %v2222 = vpop.f32.mrb[0].mxu0
    %v2223 = vpop.f32.mrb[0].mxu0
    %v2224 = vpop.f32.mrb[0].mxu0
    %2225 = vdwg.mxu0
    %v2226 = vadd.f32 %v2077, %v2213
    %v2227 = vadd.f32 %v2078, %v2216
    %v2228 = vadd.f32 %v2079, %v2221
    %s2229 = scalar_lea.vmem %s5, 240
    %v2230 = vld [vmem:[%s2229] sm:$0xff]
    %v2231 = vld [vmem:[%s2229 + $0x8] sm:$0xff]
    %v2232 = vld [vmem:[%s2229 + $0x10] sm:$0x11]
    %v2236 = vunpack.c.l.b16 %v2230
    %v2237 = vunpack.c.h.b16 %v2230
    %v2238 = vunpack.c.l.b16 %v2231
    %v2239 = vunpack.c.h.b16 %v2231
    %v2240 = vunpack.c.l.b16 %v2232
    %v2241 = vunpack.c.h.b16 %v2232
    %v2242 = vpack.c.b16 %v2238, %v2236
    %v2243 = vpack.c.b16 %v2239, %v2237
    %v2244 = vpack.c.b16 %v2240, %v2240
    %v2245 = vpack.c.b16 %v2241, %v2241
    %v2249 = vsel %vm760, %v2243, 0
    %v2252 = vsel %vm760, %v2245, 0
    %2254 = vmatprep.subr.bf16.mxu0 0
    %2255 = vmatpush1.bf16.msra.mxu0 %v731
    %2256 = vmatprep.subr.bf16.mxu0 0
    %2257 = vmatpush1.bf16.msra.mxu0 %v732
    %2258 = vmatprep.subr.bf16.mxu0 0
    %2259 = vmatpush1.bf16.msra.mxu0 %v733
    %2260 = vmatprep.subr.bf16.mxu0 0
    %2261 = vmatpush1.bf16.msra.mxu0 %v734
    %2262 = vmatprep.subr.bf16.mxu0 0
    %2263 = vmatpush1.bf16.msra.mxu0 %v735
    %2264 = vmatprep.subr.bf16.mxu0 0
    %2265 = vmatpush1.bf16.msra.mxu0 %v736
    %2266 = vmatprep.subr.bf16.mxu0 0
    %2267 = vmatpush1.bf16.msra.mxu0 %v737
    %2268 = vmatprep.subr.bf16.mxu0 0
    %2269 = vmatpush1.bf16.msra.mxu0 %v738
    %2270 = vmatprep.subr.bf16.mxu0 0
    %2271 = vmatpush1.bf16.msra.mxu0 %v739
    %2272 = vmatprep.subr.bf16.mxu0 0
    %2273 = vmatpush1.bf16.msra.mxu0 %v740
    %2274 = vmatprep.subr.bf16.mxu0 0
    %2275 = vmatpush1.bf16.msra.mxu0 %v769
    %2276 = vmatprep.subr.bf16.mxu0 0
    %2277 = vmatpush1.bf16.msra.mxu0 0
    %2278 = vmatprep.subr.bf16.mxu0 0
    %2279 = vmatpush1.bf16.msra.mxu0 0
    %2280 = vmatprep.subr.bf16.mxu0 0
    %2281 = vmatpush1.bf16.msra.mxu0 0
    %2282 = vmatprep.subr.bf16.mxu0 0
    %2283 = vmatpush1.bf16.msra.mxu0 0
    %2284 = vmatprep.subr.bf16.mxu0 0
    %2285 = vmatpush1.bf16.msra.mxu0 0
    %2286 = vmatprep.mubr.bf16.mxu0 %v2249
    %2287 = vmatmul.mubr.bf16.gmra.mrb[0].mxu0 %v2242
    %v2288 = vpop.f32.mrb[0].mxu0
    %v2289 = vadd.f32 0.0, %v2288
    %v2290 = vpop.f32.mrb[0].mxu0
    %v2291 = vpop.f32.mrb[0].mxu0
    %v2292 = vadd.f32 0.0, %v2291
    %v2293 = vpop.f32.mrb[0].mxu0
    %2294 = vmatprep.mubr.bf16.mxu0 %v2252
    %2295 = vmatmul.mubr.bf16.gmra.mrb[0].mxu0 %v2244
    %v2296 = vpop.f32.mrb[0].mxu0
    %v2297 = vadd.f32 0.0, %v2296
    %v2298 = vpop.f32.mrb[0].mxu0
    %v2299 = vpop.f32.mrb[0].mxu0
    %v2300 = vpop.f32.mrb[0].mxu0
    %2301 = vdwg.mxu0
    %v2302 = vpack.c.bf16 %v2292, %v2289
    %v2303 = vpack.c.bf16 %v2297, %v2297
    %s2304 = scalar_lea.vmem %s6, 160
    %v2305 = vld [vmem:[%s2304] sm:$0xf]
    %v2306 = vld [vmem:[%s2304 + $0x4] sm:$0xf]
    %v2307 = vld [vmem:[%s2304 + $0x8] sm:$0xf]
    %v2308 = vld [vmem:[%s2304 + $0xc] sm:$0xf]
    %v2313 = vunpack.c.l.b16 %v2305
    %v2314 = vunpack.c.l.b16 %v2306
    %v2315 = vunpack.c.l.b16 %v2307
    %v2316 = vunpack.c.l.b16 %v2308
    %v2317 = vpack.c.b16 %v2314, %v2313
    %v2318 = vpack.c.b16 %v2316, %v2315
    %v2322 = vsel %vm449, %v2302, 0
    %v2325 = vsel %vm449, %v2303, 0
    %2327 = vmatprep.subr.bf16.mxu0 0
    %2328 = vmatpush1.bf16.msra.mxu0 %v2317
    %2329 = vmatprep.subr.bf16.mxu0 0
    %2330 = vmatpush1.bf16.msra.mxu0 %v2318
    %2331 = vmatprep.subr.bf16.mxu0 0
    %2332 = vmatpush1.bf16.msra.mxu0 0
    %2333 = vmatprep.subr.bf16.mxu0 0
    %2334 = vmatpush1.bf16.msra.mxu0 0
    %2335 = vmatprep.subr.bf16.mxu0 0
    %2336 = vmatpush1.bf16.msra.mxu0 0
    %2337 = vmatprep.subr.bf16.mxu0 0
    %2338 = vmatpush1.bf16.msra.mxu0 0
    %2339 = vmatprep.subr.bf16.mxu0 0
    %2340 = vmatpush1.bf16.msra.mxu0 0
    %2341 = vmatprep.subr.bf16.mxu0 0
    %2342 = vmatpush1.bf16.msra.mxu0 0
    %2343 = vmatprep.subr.bf16.mxu0 0
    %2344 = vmatpush1.bf16.msra.mxu0 0
    %2345 = vmatprep.subr.bf16.mxu0 0
    %2346 = vmatpush1.bf16.msra.mxu0 0
    %2347 = vmatprep.subr.bf16.mxu0 0
    %2348 = vmatpush1.bf16.msra.mxu0 0
    %2349 = vmatprep.subr.bf16.mxu0 0
    %2350 = vmatpush1.bf16.msra.mxu0 0
    %2351 = vmatprep.subr.bf16.mxu0 0
    %2352 = vmatpush1.bf16.msra.mxu0 0
    %2353 = vmatprep.subr.bf16.mxu0 0
    %2354 = vmatpush1.bf16.msra.mxu0 0
    %2355 = vmatprep.subr.bf16.mxu0 0
    %2356 = vmatpush1.bf16.msra.mxu0 0
    %2357 = vmatprep.subr.bf16.mxu0 0
    %2358 = vmatpush1.bf16.msra.mxu0 0
    %2359 = vmatprep.mubr.bf16.mxu0 0
    %2360 = vmatmul.mubr.bf16.gmra.mrb[0].mxu0 %v2322
    %v2361 = vpop.f32.mrb[0].mxu0
    %v2362 = vadd.f32 0.0, %v2361
    %v2363 = vpop.f32.mrb[0].mxu0
    %v2364 = vpop.f32.mrb[0].mxu0
    %v2365 = vadd.f32 0.0, %v2364
    %v2366 = vpop.f32.mrb[0].mxu0
    %2367 = vmatprep.mubr.bf16.mxu0 0
    %2368 = vmatmul.mubr.bf16.gmra.mrb[0].mxu0 %v2325
    %v2369 = vpop.f32.mrb[0].mxu0
    %v2370 = vadd.f32 0.0, %v2369
    %v2371 = vpop.f32.mrb[0].mxu0
    %v2372 = vpop.f32.mrb[0].mxu0
    %v2373 = vpop.f32.mrb[0].mxu0
    %2374 = vdwg.mxu0
    %v2375 = vadd.f32 %v2226, %v2362
    %v2376 = vadd.f32 %v2227, %v2365
    %v2377 = vadd.f32 %v2228, %v2370
    %s2378 = scalar_lea.vmem %s5, 264
    %v2379 = vld [vmem:[%s2378] sm:$0xff]
    %v2380 = vld [vmem:[%s2378 + $0x8] sm:$0xff]
    %v2381 = vld [vmem:[%s2378 + $0x10] sm:$0x11]
    %v2385 = vunpack.c.l.b16 %v2379
    %v2386 = vunpack.c.h.b16 %v2379
    %v2387 = vunpack.c.l.b16 %v2380
    %v2388 = vunpack.c.h.b16 %v2380
    %v2389 = vunpack.c.l.b16 %v2381
    %v2390 = vunpack.c.h.b16 %v2381
    %v2391 = vpack.c.b16 %v2387, %v2385
    %v2392 = vpack.c.b16 %v2388, %v2386
    %v2393 = vpack.c.b16 %v2389, %v2389
    %v2394 = vpack.c.b16 %v2390, %v2390
    %v2398 = vsel %vm760, %v2392, 0
    %v2401 = vsel %vm760, %v2394, 0
    %2403 = vmatprep.subr.bf16.mxu0 0
    %2404 = vmatpush1.bf16.msra.mxu0 %v731
    %2405 = vmatprep.subr.bf16.mxu0 0
    %2406 = vmatpush1.bf16.msra.mxu0 %v732
    %2407 = vmatprep.subr.bf16.mxu0 0
    %2408 = vmatpush1.bf16.msra.mxu0 %v733
    %2409 = vmatprep.subr.bf16.mxu0 0
    %2410 = vmatpush1.bf16.msra.mxu0 %v734
    %2411 = vmatprep.subr.bf16.mxu0 0
    %2412 = vmatpush1.bf16.msra.mxu0 %v735
    %2413 = vmatprep.subr.bf16.mxu0 0
    %2414 = vmatpush1.bf16.msra.mxu0 %v736
    %2415 = vmatprep.subr.bf16.mxu0 0
    %2416 = vmatpush1.bf16.msra.mxu0 %v737
    %2417 = vmatprep.subr.bf16.mxu0 0
    %2418 = vmatpush1.bf16.msra.mxu0 %v738
    %2419 = vmatprep.subr.bf16.mxu0 0
    %2420 = vmatpush1.bf16.msra.mxu0 %v739
    %2421 = vmatprep.subr.bf16.mxu0 0
    %2422 = vmatpush1.bf16.msra.mxu0 %v740
    %2423 = vmatprep.subr.bf16.mxu0 0
    %2424 = vmatpush1.bf16.msra.mxu0 %v769
    %2425 = vmatprep.subr.bf16.mxu0 0
    %2426 = vmatpush1.bf16.msra.mxu0 0
    %2427 = vmatprep.subr.bf16.mxu0 0
    %2428 = vmatpush1.bf16.msra.mxu0 0
    %2429 = vmatprep.subr.bf16.mxu0 0
    %2430 = vmatpush1.bf16.msra.mxu0 0
    %2431 = vmatprep.subr.bf16.mxu0 0
    %2432 = vmatpush1.bf16.msra.mxu0 0
    %2433 = vmatprep.subr.bf16.mxu0 0
    %2434 = vmatpush1.bf16.msra.mxu0 0
    %2435 = vmatprep.mubr.bf16.mxu0 %v2398
    %2436 = vmatmul.mubr.bf16.gmra.mrb[0].mxu0 %v2391
    %v2437 = vpop.f32.mrb[0].mxu0
    %v2438 = vadd.f32 0.0, %v2437
    %v2439 = vpop.f32.mrb[0].mxu0
    %v2440 = vpop.f32.mrb[0].mxu0
    %v2441 = vadd.f32 0.0, %v2440
    %v2442 = vpop.f32.mrb[0].mxu0
    %2443 = vmatprep.mubr.bf16.mxu0 %v2401
    %2444 = vmatmul.mubr.bf16.gmra.mrb[0].mxu0 %v2393
    %v2445 = vpop.f32.mrb[0].mxu0
    %v2446 = vadd.f32 0.0, %v2445
    %v2447 = vpop.f32.mrb[0].mxu0
    %v2448 = vpop.f32.mrb[0].mxu0
    %v2449 = vpop.f32.mrb[0].mxu0
    %2450 = vdwg.mxu0
    %v2451 = vpack.c.bf16 %v2441, %v2438
    %v2452 = vpack.c.bf16 %v2446, %v2446
    %s2453 = scalar_lea.vmem %s6, 176
    %v2454 = vld [vmem:[%s2453] sm:$0xf]
    %v2455 = vld [vmem:[%s2453 + $0x4] sm:$0xf]
    %v2456 = vld [vmem:[%s2453 + $0x8] sm:$0xf]
    %v2457 = vld [vmem:[%s2453 + $0xc] sm:$0xf]
    %v2462 = vunpack.c.l.b16 %v2454
    %v2463 = vunpack.c.l.b16 %v2455
    %v2464 = vunpack.c.l.b16 %v2456
    %v2465 = vunpack.c.l.b16 %v2457
    %v2466 = vpack.c.b16 %v2463, %v2462
    %v2467 = vpack.c.b16 %v2465, %v2464
    %v2471 = vsel %vm449, %v2451, 0
    %v2474 = vsel %vm449, %v2452, 0
    %2476 = vmatprep.subr.bf16.mxu0 0
    %2477 = vmatpush1.bf16.msra.mxu0 %v2466
    %2478 = vmatprep.subr.bf16.mxu0 0
    %2479 = vmatpush1.bf16.msra.mxu0 %v2467
    %2480 = vmatprep.subr.bf16.mxu0 0
    %2481 = vmatpush1.bf16.msra.mxu0 0
    %2482 = vmatprep.subr.bf16.mxu0 0
    %2483 = vmatpush1.bf16.msra.mxu0 0
    %2484 = vmatprep.subr.bf16.mxu0 0
    %2485 = vmatpush1.bf16.msra.mxu0 0
    %2486 = vmatprep.subr.bf16.mxu0 0
    %2487 = vmatpush1.bf16.msra.mxu0 0
    %2488 = vmatprep.subr.bf16.mxu0 0
    %2489 = vmatpush1.bf16.msra.mxu0 0
    %2490 = vmatprep.subr.bf16.mxu0 0
    %2491 = vmatpush1.bf16.msra.mxu0 0
    %2492 = vmatprep.subr.bf16.mxu0 0
    %2493 = vmatpush1.bf16.msra.mxu0 0
    %2494 = vmatprep.subr.bf16.mxu0 0
    %2495 = vmatpush1.bf16.msra.mxu0 0
    %2496 = vmatprep.subr.bf16.mxu0 0
    %2497 = vmatpush1.bf16.msra.mxu0 0
    %2498 = vmatprep.subr.bf16.mxu0 0
    %2499 = vmatpush1.bf16.msra.mxu0 0
    %2500 = vmatprep.subr.bf16.mxu0 0
    %2501 = vmatpush1.bf16.msra.mxu0 0
    %2502 = vmatprep.subr.bf16.mxu0 0
    %2503 = vmatpush1.bf16.msra.mxu0 0
    %2504 = vmatprep.subr.bf16.mxu0 0
    %2505 = vmatpush1.bf16.msra.mxu0 0
    %2506 = vmatprep.subr.bf16.mxu0 0
    %2507 = vmatpush1.bf16.msra.mxu0 0
    %2508 = vmatprep.mubr.bf16.mxu0 0
    %2509 = vmatmul.mubr.bf16.gmra.mrb[0].mxu0 %v2471
    %v2510 = vpop.f32.mrb[0].mxu0
    %v2511 = vadd.f32 0.0, %v2510
    %v2512 = vpop.f32.mrb[0].mxu0
    %v2513 = vpop.f32.mrb[0].mxu0
    %v2514 = vadd.f32 0.0, %v2513
    %v2515 = vpop.f32.mrb[0].mxu0
    %2516 = vmatprep.mubr.bf16.mxu0 0
    %2517 = vmatmul.mubr.bf16.gmra.mrb[0].mxu0 %v2474
    %v2518 = vpop.f32.mrb[0].mxu0
    %v2519 = vadd.f32 0.0, %v2518
    %v2520 = vpop.f32.mrb[0].mxu0
    %v2521 = vpop.f32.mrb[0].mxu0
    %v2522 = vpop.f32.mrb[0].mxu0
    %2523 = vdwg.mxu0
    %v2524 = vadd.f32 %v2375, %v2511
    %v2525 = vadd.f32 %v2376, %v2514
    %v2526 = vadd.f32 %v2377, %v2519
    %s2527 = scalar_lea.vmem %s5, 288
    %v2528 = vld [vmem:[%s2527] sm:$0xff]
    %v2529 = vld [vmem:[%s2527 + $0x8] sm:$0xff]
    %v2530 = vld [vmem:[%s2527 + $0x10] sm:$0x11]
    %v2534 = vunpack.c.l.b16 %v2528
    %v2535 = vunpack.c.h.b16 %v2528
    %v2536 = vunpack.c.l.b16 %v2529
    %v2537 = vunpack.c.h.b16 %v2529
    %v2538 = vunpack.c.l.b16 %v2530
    %v2539 = vunpack.c.h.b16 %v2530
    %v2540 = vpack.c.b16 %v2536, %v2534
    %v2541 = vpack.c.b16 %v2537, %v2535
    %v2542 = vpack.c.b16 %v2538, %v2538
    %v2543 = vpack.c.b16 %v2539, %v2539
    %v2547 = vsel %vm760, %v2541, 0
    %v2550 = vsel %vm760, %v2543, 0
    %2552 = vmatprep.subr.bf16.mxu0 0
    %2553 = vmatpush1.bf16.msra.mxu0 %v731
    %2554 = vmatprep.subr.bf16.mxu0 0
    %2555 = vmatpush1.bf16.msra.mxu0 %v732
    %2556 = vmatprep.subr.bf16.mxu0 0
    %2557 = vmatpush1.bf16.msra.mxu0 %v733
    %2558 = vmatprep.subr.bf16.mxu0 0
    %2559 = vmatpush1.bf16.msra.mxu0 %v734
    %2560 = vmatprep.subr.bf16.mxu0 0
    %2561 = vmatpush1.bf16.msra.mxu0 %v735
    %2562 = vmatprep.subr.bf16.mxu0 0
    %2563 = vmatpush1.bf16.msra.mxu0 %v736
    %2564 = vmatprep.subr.bf16.mxu0 0
    %2565 = vmatpush1.bf16.msra.mxu0 %v737
    %2566 = vmatprep.subr.bf16.mxu0 0
    %2567 = vmatpush1.bf16.msra.mxu0 %v738
    %2568 = vmatprep.subr.bf16.mxu0 0
    %2569 = vmatpush1.bf16.msra.mxu0 %v739
    %2570 = vmatprep.subr.bf16.mxu0 0
    %2571 = vmatpush1.bf16.msra.mxu0 %v740
    %2572 = vmatprep.subr.bf16.mxu0 0
    %2573 = vmatpush1.bf16.msra.mxu0 %v769
    %2574 = vmatprep.subr.bf16.mxu0 0
    %2575 = vmatpush1.bf16.msra.mxu0 0
    %2576 = vmatprep.subr.bf16.mxu0 0
    %2577 = vmatpush1.bf16.msra.mxu0 0
    %2578 = vmatprep.subr.bf16.mxu0 0
    %2579 = vmatpush1.bf16.msra.mxu0 0
    %2580 = vmatprep.subr.bf16.mxu0 0
    %2581 = vmatpush1.bf16.msra.mxu0 0
    %2582 = vmatprep.subr.bf16.mxu0 0
    %2583 = vmatpush1.bf16.msra.mxu0 0
    %2584 = vmatprep.mubr.bf16.mxu0 %v2547
    %2585 = vmatmul.mubr.bf16.gmra.mrb[0].mxu0 %v2540
    %v2586 = vpop.f32.mrb[0].mxu0
    %v2587 = vadd.f32 0.0, %v2586
    %v2588 = vpop.f32.mrb[0].mxu0
    %v2589 = vpop.f32.mrb[0].mxu0
    %v2590 = vadd.f32 0.0, %v2589
    %v2591 = vpop.f32.mrb[0].mxu0
    %2592 = vmatprep.mubr.bf16.mxu0 %v2550
    %2593 = vmatmul.mubr.bf16.gmra.mrb[0].mxu0 %v2542
    %v2594 = vpop.f32.mrb[0].mxu0
    %v2595 = vadd.f32 0.0, %v2594
    %v2596 = vpop.f32.mrb[0].mxu0
    %v2597 = vpop.f32.mrb[0].mxu0
    %v2598 = vpop.f32.mrb[0].mxu0
    %2599 = vdwg.mxu0
    %v2600 = vpack.c.bf16 %v2590, %v2587
    %v2601 = vpack.c.bf16 %v2595, %v2595
    %s2602 = scalar_lea.vmem %s6, 192
    %v2603 = vld [vmem:[%s2602] sm:$0xf]
    %v2604 = vld [vmem:[%s2602 + $0x4] sm:$0xf]
    %v2605 = vld [vmem:[%s2602 + $0x8] sm:$0xf]
    %v2606 = vld [vmem:[%s2602 + $0xc] sm:$0xf]
    %v2611 = vunpack.c.l.b16 %v2603
    %v2612 = vunpack.c.l.b16 %v2604
    %v2613 = vunpack.c.l.b16 %v2605
    %v2614 = vunpack.c.l.b16 %v2606
    %v2615 = vpack.c.b16 %v2612, %v2611
    %v2616 = vpack.c.b16 %v2614, %v2613
    %v2620 = vsel %vm449, %v2600, 0
    %v2623 = vsel %vm449, %v2601, 0
    %2625 = vmatprep.subr.bf16.mxu0 0
    %2626 = vmatpush1.bf16.msra.mxu0 %v2615
    %2627 = vmatprep.subr.bf16.mxu0 0
    %2628 = vmatpush1.bf16.msra.mxu0 %v2616
    %2629 = vmatprep.subr.bf16.mxu0 0
    %2630 = vmatpush1.bf16.msra.mxu0 0
    %2631 = vmatprep.subr.bf16.mxu0 0
    %2632 = vmatpush1.bf16.msra.mxu0 0
    %2633 = vmatprep.subr.bf16.mxu0 0
    %2634 = vmatpush1.bf16.msra.mxu0 0
    %2635 = vmatprep.subr.bf16.mxu0 0
    %2636 = vmatpush1.bf16.msra.mxu0 0
    %2637 = vmatprep.subr.bf16.mxu0 0
    %2638 = vmatpush1.bf16.msra.mxu0 0
    %2639 = vmatprep.subr.bf16.mxu0 0
    %2640 = vmatpush1.bf16.msra.mxu0 0
    %2641 = vmatprep.subr.bf16.mxu0 0
    %2642 = vmatpush1.bf16.msra.mxu0 0
    %2643 = vmatprep.subr.bf16.mxu0 0
    %2644 = vmatpush1.bf16.msra.mxu0 0
    %2645 = vmatprep.subr.bf16.mxu0 0
    %2646 = vmatpush1.bf16.msra.mxu0 0
    %2647 = vmatprep.subr.bf16.mxu0 0
    %2648 = vmatpush1.bf16.msra.mxu0 0
    %2649 = vmatprep.subr.bf16.mxu0 0
    %2650 = vmatpush1.bf16.msra.mxu0 0
    %2651 = vmatprep.subr.bf16.mxu0 0
    %2652 = vmatpush1.bf16.msra.mxu0 0
    %2653 = vmatprep.subr.bf16.mxu0 0
    %2654 = vmatpush1.bf16.msra.mxu0 0
    %2655 = vmatprep.subr.bf16.mxu0 0
    %2656 = vmatpush1.bf16.msra.mxu0 0
    %2657 = vmatprep.mubr.bf16.mxu0 0
    %2658 = vmatmul.mubr.bf16.gmra.mrb[0].mxu0 %v2620
    %v2659 = vpop.f32.mrb[0].mxu0
    %v2660 = vadd.f32 0.0, %v2659
    %v2661 = vpop.f32.mrb[0].mxu0
    %v2662 = vpop.f32.mrb[0].mxu0
    %v2663 = vadd.f32 0.0, %v2662
    %v2664 = vpop.f32.mrb[0].mxu0
    %2665 = vmatprep.mubr.bf16.mxu0 0
    %2666 = vmatmul.mubr.bf16.gmra.mrb[0].mxu0 %v2623
    %v2667 = vpop.f32.mrb[0].mxu0
    %v2668 = vadd.f32 0.0, %v2667
    %v2669 = vpop.f32.mrb[0].mxu0
    %v2670 = vpop.f32.mrb[0].mxu0
    %v2671 = vpop.f32.mrb[0].mxu0
    %2672 = vdwg.mxu0
    %v2673 = vadd.f32 %v2524, %v2660
    %v2674 = vadd.f32 %v2525, %v2663
    %v2675 = vadd.f32 %v2526, %v2668
    %s2676 = scalar_lea.vmem %s5, 312
    %v2677 = vld [vmem:[%s2676] sm:$0xff]
    %v2678 = vld [vmem:[%s2676 + $0x8] sm:$0xff]
    %v2679 = vld [vmem:[%s2676 + $0x10] sm:$0x11]
    %v2683 = vunpack.c.l.b16 %v2677
    %v2684 = vunpack.c.h.b16 %v2677
    %v2685 = vunpack.c.l.b16 %v2678
    %v2686 = vunpack.c.h.b16 %v2678
    %v2687 = vunpack.c.l.b16 %v2679
    %v2688 = vunpack.c.h.b16 %v2679
    %v2689 = vpack.c.b16 %v2685, %v2683
    %v2690 = vpack.c.b16 %v2686, %v2684
    %v2691 = vpack.c.b16 %v2687, %v2687
    %v2692 = vpack.c.b16 %v2688, %v2688
    %v2696 = vsel %vm760, %v2690, 0
    %v2699 = vsel %vm760, %v2692, 0
    %2701 = vmatprep.subr.bf16.mxu0 0
    %2702 = vmatpush1.bf16.msra.mxu0 %v731
    %2703 = vmatprep.subr.bf16.mxu0 0
    %2704 = vmatpush1.bf16.msra.mxu0 %v732
    %2705 = vmatprep.subr.bf16.mxu0 0
    %2706 = vmatpush1.bf16.msra.mxu0 %v733
    %2707 = vmatprep.subr.bf16.mxu0 0
    %2708 = vmatpush1.bf16.msra.mxu0 %v734
    %2709 = vmatprep.subr.bf16.mxu0 0
    %2710 = vmatpush1.bf16.msra.mxu0 %v735
    %2711 = vmatprep.subr.bf16.mxu0 0
    %2712 = vmatpush1.bf16.msra.mxu0 %v736
    %2713 = vmatprep.subr.bf16.mxu0 0
    %2714 = vmatpush1.bf16.msra.mxu0 %v737
    %2715 = vmatprep.subr.bf16.mxu0 0
    %2716 = vmatpush1.bf16.msra.mxu0 %v738
    %2717 = vmatprep.subr.bf16.mxu0 0
    %2718 = vmatpush1.bf16.msra.mxu0 %v739
    %2719 = vmatprep.subr.bf16.mxu0 0
    %2720 = vmatpush1.bf16.msra.mxu0 %v740
    %2721 = vmatprep.subr.bf16.mxu0 0
    %2722 = vmatpush1.bf16.msra.mxu0 %v769
    %2723 = vmatprep.subr.bf16.mxu0 0
    %2724 = vmatpush1.bf16.msra.mxu0 0
    %2725 = vmatprep.subr.bf16.mxu0 0
    %2726 = vmatpush1.bf16.msra.mxu0 0
    %2727 = vmatprep.subr.bf16.mxu0 0
    %2728 = vmatpush1.bf16.msra.mxu0 0
    %2729 = vmatprep.subr.bf16.mxu0 0
    %2730 = vmatpush1.bf16.msra.mxu0 0
    %2731 = vmatprep.subr.bf16.mxu0 0
    %2732 = vmatpush1.bf16.msra.mxu0 0
    %2733 = vmatprep.mubr.bf16.mxu0 %v2696
    %2734 = vmatmul.mubr.bf16.gmra.mrb[0].mxu0 %v2689
    %v2735 = vpop.f32.mrb[0].mxu0
    %v2736 = vadd.f32 0.0, %v2735
    %v2737 = vpop.f32.mrb[0].mxu0
    %v2738 = vpop.f32.mrb[0].mxu0
    %v2739 = vadd.f32 0.0, %v2738
    %v2740 = vpop.f32.mrb[0].mxu0
    %2741 = vmatprep.mubr.bf16.mxu0 %v2699
    %2742 = vmatmul.mubr.bf16.gmra.mrb[0].mxu0 %v2691
    %v2743 = vpop.f32.mrb[0].mxu0
    %v2744 = vadd.f32 0.0, %v2743
    %v2745 = vpop.f32.mrb[0].mxu0
    %v2746 = vpop.f32.mrb[0].mxu0
    %v2747 = vpop.f32.mrb[0].mxu0
    %2748 = vdwg.mxu0
    %v2749 = vpack.c.bf16 %v2739, %v2736
    %v2750 = vpack.c.bf16 %v2744, %v2744
    %s2751 = scalar_lea.vmem %s6, 208
    %v2752 = vld [vmem:[%s2751] sm:$0xf]
    %v2753 = vld [vmem:[%s2751 + $0x4] sm:$0xf]
    %v2754 = vld [vmem:[%s2751 + $0x8] sm:$0xf]
    %v2755 = vld [vmem:[%s2751 + $0xc] sm:$0xf]
    %v2760 = vunpack.c.l.b16 %v2752
    %v2761 = vunpack.c.l.b16 %v2753
    %v2762 = vunpack.c.l.b16 %v2754
    %v2763 = vunpack.c.l.b16 %v2755
    %v2764 = vpack.c.b16 %v2761, %v2760
    %v2765 = vpack.c.b16 %v2763, %v2762
    %v2769 = vsel %vm449, %v2749, 0
    %v2772 = vsel %vm449, %v2750, 0
    %2774 = vmatprep.subr.bf16.mxu0 0
    %2775 = vmatpush1.bf16.msra.mxu0 %v2764
    %2776 = vmatprep.subr.bf16.mxu0 0
    %2777 = vmatpush1.bf16.msra.mxu0 %v2765
    %2778 = vmatprep.subr.bf16.mxu0 0
    %2779 = vmatpush1.bf16.msra.mxu0 0
    %2780 = vmatprep.subr.bf16.mxu0 0
    %2781 = vmatpush1.bf16.msra.mxu0 0
    %2782 = vmatprep.subr.bf16.mxu0 0
    %2783 = vmatpush1.bf16.msra.mxu0 0
    %2784 = vmatprep.subr.bf16.mxu0 0
    %2785 = vmatpush1.bf16.msra.mxu0 0
    %2786 = vmatprep.subr.bf16.mxu0 0
    %2787 = vmatpush1.bf16.msra.mxu0 0
    %2788 = vmatprep.subr.bf16.mxu0 0
    %2789 = vmatpush1.bf16.msra.mxu0 0
    %2790 = vmatprep.subr.bf16.mxu0 0
    %2791 = vmatpush1.bf16.msra.mxu0 0
    %2792 = vmatprep.subr.bf16.mxu0 0
    %2793 = vmatpush1.bf16.msra.mxu0 0
    %2794 = vmatprep.subr.bf16.mxu0 0
    %2795 = vmatpush1.bf16.msra.mxu0 0
    %2796 = vmatprep.subr.bf16.mxu0 0
    %2797 = vmatpush1.bf16.msra.mxu0 0
    %2798 = vmatprep.subr.bf16.mxu0 0
    %2799 = vmatpush1.bf16.msra.mxu0 0
    %2800 = vmatprep.subr.bf16.mxu0 0
    %2801 = vmatpush1.bf16.msra.mxu0 0
    %2802 = vmatprep.subr.bf16.mxu0 0
    %2803 = vmatpush1.bf16.msra.mxu0 0
    %2804 = vmatprep.subr.bf16.mxu0 0
    %2805 = vmatpush1.bf16.msra.mxu0 0
    %2806 = vmatprep.mubr.bf16.mxu0 0
    %2807 = vmatmul.mubr.bf16.gmra.mrb[0].mxu0 %v2769
    %v2808 = vpop.f32.mrb[0].mxu0
    %v2809 = vadd.f32 0.0, %v2808
    %v2810 = vpop.f32.mrb[0].mxu0
    %v2811 = vpop.f32.mrb[0].mxu0
    %v2812 = vadd.f32 0.0, %v2811
    %v2813 = vpop.f32.mrb[0].mxu0
    %2814 = vmatprep.mubr.bf16.mxu0 0
    %2815 = vmatmul.mubr.bf16.gmra.mrb[0].mxu0 %v2772
    %v2816 = vpop.f32.mrb[0].mxu0
    %v2817 = vadd.f32 0.0, %v2816
    %v2818 = vpop.f32.mrb[0].mxu0
    %v2819 = vpop.f32.mrb[0].mxu0
    %v2820 = vpop.f32.mrb[0].mxu0
    %2821 = vdwg.mxu0
    %v2822 = vadd.f32 %v2673, %v2809
    %v2823 = vadd.f32 %v2674, %v2812
    %v2824 = vadd.f32 %v2675, %v2817
    %s2825 = scalar_lea.vmem %s5, 336
    %v2826 = vld [vmem:[%s2825] sm:$0xff]
    %v2827 = vld [vmem:[%s2825 + $0x8] sm:$0xff]
    %v2828 = vld [vmem:[%s2825 + $0x10] sm:$0x11]
    %v2832 = vunpack.c.l.b16 %v2826
    %v2833 = vunpack.c.h.b16 %v2826
    %v2834 = vunpack.c.l.b16 %v2827
    %v2835 = vunpack.c.h.b16 %v2827
    %v2836 = vunpack.c.l.b16 %v2828
    %v2837 = vunpack.c.h.b16 %v2828
    %v2838 = vpack.c.b16 %v2834, %v2832
    %v2839 = vpack.c.b16 %v2835, %v2833
    %v2840 = vpack.c.b16 %v2836, %v2836
    %v2841 = vpack.c.b16 %v2837, %v2837
    %v2845 = vsel %vm760, %v2839, 0
    %v2848 = vsel %vm760, %v2841, 0
    %2850 = vmatprep.subr.bf16.mxu0 0
    %2851 = vmatpush1.bf16.msra.mxu0 %v731
    %2852 = vmatprep.subr.bf16.mxu0 0
    %2853 = vmatpush1.bf16.msra.mxu0 %v732
    %2854 = vmatprep.subr.bf16.mxu0 0
    %2855 = vmatpush1.bf16.msra.mxu0 %v733
    %2856 = vmatprep.subr.bf16.mxu0 0
    %2857 = vmatpush1.bf16.msra.mxu0 %v734
    %2858 = vmatprep.subr.bf16.mxu0 0
    %2859 = vmatpush1.bf16.msra.mxu0 %v735
    %2860 = vmatprep.subr.bf16.mxu0 0
    %2861 = vmatpush1.bf16.msra.mxu0 %v736
    %2862 = vmatprep.subr.bf16.mxu0 0
    %2863 = vmatpush1.bf16.msra.mxu0 %v737
    %2864 = vmatprep.subr.bf16.mxu0 0
    %2865 = vmatpush1.bf16.msra.mxu0 %v738
    %2866 = vmatprep.subr.bf16.mxu0 0
    %2867 = vmatpush1.bf16.msra.mxu0 %v739
    %2868 = vmatprep.subr.bf16.mxu0 0
    %2869 = vmatpush1.bf16.msra.mxu0 %v740
    %2870 = vmatprep.subr.bf16.mxu0 0
    %2871 = vmatpush1.bf16.msra.mxu0 %v769
    %2872 = vmatprep.subr.bf16.mxu0 0
    %2873 = vmatpush1.bf16.msra.mxu0 0
    %2874 = vmatprep.subr.bf16.mxu0 0
    %2875 = vmatpush1.bf16.msra.mxu0 0
    %2876 = vmatprep.subr.bf16.mxu0 0
    %2877 = vmatpush1.bf16.msra.mxu0 0
    %2878 = vmatprep.subr.bf16.mxu0 0
    %2879 = vmatpush1.bf16.msra.mxu0 0
    %2880 = vmatprep.subr.bf16.mxu0 0
    %2881 = vmatpush1.bf16.msra.mxu0 0
    %2882 = vmatprep.mubr.bf16.mxu0 %v2845
    %2883 = vmatmul.mubr.bf16.gmra.mrb[0].mxu0 %v2838
    %v2884 = vpop.f32.mrb[0].mxu0
    %v2885 = vadd.f32 0.0, %v2884
    %v2886 = vpop.f32.mrb[0].mxu0
    %v2887 = vpop.f32.mrb[0].mxu0
    %v2888 = vadd.f32 0.0, %v2887
    %v2889 = vpop.f32.mrb[0].mxu0
    %2890 = vmatprep.mubr.bf16.mxu0 %v2848
    %2891 = vmatmul.mubr.bf16.gmra.mrb[0].mxu0 %v2840
    %v2892 = vpop.f32.mrb[0].mxu0
    %v2893 = vadd.f32 0.0, %v2892
    %v2894 = vpop.f32.mrb[0].mxu0
    %v2895 = vpop.f32.mrb[0].mxu0
    %v2896 = vpop.f32.mrb[0].mxu0
    %2897 = vdwg.mxu0
    %v2898 = vpack.c.bf16 %v2888, %v2885
    %v2899 = vpack.c.bf16 %v2893, %v2893
    %s2900 = scalar_lea.vmem %s6, 224
    %v2901 = vld [vmem:[%s2900] sm:$0xf]
    %v2902 = vld [vmem:[%s2900 + $0x4] sm:$0xf]
    %v2903 = vld [vmem:[%s2900 + $0x8] sm:$0xf]
    %v2904 = vld [vmem:[%s2900 + $0xc] sm:$0xf]
    %v2909 = vunpack.c.l.b16 %v2901
    %v2910 = vunpack.c.l.b16 %v2902
    %v2911 = vunpack.c.l.b16 %v2903
    %v2912 = vunpack.c.l.b16 %v2904
    %v2913 = vpack.c.b16 %v2910, %v2909
    %v2914 = vpack.c.b16 %v2912, %v2911
    %v2918 = vsel %vm449, %v2898, 0
    %v2921 = vsel %vm449, %v2899, 0
    %2923 = vmatprep.subr.bf16.mxu0 0
    %2924 = vmatpush1.bf16.msra.mxu0 %v2913
    %2925 = vmatprep.subr.bf16.mxu0 0
    %2926 = vmatpush1.bf16.msra.mxu0 %v2914
    %2927 = vmatprep.subr.bf16.mxu0 0
    %2928 = vmatpush1.bf16.msra.mxu0 0
    %2929 = vmatprep.subr.bf16.mxu0 0
    %2930 = vmatpush1.bf16.msra.mxu0 0
    %2931 = vmatprep.subr.bf16.mxu0 0
    %2932 = vmatpush1.bf16.msra.mxu0 0
    %2933 = vmatprep.subr.bf16.mxu0 0
    %2934 = vmatpush1.bf16.msra.mxu0 0
    %2935 = vmatprep.subr.bf16.mxu0 0
    %2936 = vmatpush1.bf16.msra.mxu0 0
    %2937 = vmatprep.subr.bf16.mxu0 0
    %2938 = vmatpush1.bf16.msra.mxu0 0
    %2939 = vmatprep.subr.bf16.mxu0 0
    %2940 = vmatpush1.bf16.msra.mxu0 0
    %2941 = vmatprep.subr.bf16.mxu0 0
    %2942 = vmatpush1.bf16.msra.mxu0 0
    %2943 = vmatprep.subr.bf16.mxu0 0
    %2944 = vmatpush1.bf16.msra.mxu0 0
    %2945 = vmatprep.subr.bf16.mxu0 0
    %2946 = vmatpush1.bf16.msra.mxu0 0
    %2947 = vmatprep.subr.bf16.mxu0 0
    %2948 = vmatpush1.bf16.msra.mxu0 0
    %2949 = vmatprep.subr.bf16.mxu0 0
    %2950 = vmatpush1.bf16.msra.mxu0 0
    %2951 = vmatprep.subr.bf16.mxu0 0
    %2952 = vmatpush1.bf16.msra.mxu0 0
    %2953 = vmatprep.subr.bf16.mxu0 0
    %2954 = vmatpush1.bf16.msra.mxu0 0
    %2955 = vmatprep.mubr.bf16.mxu0 0
    %2956 = vmatmul.mubr.bf16.gmra.mrb[0].mxu0 %v2918
    %v2957 = vpop.f32.mrb[0].mxu0
    %v2958 = vadd.f32 0.0, %v2957
    %v2959 = vpop.f32.mrb[0].mxu0
    %v2960 = vpop.f32.mrb[0].mxu0
    %v2961 = vadd.f32 0.0, %v2960
    %v2962 = vpop.f32.mrb[0].mxu0
    %2963 = vmatprep.mubr.bf16.mxu0 0
    %2964 = vmatmul.mubr.bf16.gmra.mrb[0].mxu0 %v2921
    %v2965 = vpop.f32.mrb[0].mxu0
    %v2966 = vadd.f32 0.0, %v2965
    %v2967 = vpop.f32.mrb[0].mxu0
    %v2968 = vpop.f32.mrb[0].mxu0
    %v2969 = vpop.f32.mrb[0].mxu0
    %2970 = vdwg.mxu0
    %v2971 = vadd.f32 %v2822, %v2958
    %v2972 = vadd.f32 %v2823, %v2961
    %v2973 = vadd.f32 %v2824, %v2966
    %s2974 = scalar_lea.vmem %s5, 360
    %v2975 = vld [vmem:[%s2974] sm:$0xff]
    %v2976 = vld [vmem:[%s2974 + $0x8] sm:$0xff]
    %v2977 = vld [vmem:[%s2974 + $0x10] sm:$0x11]
    %v2981 = vunpack.c.l.b16 %v2975
    %v2982 = vunpack.c.h.b16 %v2975
    %v2983 = vunpack.c.l.b16 %v2976
    %v2984 = vunpack.c.h.b16 %v2976
    %v2985 = vunpack.c.l.b16 %v2977
    %v2986 = vunpack.c.h.b16 %v2977
    %v2987 = vpack.c.b16 %v2983, %v2981
    %v2988 = vpack.c.b16 %v2984, %v2982
    %v2989 = vpack.c.b16 %v2985, %v2985
    %v2990 = vpack.c.b16 %v2986, %v2986
    %v2994 = vsel %vm760, %v2988, 0
    %v2997 = vsel %vm760, %v2990, 0
    %2999 = vmatprep.subr.bf16.mxu0 0
    %3000 = vmatpush1.bf16.msra.mxu0 %v731
    %3001 = vmatprep.subr.bf16.mxu0 0
    %3002 = vmatpush1.bf16.msra.mxu0 %v732
    %3003 = vmatprep.subr.bf16.mxu0 0
    %3004 = vmatpush1.bf16.msra.mxu0 %v733
    %3005 = vmatprep.subr.bf16.mxu0 0
    %3006 = vmatpush1.bf16.msra.mxu0 %v734
    %3007 = vmatprep.subr.bf16.mxu0 0
    %3008 = vmatpush1.bf16.msra.mxu0 %v735
    %3009 = vmatprep.subr.bf16.mxu0 0
    %3010 = vmatpush1.bf16.msra.mxu0 %v736
    %3011 = vmatprep.subr.bf16.mxu0 0
    %3012 = vmatpush1.bf16.msra.mxu0 %v737
    %3013 = vmatprep.subr.bf16.mxu0 0
    %3014 = vmatpush1.bf16.msra.mxu0 %v738
    %3015 = vmatprep.subr.bf16.mxu0 0
    %3016 = vmatpush1.bf16.msra.mxu0 %v739
    %3017 = vmatprep.subr.bf16.mxu0 0
    %3018 = vmatpush1.bf16.msra.mxu0 %v740
    %3019 = vmatprep.subr.bf16.mxu0 0
    %3020 = vmatpush1.bf16.msra.mxu0 %v769
    %3021 = vmatprep.subr.bf16.mxu0 0
    %3022 = vmatpush1.bf16.msra.mxu0 0
    %3023 = vmatprep.subr.bf16.mxu0 0
    %3024 = vmatpush1.bf16.msra.mxu0 0
    %3025 = vmatprep.subr.bf16.mxu0 0
    %3026 = vmatpush1.bf16.msra.mxu0 0
    %3027 = vmatprep.subr.bf16.mxu0 0
    %3028 = vmatpush1.bf16.msra.mxu0 0
    %3029 = vmatprep.subr.bf16.mxu0 0
    %3030 = vmatpush1.bf16.msra.mxu0 0
    %3031 = vmatprep.mubr.bf16.mxu0 %v2994
    %3032 = vmatmul.mubr.bf16.gmra.mrb[0].mxu0 %v2987
    %v3033 = vpop.f32.mrb[0].mxu0
    %v3034 = vadd.f32 0.0, %v3033
    %v3035 = vpop.f32.mrb[0].mxu0
    %v3036 = vpop.f32.mrb[0].mxu0
    %v3037 = vadd.f32 0.0, %v3036
    %v3038 = vpop.f32.mrb[0].mxu0
    %3039 = vmatprep.mubr.bf16.mxu0 %v2997
    %3040 = vmatmul.mubr.bf16.gmra.mrb[0].mxu0 %v2989
    %v3041 = vpop.f32.mrb[0].mxu0
    %v3042 = vadd.f32 0.0, %v3041
    %v3043 = vpop.f32.mrb[0].mxu0
    %v3044 = vpop.f32.mrb[0].mxu0
    %v3045 = vpop.f32.mrb[0].mxu0
    %3046 = vdwg.mxu0
    %v3047 = vpack.c.bf16 %v3037, %v3034
    %v3048 = vpack.c.bf16 %v3042, %v3042
    %s3049 = scalar_lea.vmem %s6, 240
    %v3050 = vld [vmem:[%s3049] sm:$0xf]
    %v3051 = vld [vmem:[%s3049 + $0x4] sm:$0xf]
    %v3052 = vld [vmem:[%s3049 + $0x8] sm:$0xf]
    %v3053 = vld [vmem:[%s3049 + $0xc] sm:$0xf]
    %v3058 = vunpack.c.l.b16 %v3050
    %v3059 = vunpack.c.l.b16 %v3051
    %v3060 = vunpack.c.l.b16 %v3052
    %v3061 = vunpack.c.l.b16 %v3053
    %v3062 = vpack.c.b16 %v3059, %v3058
    %v3063 = vpack.c.b16 %v3061, %v3060
    %v3067 = vsel %vm449, %v3047, 0
    %v3070 = vsel %vm449, %v3048, 0
    %3072 = vmatprep.subr.bf16.mxu0 0
    %3073 = vmatpush1.bf16.msra.mxu0 %v3062
    %3074 = vmatprep.subr.bf16.mxu0 0
    %3075 = vmatpush1.bf16.msra.mxu0 %v3063
    %3076 = vmatprep.subr.bf16.mxu0 0
    %3077 = vmatpush1.bf16.msra.mxu0 0
    %3078 = vmatprep.subr.bf16.mxu0 0
    %3079 = vmatpush1.bf16.msra.mxu0 0
    %3080 = vmatprep.subr.bf16.mxu0 0
    %3081 = vmatpush1.bf16.msra.mxu0 0
    %3082 = vmatprep.subr.bf16.mxu0 0
    %3083 = vmatpush1.bf16.msra.mxu0 0
    %3084 = vmatprep.subr.bf16.mxu0 0
    %3085 = vmatpush1.bf16.msra.mxu0 0
    %3086 = vmatprep.subr.bf16.mxu0 0
    %3087 = vmatpush1.bf16.msra.mxu0 0
    %3088 = vmatprep.subr.bf16.mxu0 0
    %3089 = vmatpush1.bf16.msra.mxu0 0
    %3090 = vmatprep.subr.bf16.mxu0 0
    %3091 = vmatpush1.bf16.msra.mxu0 0
    %3092 = vmatprep.subr.bf16.mxu0 0
    %3093 = vmatpush1.bf16.msra.mxu0 0
    %3094 = vmatprep.subr.bf16.mxu0 0
    %3095 = vmatpush1.bf16.msra.mxu0 0
    %3096 = vmatprep.subr.bf16.mxu0 0
    %3097 = vmatpush1.bf16.msra.mxu0 0
    %3098 = vmatprep.subr.bf16.mxu0 0
    %3099 = vmatpush1.bf16.msra.mxu0 0
    %3100 = vmatprep.subr.bf16.mxu0 0
    %3101 = vmatpush1.bf16.msra.mxu0 0
    %3102 = vmatprep.subr.bf16.mxu0 0
    %3103 = vmatpush1.bf16.msra.mxu0 0
    %3104 = vmatprep.mubr.bf16.mxu0 0
    %3105 = vmatmul.mubr.bf16.gmra.mrb[0].mxu0 %v3067
    %v3106 = vpop.f32.mrb[0].mxu0
    %v3107 = vadd.f32 0.0, %v3106
    %v3108 = vpop.f32.mrb[0].mxu0
    %v3109 = vpop.f32.mrb[0].mxu0
    %v3110 = vadd.f32 0.0, %v3109
    %v3111 = vpop.f32.mrb[0].mxu0
    %3112 = vmatprep.mubr.bf16.mxu0 0
    %3113 = vmatmul.mubr.bf16.gmra.mrb[0].mxu0 %v3070
    %v3114 = vpop.f32.mrb[0].mxu0
    %v3115 = vadd.f32 0.0, %v3114
    %v3116 = vpop.f32.mrb[0].mxu0
    %v3117 = vpop.f32.mrb[0].mxu0
    %v3118 = vpop.f32.mrb[0].mxu0
    %3119 = vdwg.mxu0
    %v3120 = vadd.f32 %v2971, %v3107
    %v3121 = vadd.f32 %v2972, %v3110
    %v3122 = vadd.f32 %v2973, %v3115
    %v3123 = vld [vmem:[%s7] sm:$0x1]
    %v3125 = vlaneseq
    %v3126 = vshrl.u32 %v3125, 7
    %v3127 = vsub.s32 0, %v3126
    %v3128 = vrot.slane %v3123, %v3127
    %v3130 = vadd.f32 %v3120, %v3128
    %v3131 = vadd.f32 %v3121, %v3128
    %v3132 = vadd.f32 %v3122, %v3128
    %v3133 = vld [vmem:[%s8] sm:$0x1]
    %v3134 = vld [vmem:[%s9] sm:$0x1]
    %vm3135 = vcmask 523264
    %v3136 = vsel %vm3135, %v3130, 0.0
    %v3137 = vsel %vm3135, %v3131, 0.0
    %v3138 = vadd.f32 %v3136, %v3137
    %vm3139 = vcmask 517120
    %v3140 = vsel %vm3139, %v3132, 0.0
    %v3141 = vadd.f32 %v3138, %v3140
    %v3142 = vrot.slane %v3141, 4
    %v3143 = vadd.f32 %v3141, %v3142
    %v3144 = vrot.slane %v3143, 2
    %v3145 = vadd.f32 %v3143, %v3144
    %v3146 = vrot.slane %v3145, 1
    %v3147 = vadd.f32 %v3145, %v3146
    %v3148 = vmul.f32 %v3130, %v3130
    %v3149 = vmul.f32 %v3131, %v3131
    %v3150 = vmul.f32 %v3132, %v3132
    %v3151 = vsel %vm3135, %v3148, 0.0
    %v3152 = vsel %vm3135, %v3149, 0.0
    %v3153 = vadd.f32 %v3151, %v3152
    %v3154 = vsel %vm3139, %v3150, 0.0
    %v3155 = vadd.f32 %v3153, %v3154
    %v3156 = vrot.slane %v3155, 4
    %v3157 = vadd.f32 %v3155, %v3156
    %v3158 = vrot.slane %v3157, 2
    %v3159 = vadd.f32 %v3157, %v3158
    %v3160 = vrot.slane %v3159, 1
    %v3161 = vadd.f32 %v3159, %v3160
    %v3162 = vmul.f32 %v3147, 0.055555556
    %v3163 = vmul.f32 %v3161, 0.055555556
    %v3164 = vmul.f32 %v3162, %v3162
    %v3165 = vsub.f32 %v3163, %v3164
    %v3166 = vsub.f32 %v3130, %v3162
    %v3167 = vsub.f32 %v3131, %v3162
    %v3168 = vsub.f32 %v3132, %v3162
    %v3169 = vadd.f32 %v3165, 1e-05
    %v3170 = vrsqrt.pop %v3169
    %v3171 = vmul.f32 %v3166, %v3170
    %v3172 = vmul.f32 %v3167, %v3170
    %v3173 = vmul.f32 %v3168, %v3170
    %v3175 = vlaneseq
    %v3176 = vshrl.u32 %v3175, 7
    %v3177 = vsub.s32 0, %v3176
    %v3178 = vrot.slane %v3133, %v3177
    %v3180 = vmul.f32 %v3171, %v3178
    %v3181 = vmul.f32 %v3172, %v3178
    %v3182 = vmul.f32 %v3173, %v3178
    %v3184 = vlaneseq
    %v3185 = vshrl.u32 %v3184, 7
    %v3186 = vsub.s32 0, %v3185
    %v3187 = vrot.slane %v3134, %v3186
    %v3189 = vadd.f32 %v3180, %v3187
    %v3190 = vadd.f32 %v3181, %v3187
    %v3191 = vadd.f32 %v3182, %v3187
    %vm3192 = vcmp.ge.f32.partialorder %v3189, 0.0
    %vm3193 = vcmp.ge.f32.partialorder %v3190, 0.0
    %vm3194 = vcmp.ge.f32.partialorder %v3191, 0.0
    %v3195 = vmul.f32 %v3189, 0.01
    %v3196 = vmul.f32 %v3190, 0.01
    %v3197 = vmul.f32 %v3191, 0.01
    %v3198 = vsel %vm3192, %v3189, %v3195
    %v3199 = vsel %vm3193, %v3190, %v3196
    %v3200 = vsel %vm3194, %v3191, %v3197
    %v3201 = vpack.c.bf16 %v3199, %v3198
    %v3202 = vpack.c.bf16 %v3200, %v3200
    %v3203 = vld [vmem:[%s10] sm:$0x1]
    %vm3204 = vcmask 146432
    %v3206 = vsel %vm3204, %v3203, 0
    %v3209 = vsel %vm767, %v3202, 0
    %3211 = vmatprep.subr.bf16.mxu0 0
    %3212 = vmatpush1.bf16.msra.mxu0 %v3201
    %3213 = vmatprep.subr.bf16.mxu0 0
    %3214 = vmatpush1.bf16.msra.mxu0 %v3209
    %3215 = vmatprep.subr.bf16.mxu0 0
    %3216 = vmatpush1.bf16.msra.mxu0 0
    %3217 = vmatprep.subr.bf16.mxu0 0
    %3218 = vmatpush1.bf16.msra.mxu0 0
    %3219 = vmatprep.subr.bf16.mxu0 0
    %3220 = vmatpush1.bf16.msra.mxu0 0
    %3221 = vmatprep.subr.bf16.mxu0 0
    %3222 = vmatpush1.bf16.msra.mxu0 0
    %3223 = vmatprep.subr.bf16.mxu0 0
    %3224 = vmatpush1.bf16.msra.mxu0 0
    %3225 = vmatprep.subr.bf16.mxu0 0
    %3226 = vmatpush1.bf16.msra.mxu0 0
    %3227 = vmatprep.subr.bf16.mxu0 0
    %3228 = vmatpush1.bf16.msra.mxu0 0
    %3229 = vmatprep.subr.bf16.mxu0 0
    %3230 = vmatpush1.bf16.msra.mxu0 0
    %3231 = vmatprep.subr.bf16.mxu0 0
    %3232 = vmatpush1.bf16.msra.mxu0 0
    %3233 = vmatprep.subr.bf16.mxu0 0
    %3234 = vmatpush1.bf16.msra.mxu0 0
    %3235 = vmatprep.subr.bf16.mxu0 0
    %3236 = vmatpush1.bf16.msra.mxu0 0
    %3237 = vmatprep.subr.bf16.mxu0 0
    %3238 = vmatpush1.bf16.msra.mxu0 0
    %3239 = vmatprep.subr.bf16.mxu0 0
    %3240 = vmatpush1.bf16.msra.mxu0 0
    %3241 = vmatprep.subr.bf16.mxu0 0
    %3242 = vmatpush1.bf16.msra.mxu0 0
    %3243 = vmatprep.mubr.bf16.mxu0 0
    %3244 = vmatmul.mubr.bf16.gmra.mrb[0].mxu0 %v3206
    %v3245 = vpop.f32.mrb[0].mxu0
    %v3246 = vadd.f32 0.0, %v3245
    %v3247 = vpop.f32.mrb[0].mxu0
    %v3248 = vpop.f32.mrb[0].mxu0
    %v3249 = vpop.f32.mrb[0].mxu0
    %3250 = vdwg.mxu0
    %v3251 = vpack.c.bf16 %v3246, %v3246
    %v3252 = vld [vmem:[%s11] sm:$0xf]
    %v3253 = vld [vmem:[%s11 + $0x4] sm:$0xf]
    %v3254 = vld [vmem:[%s11 + $0x8] sm:$0xf]
    %v3255 = vld [vmem:[%s11 + $0xc] sm:$0xf]
    %v3256 = vld [vmem:[%s11 + $0x10] sm:$0xf]
    %v3257 = vld [vmem:[%s11 + $0x14] sm:$0xf]
    %v3258 = vld [vmem:[%s11 + $0x18] sm:$0xf]
    %v3259 = vld [vmem:[%s11 + $0x1c] sm:$0xf]
    %s3260 = scalar_lea.vmem %s10, 1
    %v3261 = vld [vmem:[%s3260] sm:$0x1]
    %v3263 = vsel %vm3204, %v3261, 0
    %3265 = vmatprep.subr.bf16.mxu0 0
    %3266 = vmatpush1.bf16.msra.mxu0 %v3201
    %3267 = vmatprep.subr.bf16.mxu0 0
    %3268 = vmatpush1.bf16.msra.mxu0 %v3209
    %3269 = vmatprep.subr.bf16.mxu0 0
    %3270 = vmatpush1.bf16.msra.mxu0 0
    %3271 = vmatprep.subr.bf16.mxu0 0
    %3272 = vmatpush1.bf16.msra.mxu0 0
    %3273 = vmatprep.subr.bf16.mxu0 0
    %3274 = vmatpush1.bf16.msra.mxu0 0
    %3275 = vmatprep.subr.bf16.mxu0 0
    %3276 = vmatpush1.bf16.msra.mxu0 0
    %3277 = vmatprep.subr.bf16.mxu0 0
    %3278 = vmatpush1.bf16.msra.mxu0 0
    %3279 = vmatprep.subr.bf16.mxu0 0
    %3280 = vmatpush1.bf16.msra.mxu0 0
    %3281 = vmatprep.subr.bf16.mxu0 0
    %3282 = vmatpush1.bf16.msra.mxu0 0
    %3283 = vmatprep.subr.bf16.mxu0 0
    %3284 = vmatpush1.bf16.msra.mxu0 0
    %3285 = vmatprep.subr.bf16.mxu0 0
    %3286 = vmatpush1.bf16.msra.mxu0 0
    %3287 = vmatprep.subr.bf16.mxu0 0
    %3288 = vmatpush1.bf16.msra.mxu0 0
    %3289 = vmatprep.subr.bf16.mxu0 0
    %3290 = vmatpush1.bf16.msra.mxu0 0
    %3291 = vmatprep.subr.bf16.mxu0 0
    %3292 = vmatpush1.bf16.msra.mxu0 0
    %3293 = vmatprep.subr.bf16.mxu0 0
    %3294 = vmatpush1.bf16.msra.mxu0 0
    %3295 = vmatprep.subr.bf16.mxu0 0
    %3296 = vmatpush1.bf16.msra.mxu0 0
    %3297 = vmatprep.mubr.bf16.mxu0 0
    %3298 = vmatmul.mubr.bf16.gmra.mrb[0].mxu0 %v3263
    %v3299 = vpop.f32.mrb[0].mxu0
    %v3300 = vadd.f32 0.0, %v3299
    %v3301 = vpop.f32.mrb[0].mxu0
    %v3302 = vpop.f32.mrb[0].mxu0
    %v3303 = vpop.f32.mrb[0].mxu0
    %3304 = vdwg.mxu0
    %v3305 = vpack.c.bf16 %v3300, %v3300
    %s3306 = scalar_lea.vmem %s11, 32
    %v3307 = vld [vmem:[%s3306] sm:$0xf]
    %v3308 = vld [vmem:[%s3306 + $0x4] sm:$0xf]
    %v3309 = vld [vmem:[%s3306 + $0x8] sm:$0xf]
    %v3310 = vld [vmem:[%s3306 + $0xc] sm:$0xf]
    %v3311 = vld [vmem:[%s3306 + $0x10] sm:$0xf]
    %v3312 = vld [vmem:[%s3306 + $0x14] sm:$0xf]
    %v3313 = vld [vmem:[%s3306 + $0x18] sm:$0xf]
    %v3314 = vld [vmem:[%s3306 + $0x1c] sm:$0xf]
    %v3323 = vunpack.c.l.b16 %v3307
    %v3324 = vunpack.c.l.b16 %v3308
    %v3325 = vunpack.c.l.b16 %v3309
    %v3326 = vunpack.c.l.b16 %v3310
    %v3327 = vunpack.c.l.b16 %v3311
    %v3328 = vunpack.c.l.b16 %v3312
    %v3329 = vunpack.c.l.b16 %v3313
    %v3330 = vunpack.c.l.b16 %v3314
    %v3331 = vpack.c.b16 %v3324, %v3323
    %v3332 = vpack.c.b16 %v3326, %v3325
    %v3333 = vpack.c.b16 %v3328, %v3327
    %v3334 = vpack.c.b16 %v3330, %v3329
    %v3340 = vsel %vm3135, %v3305, 0
    %3342 = vmatprep.subr.bf16.mxu0 0
    %3343 = vmatpush1.bf16.msra.mxu0 %v3331
    %3344 = vmatprep.subr.bf16.mxu0 0
    %3345 = vmatpush1.bf16.msra.mxu0 %v3332
    %3346 = vmatprep.subr.bf16.mxu0 0
    %3347 = vmatpush1.bf16.msra.mxu0 %v3333
    %3348 = vmatprep.subr.bf16.mxu0 0
    %3349 = vmatpush1.bf16.msra.mxu0 %v3334
    %3350 = vmatprep.subr.bf16.mxu0 0
    %3351 = vmatpush1.bf16.msra.mxu0 0
    %3352 = vmatprep.subr.bf16.mxu0 0
    %3353 = vmatpush1.bf16.msra.mxu0 0
    %3354 = vmatprep.subr.bf16.mxu0 0
    %3355 = vmatpush1.bf16.msra.mxu0 0
    %3356 = vmatprep.subr.bf16.mxu0 0
    %3357 = vmatpush1.bf16.msra.mxu0 0
    %3358 = vmatprep.subr.bf16.mxu0 0
    %3359 = vmatpush1.bf16.msra.mxu0 0
    %3360 = vmatprep.subr.bf16.mxu0 0
    %3361 = vmatpush1.bf16.msra.mxu0 0
    %3362 = vmatprep.subr.bf16.mxu0 0
    %3363 = vmatpush1.bf16.msra.mxu0 0
    %3364 = vmatprep.subr.bf16.mxu0 0
    %3365 = vmatpush1.bf16.msra.mxu0 0
    %3366 = vmatprep.subr.bf16.mxu0 0
    %3367 = vmatpush1.bf16.msra.mxu0 0
    %3368 = vmatprep.subr.bf16.mxu0 0
    %3369 = vmatpush1.bf16.msra.mxu0 0
    %3370 = vmatprep.subr.bf16.mxu0 0
    %3371 = vmatpush1.bf16.msra.mxu0 0
    %3372 = vmatprep.subr.bf16.mxu0 0
    %3373 = vmatpush1.bf16.msra.mxu0 0
    %3374 = vmatprep.mubr.bf16.mxu0 0
    %3375 = vmatmul.mubr.bf16.gmra.mrb[0].mxu0 %v3340
    %v3376 = vpop.f32.mrb[0].mxu0
    %v3377 = vadd.f32 0.0, %v3376
    %v3378 = vpop.f32.mrb[0].mxu0
    %v3379 = vpop.f32.mrb[0].mxu0
    %v3380 = vpop.f32.mrb[0].mxu0
    %3381 = vdwg.mxu0
    %v3390 = vunpack.c.l.b16 %v3252
    %v3391 = vunpack.c.l.b16 %v3253
    %v3392 = vunpack.c.l.b16 %v3254
    %v3393 = vunpack.c.l.b16 %v3255
    %v3394 = vunpack.c.l.b16 %v3256
    %v3395 = vunpack.c.l.b16 %v3257
    %v3396 = vunpack.c.l.b16 %v3258
    %v3397 = vunpack.c.l.b16 %v3259
    %v3398 = vpack.c.b16 %v3391, %v3390
    %v3399 = vpack.c.b16 %v3393, %v3392
    %v3400 = vpack.c.b16 %v3395, %v3394
    %v3401 = vpack.c.b16 %v3397, %v3396
    %v3407 = vsel %vm3135, %v3251, 0
    %3409 = vmatprep.subr.bf16.mxu0 0
    %3410 = vmatpush1.bf16.msra.mxu0 %v3398
    %3411 = vmatprep.subr.bf16.mxu0 0
    %3412 = vmatpush1.bf16.msra.mxu0 %v3399
    %3413 = vmatprep.subr.bf16.mxu0 0
    %3414 = vmatpush1.bf16.msra.mxu0 %v3400
    %3415 = vmatprep.subr.bf16.mxu0 0
    %3416 = vmatpush1.bf16.msra.mxu0 %v3401
    %3417 = vmatprep.subr.bf16.mxu0 0
    %3418 = vmatpush1.bf16.msra.mxu0 0
    %3419 = vmatprep.subr.bf16.mxu0 0
    %3420 = vmatpush1.bf16.msra.mxu0 0
    %3421 = vmatprep.subr.bf16.mxu0 0
    %3422 = vmatpush1.bf16.msra.mxu0 0
    %3423 = vmatprep.subr.bf16.mxu0 0
    %3424 = vmatpush1.bf16.msra.mxu0 0
    %3425 = vmatprep.subr.bf16.mxu0 0
    %3426 = vmatpush1.bf16.msra.mxu0 0
    %3427 = vmatprep.subr.bf16.mxu0 0
    %3428 = vmatpush1.bf16.msra.mxu0 0
    %3429 = vmatprep.subr.bf16.mxu0 0
    %3430 = vmatpush1.bf16.msra.mxu0 0
    %3431 = vmatprep.subr.bf16.mxu0 0
    %3432 = vmatpush1.bf16.msra.mxu0 0
    %3433 = vmatprep.subr.bf16.mxu0 0
    %3434 = vmatpush1.bf16.msra.mxu0 0
    %3435 = vmatprep.subr.bf16.mxu0 0
    %3436 = vmatpush1.bf16.msra.mxu0 0
    %3437 = vmatprep.subr.bf16.mxu0 0
    %3438 = vmatpush1.bf16.msra.mxu0 0
    %3439 = vmatprep.subr.bf16.mxu0 0
    %3440 = vmatpush1.bf16.msra.mxu0 0
    %3441 = vmatprep.mubr.bf16.mxu0 0
    %3442 = vmatmul.mubr.bf16.gmra.mrb[0].mxu0 %v3407
    %v3443 = vpop.f32.mrb[0].mxu0
    %v3444 = vadd.f32 %v3377, %v3443
    %v3445 = vpop.f32.mrb[0].mxu0
    %v3446 = vpop.f32.mrb[0].mxu0
    %v3447 = vpop.f32.mrb[0].mxu0
    %3448 = vdwg.mxu0
    %s3449 = scalar_lea.vmem %s10, 2
    %v3450 = vld [vmem:[%s3449] sm:$0x1]
    %v3452 = vsel %vm3204, %v3450, 0
    %3454 = vmatprep.subr.bf16.mxu0 0
    %3455 = vmatpush1.bf16.msra.mxu0 %v3201
    %3456 = vmatprep.subr.bf16.mxu0 0
    %3457 = vmatpush1.bf16.msra.mxu0 %v3209
    %3458 = vmatprep.subr.bf16.mxu0 0
    %3459 = vmatpush1.bf16.msra.mxu0 0
    %3460 = vmatprep.subr.bf16.mxu0 0
    %3461 = vmatpush1.bf16.msra.mxu0 0
    %3462 = vmatprep.subr.bf16.mxu0 0
    %3463 = vmatpush1.bf16.msra.mxu0 0
    %3464 = vmatprep.subr.bf16.mxu0 0
    %3465 = vmatpush1.bf16.msra.mxu0 0
    %3466 = vmatprep.subr.bf16.mxu0 0
    %3467 = vmatpush1.bf16.msra.mxu0 0
    %3468 = vmatprep.subr.bf16.mxu0 0
    %3469 = vmatpush1.bf16.msra.mxu0 0
    %3470 = vmatprep.subr.bf16.mxu0 0
    %3471 = vmatpush1.bf16.msra.mxu0 0
    %3472 = vmatprep.subr.bf16.mxu0 0
    %3473 = vmatpush1.bf16.msra.mxu0 0
    %3474 = vmatprep.subr.bf16.mxu0 0
    %3475 = vmatpush1.bf16.msra.mxu0 0
    %3476 = vmatprep.subr.bf16.mxu0 0
    %3477 = vmatpush1.bf16.msra.mxu0 0
    %3478 = vmatprep.subr.bf16.mxu0 0
    %3479 = vmatpush1.bf16.msra.mxu0 0
    %3480 = vmatprep.subr.bf16.mxu0 0
    %3481 = vmatpush1.bf16.msra.mxu0 0
    %3482 = vmatprep.subr.bf16.mxu0 0
    %3483 = vmatpush1.bf16.msra.mxu0 0
    %3484 = vmatprep.subr.bf16.mxu0 0
    %3485 = vmatpush1.bf16.msra.mxu0 0
    %3486 = vmatprep.mubr.bf16.mxu0 0
    %3487 = vmatmul.mubr.bf16.gmra.mrb[0].mxu0 %v3452
    %v3488 = vpop.f32.mrb[0].mxu0
    %v3489 = vadd.f32 0.0, %v3488
    %v3490 = vpop.f32.mrb[0].mxu0
    %v3491 = vpop.f32.mrb[0].mxu0
    %v3492 = vpop.f32.mrb[0].mxu0
    %3493 = vdwg.mxu0
    %v3494 = vpack.c.bf16 %v3489, %v3489
    %s3495 = scalar_lea.vmem %s11, 64
    %v3496 = vld [vmem:[%s3495] sm:$0xf]
    %v3497 = vld [vmem:[%s3495 + $0x4] sm:$0xf]
    %v3498 = vld [vmem:[%s3495 + $0x8] sm:$0xf]
    %v3499 = vld [vmem:[%s3495 + $0xc] sm:$0xf]
    %v3500 = vld [vmem:[%s3495 + $0x10] sm:$0xf]
    %v3501 = vld [vmem:[%s3495 + $0x14] sm:$0xf]
    %v3502 = vld [vmem:[%s3495 + $0x18] sm:$0xf]
    %v3503 = vld [vmem:[%s3495 + $0x1c] sm:$0xf]
    %v3512 = vunpack.c.l.b16 %v3496
    %v3513 = vunpack.c.l.b16 %v3497
    %v3514 = vunpack.c.l.b16 %v3498
    %v3515 = vunpack.c.l.b16 %v3499
    %v3516 = vunpack.c.l.b16 %v3500
    %v3517 = vunpack.c.l.b16 %v3501
    %v3518 = vunpack.c.l.b16 %v3502
    %v3519 = vunpack.c.l.b16 %v3503
    %v3520 = vpack.c.b16 %v3513, %v3512
    %v3521 = vpack.c.b16 %v3515, %v3514
    %v3522 = vpack.c.b16 %v3517, %v3516
    %v3523 = vpack.c.b16 %v3519, %v3518
    %v3529 = vsel %vm3135, %v3494, 0
    %3531 = vmatprep.subr.bf16.mxu0 0
    %3532 = vmatpush1.bf16.msra.mxu0 %v3520
    %3533 = vmatprep.subr.bf16.mxu0 0
    %3534 = vmatpush1.bf16.msra.mxu0 %v3521
    %3535 = vmatprep.subr.bf16.mxu0 0
    %3536 = vmatpush1.bf16.msra.mxu0 %v3522
    %3537 = vmatprep.subr.bf16.mxu0 0
    %3538 = vmatpush1.bf16.msra.mxu0 %v3523
    %3539 = vmatprep.subr.bf16.mxu0 0
    %3540 = vmatpush1.bf16.msra.mxu0 0
    %3541 = vmatprep.subr.bf16.mxu0 0
    %3542 = vmatpush1.bf16.msra.mxu0 0
    %3543 = vmatprep.subr.bf16.mxu0 0
    %3544 = vmatpush1.bf16.msra.mxu0 0
    %3545 = vmatprep.subr.bf16.mxu0 0
    %3546 = vmatpush1.bf16.msra.mxu0 0
    %3547 = vmatprep.subr.bf16.mxu0 0
    %3548 = vmatpush1.bf16.msra.mxu0 0
    %3549 = vmatprep.subr.bf16.mxu0 0
    %3550 = vmatpush1.bf16.msra.mxu0 0
    %3551 = vmatprep.subr.bf16.mxu0 0
    %3552 = vmatpush1.bf16.msra.mxu0 0
    %3553 = vmatprep.subr.bf16.mxu0 0
    %3554 = vmatpush1.bf16.msra.mxu0 0
    %3555 = vmatprep.subr.bf16.mxu0 0
    %3556 = vmatpush1.bf16.msra.mxu0 0
    %3557 = vmatprep.subr.bf16.mxu0 0
    %3558 = vmatpush1.bf16.msra.mxu0 0
    %3559 = vmatprep.subr.bf16.mxu0 0
    %3560 = vmatpush1.bf16.msra.mxu0 0
    %3561 = vmatprep.subr.bf16.mxu0 0
    %3562 = vmatpush1.bf16.msra.mxu0 0
    %3563 = vmatprep.mubr.bf16.mxu0 0
    %3564 = vmatmul.mubr.bf16.gmra.mrb[0].mxu0 %v3529
    %v3565 = vpop.f32.mrb[0].mxu0
    %v3566 = vadd.f32 0.0, %v3565
    %v3567 = vpop.f32.mrb[0].mxu0
    %v3568 = vpop.f32.mrb[0].mxu0
    %v3569 = vpop.f32.mrb[0].mxu0
    %3570 = vdwg.mxu0
    %v3571 = vadd.f32 %v3444, %v3566
    %s3572 = scalar_lea.vmem %s10, 3
    %v3573 = vld [vmem:[%s3572] sm:$0x1]
    %v3575 = vsel %vm3204, %v3573, 0
    %3577 = vmatprep.subr.bf16.mxu0 0
    %3578 = vmatpush1.bf16.msra.mxu0 %v3201
    %3579 = vmatprep.subr.bf16.mxu0 0
    %3580 = vmatpush1.bf16.msra.mxu0 %v3209
    %3581 = vmatprep.subr.bf16.mxu0 0
    %3582 = vmatpush1.bf16.msra.mxu0 0
    %3583 = vmatprep.subr.bf16.mxu0 0
    %3584 = vmatpush1.bf16.msra.mxu0 0
    %3585 = vmatprep.subr.bf16.mxu0 0
    %3586 = vmatpush1.bf16.msra.mxu0 0
    %3587 = vmatprep.subr.bf16.mxu0 0
    %3588 = vmatpush1.bf16.msra.mxu0 0
    %3589 = vmatprep.subr.bf16.mxu0 0
    %3590 = vmatpush1.bf16.msra.mxu0 0
    %3591 = vmatprep.subr.bf16.mxu0 0
    %3592 = vmatpush1.bf16.msra.mxu0 0
    %3593 = vmatprep.subr.bf16.mxu0 0
    %3594 = vmatpush1.bf16.msra.mxu0 0
    %3595 = vmatprep.subr.bf16.mxu0 0
    %3596 = vmatpush1.bf16.msra.mxu0 0
    %3597 = vmatprep.subr.bf16.mxu0 0
    %3598 = vmatpush1.bf16.msra.mxu0 0
    %3599 = vmatprep.subr.bf16.mxu0 0
    %3600 = vmatpush1.bf16.msra.mxu0 0
    %3601 = vmatprep.subr.bf16.mxu0 0
    %3602 = vmatpush1.bf16.msra.mxu0 0
    %3603 = vmatprep.subr.bf16.mxu0 0
    %3604 = vmatpush1.bf16.msra.mxu0 0
    %3605 = vmatprep.subr.bf16.mxu0 0
    %3606 = vmatpush1.bf16.msra.mxu0 0
    %3607 = vmatprep.subr.bf16.mxu0 0
    %3608 = vmatpush1.bf16.msra.mxu0 0
    %3609 = vmatprep.mubr.bf16.mxu0 0
    %3610 = vmatmul.mubr.bf16.gmra.mrb[0].mxu0 %v3575
    %v3611 = vpop.f32.mrb[0].mxu0
    %v3612 = vadd.f32 0.0, %v3611
    %v3613 = vpop.f32.mrb[0].mxu0
    %v3614 = vpop.f32.mrb[0].mxu0
    %v3615 = vpop.f32.mrb[0].mxu0
    %3616 = vdwg.mxu0
    %v3617 = vpack.c.bf16 %v3612, %v3612
    %s3618 = scalar_lea.vmem %s11, 96
    %v3619 = vld [vmem:[%s3618] sm:$0xf]
    %v3620 = vld [vmem:[%s3618 + $0x4] sm:$0xf]
    %v3621 = vld [vmem:[%s3618 + $0x8] sm:$0xf]
    %v3622 = vld [vmem:[%s3618 + $0xc] sm:$0xf]
    %v3623 = vld [vmem:[%s3618 + $0x10] sm:$0xf]
    %v3624 = vld [vmem:[%s3618 + $0x14] sm:$0xf]
    %v3625 = vld [vmem:[%s3618 + $0x18] sm:$0xf]
    %v3626 = vld [vmem:[%s3618 + $0x1c] sm:$0xf]
    %v3635 = vunpack.c.l.b16 %v3619
    %v3636 = vunpack.c.l.b16 %v3620
    %v3637 = vunpack.c.l.b16 %v3621
    %v3638 = vunpack.c.l.b16 %v3622
    %v3639 = vunpack.c.l.b16 %v3623
    %v3640 = vunpack.c.l.b16 %v3624
    %v3641 = vunpack.c.l.b16 %v3625
    %v3642 = vunpack.c.l.b16 %v3626
    %v3643 = vpack.c.b16 %v3636, %v3635
    %v3644 = vpack.c.b16 %v3638, %v3637
    %v3645 = vpack.c.b16 %v3640, %v3639
    %v3646 = vpack.c.b16 %v3642, %v3641
    %v3652 = vsel %vm3135, %v3617, 0
    %3654 = vmatprep.subr.bf16.mxu0 0
    %3655 = vmatpush1.bf16.msra.mxu0 %v3643
    %3656 = vmatprep.subr.bf16.mxu0 0
    %3657 = vmatpush1.bf16.msra.mxu0 %v3644
    %3658 = vmatprep.subr.bf16.mxu0 0
    %3659 = vmatpush1.bf16.msra.mxu0 %v3645
    %3660 = vmatprep.subr.bf16.mxu0 0
    %3661 = vmatpush1.bf16.msra.mxu0 %v3646
    %3662 = vmatprep.subr.bf16.mxu0 0
    %3663 = vmatpush1.bf16.msra.mxu0 0
    %3664 = vmatprep.subr.bf16.mxu0 0
    %3665 = vmatpush1.bf16.msra.mxu0 0
    %3666 = vmatprep.subr.bf16.mxu0 0
    %3667 = vmatpush1.bf16.msra.mxu0 0
    %3668 = vmatprep.subr.bf16.mxu0 0
    %3669 = vmatpush1.bf16.msra.mxu0 0
    %3670 = vmatprep.subr.bf16.mxu0 0
    %3671 = vmatpush1.bf16.msra.mxu0 0
    %3672 = vmatprep.subr.bf16.mxu0 0
    %3673 = vmatpush1.bf16.msra.mxu0 0
    %3674 = vmatprep.subr.bf16.mxu0 0
    %3675 = vmatpush1.bf16.msra.mxu0 0
    %3676 = vmatprep.subr.bf16.mxu0 0
    %3677 = vmatpush1.bf16.msra.mxu0 0
    %3678 = vmatprep.subr.bf16.mxu0 0
    %3679 = vmatpush1.bf16.msra.mxu0 0
    %3680 = vmatprep.subr.bf16.mxu0 0
    %3681 = vmatpush1.bf16.msra.mxu0 0
    %3682 = vmatprep.subr.bf16.mxu0 0
    %3683 = vmatpush1.bf16.msra.mxu0 0
    %3684 = vmatprep.subr.bf16.mxu0 0
    %3685 = vmatpush1.bf16.msra.mxu0 0
    %3686 = vmatprep.mubr.bf16.mxu0 0
    %3687 = vmatmul.mubr.bf16.gmra.mrb[0].mxu0 %v3652
    %v3688 = vpop.f32.mrb[0].mxu0
    %v3689 = vadd.f32 0.0, %v3688
    %v3690 = vpop.f32.mrb[0].mxu0
    %v3691 = vpop.f32.mrb[0].mxu0
    %v3692 = vpop.f32.mrb[0].mxu0
    %3693 = vdwg.mxu0
    %v3694 = vadd.f32 %v3571, %v3689
    %s3695 = scalar_lea.vmem %s10, 4
    %v3696 = vld [vmem:[%s3695] sm:$0x1]
    %v3698 = vsel %vm3204, %v3696, 0
    %3700 = vmatprep.subr.bf16.mxu0 0
    %3701 = vmatpush1.bf16.msra.mxu0 %v3201
    %3702 = vmatprep.subr.bf16.mxu0 0
    %3703 = vmatpush1.bf16.msra.mxu0 %v3209
    %3704 = vmatprep.subr.bf16.mxu0 0
    %3705 = vmatpush1.bf16.msra.mxu0 0
    %3706 = vmatprep.subr.bf16.mxu0 0
    %3707 = vmatpush1.bf16.msra.mxu0 0
    %3708 = vmatprep.subr.bf16.mxu0 0
    %3709 = vmatpush1.bf16.msra.mxu0 0
    %3710 = vmatprep.subr.bf16.mxu0 0
    %3711 = vmatpush1.bf16.msra.mxu0 0
    %3712 = vmatprep.subr.bf16.mxu0 0
    %3713 = vmatpush1.bf16.msra.mxu0 0
    %3714 = vmatprep.subr.bf16.mxu0 0
    %3715 = vmatpush1.bf16.msra.mxu0 0
    %3716 = vmatprep.subr.bf16.mxu0 0
    %3717 = vmatpush1.bf16.msra.mxu0 0
    %3718 = vmatprep.subr.bf16.mxu0 0
    %3719 = vmatpush1.bf16.msra.mxu0 0
    %3720 = vmatprep.subr.bf16.mxu0 0
    %3721 = vmatpush1.bf16.msra.mxu0 0
    %3722 = vmatprep.subr.bf16.mxu0 0
    %3723 = vmatpush1.bf16.msra.mxu0 0
    %3724 = vmatprep.subr.bf16.mxu0 0
    %3725 = vmatpush1.bf16.msra.mxu0 0
    %3726 = vmatprep.subr.bf16.mxu0 0
    %3727 = vmatpush1.bf16.msra.mxu0 0
    %3728 = vmatprep.subr.bf16.mxu0 0
    %3729 = vmatpush1.bf16.msra.mxu0 0
    %3730 = vmatprep.subr.bf16.mxu0 0
    %3731 = vmatpush1.bf16.msra.mxu0 0
    %3732 = vmatprep.mubr.bf16.mxu0 0
    %3733 = vmatmul.mubr.bf16.gmra.mrb[0].mxu0 %v3698
    %v3734 = vpop.f32.mrb[0].mxu0
    %v3735 = vadd.f32 0.0, %v3734
    %v3736 = vpop.f32.mrb[0].mxu0
    %v3737 = vpop.f32.mrb[0].mxu0
    %v3738 = vpop.f32.mrb[0].mxu0
    %3739 = vdwg.mxu0
    %v3740 = vpack.c.bf16 %v3735, %v3735
    %s3741 = scalar_lea.vmem %s11, 128
    %v3742 = vld [vmem:[%s3741] sm:$0xf]
    %v3743 = vld [vmem:[%s3741 + $0x4] sm:$0xf]
    %v3744 = vld [vmem:[%s3741 + $0x8] sm:$0xf]
    %v3745 = vld [vmem:[%s3741 + $0xc] sm:$0xf]
    %v3746 = vld [vmem:[%s3741 + $0x10] sm:$0xf]
    %v3747 = vld [vmem:[%s3741 + $0x14] sm:$0xf]
    %v3748 = vld [vmem:[%s3741 + $0x18] sm:$0xf]
    %v3749 = vld [vmem:[%s3741 + $0x1c] sm:$0xf]
    %v3758 = vunpack.c.l.b16 %v3742
    %v3759 = vunpack.c.l.b16 %v3743
    %v3760 = vunpack.c.l.b16 %v3744
    %v3761 = vunpack.c.l.b16 %v3745
    %v3762 = vunpack.c.l.b16 %v3746
    %v3763 = vunpack.c.l.b16 %v3747
    %v3764 = vunpack.c.l.b16 %v3748
    %v3765 = vunpack.c.l.b16 %v3749
    %v3766 = vpack.c.b16 %v3759, %v3758
    %v3767 = vpack.c.b16 %v3761, %v3760
    %v3768 = vpack.c.b16 %v3763, %v3762
    %v3769 = vpack.c.b16 %v3765, %v3764
    %v3775 = vsel %vm3135, %v3740, 0
    %3777 = vmatprep.subr.bf16.mxu0 0
    %3778 = vmatpush1.bf16.msra.mxu0 %v3766
    %3779 = vmatprep.subr.bf16.mxu0 0
    %3780 = vmatpush1.bf16.msra.mxu0 %v3767
    %3781 = vmatprep.subr.bf16.mxu0 0
    %3782 = vmatpush1.bf16.msra.mxu0 %v3768
    %3783 = vmatprep.subr.bf16.mxu0 0
    %3784 = vmatpush1.bf16.msra.mxu0 %v3769
    %3785 = vmatprep.subr.bf16.mxu0 0
    %3786 = vmatpush1.bf16.msra.mxu0 0
    %3787 = vmatprep.subr.bf16.mxu0 0
    %3788 = vmatpush1.bf16.msra.mxu0 0
    %3789 = vmatprep.subr.bf16.mxu0 0
    %3790 = vmatpush1.bf16.msra.mxu0 0
    %3791 = vmatprep.subr.bf16.mxu0 0
    %3792 = vmatpush1.bf16.msra.mxu0 0
    %3793 = vmatprep.subr.bf16.mxu0 0
    %3794 = vmatpush1.bf16.msra.mxu0 0
    %3795 = vmatprep.subr.bf16.mxu0 0
    %3796 = vmatpush1.bf16.msra.mxu0 0
    %3797 = vmatprep.subr.bf16.mxu0 0
    %3798 = vmatpush1.bf16.msra.mxu0 0
    %3799 = vmatprep.subr.bf16.mxu0 0
    %3800 = vmatpush1.bf16.msra.mxu0 0
    %3801 = vmatprep.subr.bf16.mxu0 0
    %3802 = vmatpush1.bf16.msra.mxu0 0
    %3803 = vmatprep.subr.bf16.mxu0 0
    %3804 = vmatpush1.bf16.msra.mxu0 0
    %3805 = vmatprep.subr.bf16.mxu0 0
    %3806 = vmatpush1.bf16.msra.mxu0 0
    %3807 = vmatprep.subr.bf16.mxu0 0
    %3808 = vmatpush1.bf16.msra.mxu0 0
    %3809 = vmatprep.mubr.bf16.mxu0 0
    %3810 = vmatmul.mubr.bf16.gmra.mrb[0].mxu0 %v3775
    %v3811 = vpop.f32.mrb[0].mxu0
    %v3812 = vadd.f32 0.0, %v3811
    %v3813 = vpop.f32.mrb[0].mxu0
    %v3814 = vpop.f32.mrb[0].mxu0
    %v3815 = vpop.f32.mrb[0].mxu0
    %3816 = vdwg.mxu0
    %v3817 = vadd.f32 %v3694, %v3812
    %s3818 = scalar_lea.vmem %s10, 5
    %v3819 = vld [vmem:[%s3818] sm:$0x1]
    %v3821 = vsel %vm3204, %v3819, 0
    %3823 = vmatprep.subr.bf16.mxu0 0
    %3824 = vmatpush1.bf16.msra.mxu0 %v3201
    %3825 = vmatprep.subr.bf16.mxu0 0
    %3826 = vmatpush1.bf16.msra.mxu0 %v3209
    %3827 = vmatprep.subr.bf16.mxu0 0
    %3828 = vmatpush1.bf16.msra.mxu0 0
    %3829 = vmatprep.subr.bf16.mxu0 0
    %3830 = vmatpush1.bf16.msra.mxu0 0
    %3831 = vmatprep.subr.bf16.mxu0 0
    %3832 = vmatpush1.bf16.msra.mxu0 0
    %3833 = vmatprep.subr.bf16.mxu0 0
    %3834 = vmatpush1.bf16.msra.mxu0 0
    %3835 = vmatprep.subr.bf16.mxu0 0
    %3836 = vmatpush1.bf16.msra.mxu0 0
    %3837 = vmatprep.subr.bf16.mxu0 0
    %3838 = vmatpush1.bf16.msra.mxu0 0
    %3839 = vmatprep.subr.bf16.mxu0 0
    %3840 = vmatpush1.bf16.msra.mxu0 0
    %3841 = vmatprep.subr.bf16.mxu0 0
    %3842 = vmatpush1.bf16.msra.mxu0 0
    %3843 = vmatprep.subr.bf16.mxu0 0
    %3844 = vmatpush1.bf16.msra.mxu0 0
    %3845 = vmatprep.subr.bf16.mxu0 0
    %3846 = vmatpush1.bf16.msra.mxu0 0
    %3847 = vmatprep.subr.bf16.mxu0 0
    %3848 = vmatpush1.bf16.msra.mxu0 0
    %3849 = vmatprep.subr.bf16.mxu0 0
    %3850 = vmatpush1.bf16.msra.mxu0 0
    %3851 = vmatprep.subr.bf16.mxu0 0
    %3852 = vmatpush1.bf16.msra.mxu0 0
    %3853 = vmatprep.subr.bf16.mxu0 0
    %3854 = vmatpush1.bf16.msra.mxu0 0
    %3855 = vmatprep.mubr.bf16.mxu0 0
    %3856 = vmatmul.mubr.bf16.gmra.mrb[0].mxu0 %v3821
    %v3857 = vpop.f32.mrb[0].mxu0
    %v3858 = vadd.f32 0.0, %v3857
    %v3859 = vpop.f32.mrb[0].mxu0
    %v3860 = vpop.f32.mrb[0].mxu0
    %v3861 = vpop.f32.mrb[0].mxu0
    %3862 = vdwg.mxu0
    %v3863 = vpack.c.bf16 %v3858, %v3858
    %s3864 = scalar_lea.vmem %s11, 160
    %v3865 = vld [vmem:[%s3864] sm:$0xf]
    %v3866 = vld [vmem:[%s3864 + $0x4] sm:$0xf]
    %v3867 = vld [vmem:[%s3864 + $0x8] sm:$0xf]
    %v3868 = vld [vmem:[%s3864 + $0xc] sm:$0xf]
    %v3869 = vld [vmem:[%s3864 + $0x10] sm:$0xf]
    %v3870 = vld [vmem:[%s3864 + $0x14] sm:$0xf]
    %v3871 = vld [vmem:[%s3864 + $0x18] sm:$0xf]
    %v3872 = vld [vmem:[%s3864 + $0x1c] sm:$0xf]
    %v3881 = vunpack.c.l.b16 %v3865
    %v3882 = vunpack.c.l.b16 %v3866
    %v3883 = vunpack.c.l.b16 %v3867
    %v3884 = vunpack.c.l.b16 %v3868
    %v3885 = vunpack.c.l.b16 %v3869
    %v3886 = vunpack.c.l.b16 %v3870
    %v3887 = vunpack.c.l.b16 %v3871
    %v3888 = vunpack.c.l.b16 %v3872
    %v3889 = vpack.c.b16 %v3882, %v3881
    %v3890 = vpack.c.b16 %v3884, %v3883
    %v3891 = vpack.c.b16 %v3886, %v3885
    %v3892 = vpack.c.b16 %v3888, %v3887
    %v3898 = vsel %vm3135, %v3863, 0
    %3900 = vmatprep.subr.bf16.mxu0 0
    %3901 = vmatpush1.bf16.msra.mxu0 %v3889
    %3902 = vmatprep.subr.bf16.mxu0 0
    %3903 = vmatpush1.bf16.msra.mxu0 %v3890
    %3904 = vmatprep.subr.bf16.mxu0 0
    %3905 = vmatpush1.bf16.msra.mxu0 %v3891
    %3906 = vmatprep.subr.bf16.mxu0 0
    %3907 = vmatpush1.bf16.msra.mxu0 %v3892
    %3908 = vmatprep.subr.bf16.mxu0 0
    %3909 = vmatpush1.bf16.msra.mxu0 0
    %3910 = vmatprep.subr.bf16.mxu0 0
    %3911 = vmatpush1.bf16.msra.mxu0 0
    %3912 = vmatprep.subr.bf16.mxu0 0
    %3913 = vmatpush1.bf16.msra.mxu0 0
    %3914 = vmatprep.subr.bf16.mxu0 0
    %3915 = vmatpush1.bf16.msra.mxu0 0
    %3916 = vmatprep.subr.bf16.mxu0 0
    %3917 = vmatpush1.bf16.msra.mxu0 0
    %3918 = vmatprep.subr.bf16.mxu0 0
    %3919 = vmatpush1.bf16.msra.mxu0 0
    %3920 = vmatprep.subr.bf16.mxu0 0
    %3921 = vmatpush1.bf16.msra.mxu0 0
    %3922 = vmatprep.subr.bf16.mxu0 0
    %3923 = vmatpush1.bf16.msra.mxu0 0
    %3924 = vmatprep.subr.bf16.mxu0 0
    %3925 = vmatpush1.bf16.msra.mxu0 0
    %3926 = vmatprep.subr.bf16.mxu0 0
    %3927 = vmatpush1.bf16.msra.mxu0 0
    %3928 = vmatprep.subr.bf16.mxu0 0
    %3929 = vmatpush1.bf16.msra.mxu0 0
    %3930 = vmatprep.subr.bf16.mxu0 0
    %3931 = vmatpush1.bf16.msra.mxu0 0
    %3932 = vmatprep.mubr.bf16.mxu0 0
    %3933 = vmatmul.mubr.bf16.gmra.mrb[0].mxu0 %v3898
    %v3934 = vpop.f32.mrb[0].mxu0
    %v3935 = vadd.f32 0.0, %v3934
    %v3936 = vpop.f32.mrb[0].mxu0
    %v3937 = vpop.f32.mrb[0].mxu0
    %v3938 = vpop.f32.mrb[0].mxu0
    %3939 = vdwg.mxu0
    %v3940 = vadd.f32 %v3817, %v3935
    %s3941 = scalar_lea.vmem %s10, 6
    %v3942 = vld [vmem:[%s3941] sm:$0x1]
    %v3944 = vsel %vm3204, %v3942, 0
    %3946 = vmatprep.subr.bf16.mxu0 0
    %3947 = vmatpush1.bf16.msra.mxu0 %v3201
    %3948 = vmatprep.subr.bf16.mxu0 0
    %3949 = vmatpush1.bf16.msra.mxu0 %v3209
    %3950 = vmatprep.subr.bf16.mxu0 0
    %3951 = vmatpush1.bf16.msra.mxu0 0
    %3952 = vmatprep.subr.bf16.mxu0 0
    %3953 = vmatpush1.bf16.msra.mxu0 0
    %3954 = vmatprep.subr.bf16.mxu0 0
    %3955 = vmatpush1.bf16.msra.mxu0 0
    %3956 = vmatprep.subr.bf16.mxu0 0
    %3957 = vmatpush1.bf16.msra.mxu0 0
    %3958 = vmatprep.subr.bf16.mxu0 0
    %3959 = vmatpush1.bf16.msra.mxu0 0
    %3960 = vmatprep.subr.bf16.mxu0 0
    %3961 = vmatpush1.bf16.msra.mxu0 0
    %3962 = vmatprep.subr.bf16.mxu0 0
    %3963 = vmatpush1.bf16.msra.mxu0 0
    %3964 = vmatprep.subr.bf16.mxu0 0
    %3965 = vmatpush1.bf16.msra.mxu0 0
    %3966 = vmatprep.subr.bf16.mxu0 0
    %3967 = vmatpush1.bf16.msra.mxu0 0
    %3968 = vmatprep.subr.bf16.mxu0 0
    %3969 = vmatpush1.bf16.msra.mxu0 0
    %3970 = vmatprep.subr.bf16.mxu0 0
    %3971 = vmatpush1.bf16.msra.mxu0 0
    %3972 = vmatprep.subr.bf16.mxu0 0
    %3973 = vmatpush1.bf16.msra.mxu0 0
    %3974 = vmatprep.subr.bf16.mxu0 0
    %3975 = vmatpush1.bf16.msra.mxu0 0
    %3976 = vmatprep.subr.bf16.mxu0 0
    %3977 = vmatpush1.bf16.msra.mxu0 0
    %3978 = vmatprep.mubr.bf16.mxu0 0
    %3979 = vmatmul.mubr.bf16.gmra.mrb[0].mxu0 %v3944
    %v3980 = vpop.f32.mrb[0].mxu0
    %v3981 = vadd.f32 0.0, %v3980
    %v3982 = vpop.f32.mrb[0].mxu0
    %v3983 = vpop.f32.mrb[0].mxu0
    %v3984 = vpop.f32.mrb[0].mxu0
    %3985 = vdwg.mxu0
    %v3986 = vpack.c.bf16 %v3981, %v3981
    %s3987 = scalar_lea.vmem %s11, 192
    %v3988 = vld [vmem:[%s3987] sm:$0xf]
    %v3989 = vld [vmem:[%s3987 + $0x4] sm:$0xf]
    %v3990 = vld [vmem:[%s3987 + $0x8] sm:$0xf]
    %v3991 = vld [vmem:[%s3987 + $0xc] sm:$0xf]
    %v3992 = vld [vmem:[%s3987 + $0x10] sm:$0xf]
    %v3993 = vld [vmem:[%s3987 + $0x14] sm:$0xf]
    %v3994 = vld [vmem:[%s3987 + $0x18] sm:$0xf]
    %v3995 = vld [vmem:[%s3987 + $0x1c] sm:$0xf]
    %v4004 = vunpack.c.l.b16 %v3988
    %v4005 = vunpack.c.l.b16 %v3989
    %v4006 = vunpack.c.l.b16 %v3990
    %v4007 = vunpack.c.l.b16 %v3991
    %v4008 = vunpack.c.l.b16 %v3992
    %v4009 = vunpack.c.l.b16 %v3993
    %v4010 = vunpack.c.l.b16 %v3994
    %v4011 = vunpack.c.l.b16 %v3995
    %v4012 = vpack.c.b16 %v4005, %v4004
    %v4013 = vpack.c.b16 %v4007, %v4006
    %v4014 = vpack.c.b16 %v4009, %v4008
    %v4015 = vpack.c.b16 %v4011, %v4010
    %v4021 = vsel %vm3135, %v3986, 0
    %4023 = vmatprep.subr.bf16.mxu0 0
    %4024 = vmatpush1.bf16.msra.mxu0 %v4012
    %4025 = vmatprep.subr.bf16.mxu0 0
    %4026 = vmatpush1.bf16.msra.mxu0 %v4013
    %4027 = vmatprep.subr.bf16.mxu0 0
    %4028 = vmatpush1.bf16.msra.mxu0 %v4014
    %4029 = vmatprep.subr.bf16.mxu0 0
    %4030 = vmatpush1.bf16.msra.mxu0 %v4015
    %4031 = vmatprep.subr.bf16.mxu0 0
    %4032 = vmatpush1.bf16.msra.mxu0 0
    %4033 = vmatprep.subr.bf16.mxu0 0
    %4034 = vmatpush1.bf16.msra.mxu0 0
    %4035 = vmatprep.subr.bf16.mxu0 0
    %4036 = vmatpush1.bf16.msra.mxu0 0
    %4037 = vmatprep.subr.bf16.mxu0 0
    %4038 = vmatpush1.bf16.msra.mxu0 0
    %4039 = vmatprep.subr.bf16.mxu0 0
    %4040 = vmatpush1.bf16.msra.mxu0 0
    %4041 = vmatprep.subr.bf16.mxu0 0
    %4042 = vmatpush1.bf16.msra.mxu0 0
    %4043 = vmatprep.subr.bf16.mxu0 0
    %4044 = vmatpush1.bf16.msra.mxu0 0
    %4045 = vmatprep.subr.bf16.mxu0 0
    %4046 = vmatpush1.bf16.msra.mxu0 0
    %4047 = vmatprep.subr.bf16.mxu0 0
    %4048 = vmatpush1.bf16.msra.mxu0 0
    %4049 = vmatprep.subr.bf16.mxu0 0
    %4050 = vmatpush1.bf16.msra.mxu0 0
    %4051 = vmatprep.subr.bf16.mxu0 0
    %4052 = vmatpush1.bf16.msra.mxu0 0
    %4053 = vmatprep.subr.bf16.mxu0 0
    %4054 = vmatpush1.bf16.msra.mxu0 0
    %4055 = vmatprep.mubr.bf16.mxu0 0
    %4056 = vmatmul.mubr.bf16.gmra.mrb[0].mxu0 %v4021
    %v4057 = vpop.f32.mrb[0].mxu0
    %v4058 = vadd.f32 0.0, %v4057
    %v4059 = vpop.f32.mrb[0].mxu0
    %v4060 = vpop.f32.mrb[0].mxu0
    %v4061 = vpop.f32.mrb[0].mxu0
    %4062 = vdwg.mxu0
    %v4063 = vadd.f32 %v3940, %v4058
    %s4064 = scalar_lea.vmem %s10, 7
    %v4065 = vld [vmem:[%s4064] sm:$0x1]
    %v4067 = vsel %vm3204, %v4065, 0
    %4069 = vmatprep.subr.bf16.mxu0 0
    %4070 = vmatpush1.bf16.msra.mxu0 %v3201
    %4071 = vmatprep.subr.bf16.mxu0 0
    %4072 = vmatpush1.bf16.msra.mxu0 %v3209
    %4073 = vmatprep.subr.bf16.mxu0 0
    %4074 = vmatpush1.bf16.msra.mxu0 0
    %4075 = vmatprep.subr.bf16.mxu0 0
    %4076 = vmatpush1.bf16.msra.mxu0 0
    %4077 = vmatprep.subr.bf16.mxu0 0
    %4078 = vmatpush1.bf16.msra.mxu0 0
    %4079 = vmatprep.subr.bf16.mxu0 0
    %4080 = vmatpush1.bf16.msra.mxu0 0
    %4081 = vmatprep.subr.bf16.mxu0 0
    %4082 = vmatpush1.bf16.msra.mxu0 0
    %4083 = vmatprep.subr.bf16.mxu0 0
    %4084 = vmatpush1.bf16.msra.mxu0 0
    %4085 = vmatprep.subr.bf16.mxu0 0
    %4086 = vmatpush1.bf16.msra.mxu0 0
    %4087 = vmatprep.subr.bf16.mxu0 0
    %4088 = vmatpush1.bf16.msra.mxu0 0
    %4089 = vmatprep.subr.bf16.mxu0 0
    %4090 = vmatpush1.bf16.msra.mxu0 0
    %4091 = vmatprep.subr.bf16.mxu0 0
    %4092 = vmatpush1.bf16.msra.mxu0 0
    %4093 = vmatprep.subr.bf16.mxu0 0
    %4094 = vmatpush1.bf16.msra.mxu0 0
    %4095 = vmatprep.subr.bf16.mxu0 0
    %4096 = vmatpush1.bf16.msra.mxu0 0
    %4097 = vmatprep.subr.bf16.mxu0 0
    %4098 = vmatpush1.bf16.msra.mxu0 0
    %4099 = vmatprep.subr.bf16.mxu0 0
    %4100 = vmatpush1.bf16.msra.mxu0 0
    %4101 = vmatprep.mubr.bf16.mxu0 0
    %4102 = vmatmul.mubr.bf16.gmra.mrb[0].mxu0 %v4067
    %v4103 = vpop.f32.mrb[0].mxu0
    %v4104 = vadd.f32 0.0, %v4103
    %v4105 = vpop.f32.mrb[0].mxu0
    %v4106 = vpop.f32.mrb[0].mxu0
    %v4107 = vpop.f32.mrb[0].mxu0
    %4108 = vdwg.mxu0
    %v4109 = vpack.c.bf16 %v4104, %v4104
    %s4110 = scalar_lea.vmem %s11, 224
    %v4111 = vld [vmem:[%s4110] sm:$0xf]
    %v4112 = vld [vmem:[%s4110 + $0x4] sm:$0xf]
    %v4113 = vld [vmem:[%s4110 + $0x8] sm:$0xf]
    %v4114 = vld [vmem:[%s4110 + $0xc] sm:$0xf]
    %v4115 = vld [vmem:[%s4110 + $0x10] sm:$0xf]
    %v4116 = vld [vmem:[%s4110 + $0x14] sm:$0xf]
    %v4117 = vld [vmem:[%s4110 + $0x18] sm:$0xf]
    %v4118 = vld [vmem:[%s4110 + $0x1c] sm:$0xf]
    %v4127 = vunpack.c.l.b16 %v4111
    %v4128 = vunpack.c.l.b16 %v4112
    %v4129 = vunpack.c.l.b16 %v4113
    %v4130 = vunpack.c.l.b16 %v4114
    %v4131 = vunpack.c.l.b16 %v4115
    %v4132 = vunpack.c.l.b16 %v4116
    %v4133 = vunpack.c.l.b16 %v4117
    %v4134 = vunpack.c.l.b16 %v4118
    %v4135 = vpack.c.b16 %v4128, %v4127
    %v4136 = vpack.c.b16 %v4130, %v4129
    %v4137 = vpack.c.b16 %v4132, %v4131
    %v4138 = vpack.c.b16 %v4134, %v4133
    %v4144 = vsel %vm3135, %v4109, 0
    %4146 = vmatprep.subr.bf16.mxu0 0
    %4147 = vmatpush1.bf16.msra.mxu0 %v4135
    %4148 = vmatprep.subr.bf16.mxu0 0
    %4149 = vmatpush1.bf16.msra.mxu0 %v4136
    %4150 = vmatprep.subr.bf16.mxu0 0
    %4151 = vmatpush1.bf16.msra.mxu0 %v4137
    %4152 = vmatprep.subr.bf16.mxu0 0
    %4153 = vmatpush1.bf16.msra.mxu0 %v4138
    %4154 = vmatprep.subr.bf16.mxu0 0
    %4155 = vmatpush1.bf16.msra.mxu0 0
    %4156 = vmatprep.subr.bf16.mxu0 0
    %4157 = vmatpush1.bf16.msra.mxu0 0
    %4158 = vmatprep.subr.bf16.mxu0 0
    %4159 = vmatpush1.bf16.msra.mxu0 0
    %4160 = vmatprep.subr.bf16.mxu0 0
    %4161 = vmatpush1.bf16.msra.mxu0 0
    %4162 = vmatprep.subr.bf16.mxu0 0
    %4163 = vmatpush1.bf16.msra.mxu0 0
    %4164 = vmatprep.subr.bf16.mxu0 0
    %4165 = vmatpush1.bf16.msra.mxu0 0
    %4166 = vmatprep.subr.bf16.mxu0 0
    %4167 = vmatpush1.bf16.msra.mxu0 0
    %4168 = vmatprep.subr.bf16.mxu0 0
    %4169 = vmatpush1.bf16.msra.mxu0 0
    %4170 = vmatprep.subr.bf16.mxu0 0
    %4171 = vmatpush1.bf16.msra.mxu0 0
    %4172 = vmatprep.subr.bf16.mxu0 0
    %4173 = vmatpush1.bf16.msra.mxu0 0
    %4174 = vmatprep.subr.bf16.mxu0 0
    %4175 = vmatpush1.bf16.msra.mxu0 0
    %4176 = vmatprep.subr.bf16.mxu0 0
    %4177 = vmatpush1.bf16.msra.mxu0 0
    %4178 = vmatprep.mubr.bf16.mxu0 0
    %4179 = vmatmul.mubr.bf16.gmra.mrb[0].mxu0 %v4144
    %v4180 = vpop.f32.mrb[0].mxu0
    %v4181 = vadd.f32 0.0, %v4180
    %v4182 = vpop.f32.mrb[0].mxu0
    %v4183 = vpop.f32.mrb[0].mxu0
    %v4184 = vpop.f32.mrb[0].mxu0
    %4185 = vdwg.mxu0
    %v4186 = vadd.f32 %v4063, %v4181
    %s4187 = scalar_lea.vmem %s10, 8
    %v4188 = vld [vmem:[%s4187] sm:$0x1]
    %v4190 = vsel %vm3204, %v4188, 0
    %4192 = vmatprep.subr.bf16.mxu0 0
    %4193 = vmatpush1.bf16.msra.mxu0 %v3201
    %4194 = vmatprep.subr.bf16.mxu0 0
    %4195 = vmatpush1.bf16.msra.mxu0 %v3209
    %4196 = vmatprep.subr.bf16.mxu0 0
    %4197 = vmatpush1.bf16.msra.mxu0 0
    %4198 = vmatprep.subr.bf16.mxu0 0
    %4199 = vmatpush1.bf16.msra.mxu0 0
    %4200 = vmatprep.subr.bf16.mxu0 0
    %4201 = vmatpush1.bf16.msra.mxu0 0
    %4202 = vmatprep.subr.bf16.mxu0 0
    %4203 = vmatpush1.bf16.msra.mxu0 0
    %4204 = vmatprep.subr.bf16.mxu0 0
    %4205 = vmatpush1.bf16.msra.mxu0 0
    %4206 = vmatprep.subr.bf16.mxu0 0
    %4207 = vmatpush1.bf16.msra.mxu0 0
    %4208 = vmatprep.subr.bf16.mxu0 0
    %4209 = vmatpush1.bf16.msra.mxu0 0
    %4210 = vmatprep.subr.bf16.mxu0 0
    %4211 = vmatpush1.bf16.msra.mxu0 0
    %4212 = vmatprep.subr.bf16.mxu0 0
    %4213 = vmatpush1.bf16.msra.mxu0 0
    %4214 = vmatprep.subr.bf16.mxu0 0
    %4215 = vmatpush1.bf16.msra.mxu0 0
    %4216 = vmatprep.subr.bf16.mxu0 0
    %4217 = vmatpush1.bf16.msra.mxu0 0
    %4218 = vmatprep.subr.bf16.mxu0 0
    %4219 = vmatpush1.bf16.msra.mxu0 0
    %4220 = vmatprep.subr.bf16.mxu0 0
    %4221 = vmatpush1.bf16.msra.mxu0 0
    %4222 = vmatprep.subr.bf16.mxu0 0
    %4223 = vmatpush1.bf16.msra.mxu0 0
    %4224 = vmatprep.mubr.bf16.mxu0 0
    %4225 = vmatmul.mubr.bf16.gmra.mrb[0].mxu0 %v4190
    %v4226 = vpop.f32.mrb[0].mxu0
    %v4227 = vadd.f32 0.0, %v4226
    %v4228 = vpop.f32.mrb[0].mxu0
    %v4229 = vpop.f32.mrb[0].mxu0
    %v4230 = vpop.f32.mrb[0].mxu0
    %4231 = vdwg.mxu0
    %v4232 = vpack.c.bf16 %v4227, %v4227
    %s4233 = scalar_lea.vmem %s11, 256
    %v4234 = vld [vmem:[%s4233] sm:$0xf]
    %v4235 = vld [vmem:[%s4233 + $0x4] sm:$0xf]
    %v4236 = vld [vmem:[%s4233 + $0x8] sm:$0xf]
    %v4237 = vld [vmem:[%s4233 + $0xc] sm:$0xf]
    %v4238 = vld [vmem:[%s4233 + $0x10] sm:$0xf]
    %v4239 = vld [vmem:[%s4233 + $0x14] sm:$0xf]
    %v4240 = vld [vmem:[%s4233 + $0x18] sm:$0xf]
    %v4241 = vld [vmem:[%s4233 + $0x1c] sm:$0xf]
    %v4250 = vunpack.c.l.b16 %v4234
    %v4251 = vunpack.c.l.b16 %v4235
    %v4252 = vunpack.c.l.b16 %v4236
    %v4253 = vunpack.c.l.b16 %v4237
    %v4254 = vunpack.c.l.b16 %v4238
    %v4255 = vunpack.c.l.b16 %v4239
    %v4256 = vunpack.c.l.b16 %v4240
    %v4257 = vunpack.c.l.b16 %v4241
    %v4258 = vpack.c.b16 %v4251, %v4250
    %v4259 = vpack.c.b16 %v4253, %v4252
    %v4260 = vpack.c.b16 %v4255, %v4254
    %v4261 = vpack.c.b16 %v4257, %v4256
    %v4267 = vsel %vm3135, %v4232, 0
    %4269 = vmatprep.subr.bf16.mxu0 0
    %4270 = vmatpush1.bf16.msra.mxu0 %v4258
    %4271 = vmatprep.subr.bf16.mxu0 0
    %4272 = vmatpush1.bf16.msra.mxu0 %v4259
    %4273 = vmatprep.subr.bf16.mxu0 0
    %4274 = vmatpush1.bf16.msra.mxu0 %v4260
    %4275 = vmatprep.subr.bf16.mxu0 0
    %4276 = vmatpush1.bf16.msra.mxu0 %v4261
    %4277 = vmatprep.subr.bf16.mxu0 0
    %4278 = vmatpush1.bf16.msra.mxu0 0
    %4279 = vmatprep.subr.bf16.mxu0 0
    %4280 = vmatpush1.bf16.msra.mxu0 0
    %4281 = vmatprep.subr.bf16.mxu0 0
    %4282 = vmatpush1.bf16.msra.mxu0 0
    %4283 = vmatprep.subr.bf16.mxu0 0
    %4284 = vmatpush1.bf16.msra.mxu0 0
    %4285 = vmatprep.subr.bf16.mxu0 0
    %4286 = vmatpush1.bf16.msra.mxu0 0
    %4287 = vmatprep.subr.bf16.mxu0 0
    %4288 = vmatpush1.bf16.msra.mxu0 0
    %4289 = vmatprep.subr.bf16.mxu0 0
    %4290 = vmatpush1.bf16.msra.mxu0 0
    %4291 = vmatprep.subr.bf16.mxu0 0
    %4292 = vmatpush1.bf16.msra.mxu0 0
    %4293 = vmatprep.subr.bf16.mxu0 0
    %4294 = vmatpush1.bf16.msra.mxu0 0
    %4295 = vmatprep.subr.bf16.mxu0 0
    %4296 = vmatpush1.bf16.msra.mxu0 0
    %4297 = vmatprep.subr.bf16.mxu0 0
    %4298 = vmatpush1.bf16.msra.mxu0 0
    %4299 = vmatprep.subr.bf16.mxu0 0
    %4300 = vmatpush1.bf16.msra.mxu0 0
    %4301 = vmatprep.mubr.bf16.mxu0 0
    %4302 = vmatmul.mubr.bf16.gmra.mrb[0].mxu0 %v4267
    %v4303 = vpop.f32.mrb[0].mxu0
    %v4304 = vadd.f32 0.0, %v4303
    %v4305 = vpop.f32.mrb[0].mxu0
    %v4306 = vpop.f32.mrb[0].mxu0
    %v4307 = vpop.f32.mrb[0].mxu0
    %4308 = vdwg.mxu0
    %v4309 = vadd.f32 %v4186, %v4304
    %v4310 = vld [vmem:[%s12] sm:$0x1]
    %v4312 = vlaneseq
    %v4313 = vshrl.u32 %v4312, 7
    %v4314 = vsub.s32 0, %v4313
    %v4315 = vrot.slane %v4310, %v4314
    %v4317 = vadd.f32 %v4309, %v4315
    %v4318 = vld [vmem:[%s13] sm:$0x1]
    %v4319 = vld [vmem:[%s14] sm:$0x1]
    %v4320 = vsel %vm3139, %v4317, 0.0
    %v4321 = vrot.slane %v4320, 4
    %v4322 = vadd.f32 %v4320, %v4321
    %v4323 = vrot.slane %v4322, 2
    %v4324 = vadd.f32 %v4322, %v4323
    %v4325 = vrot.slane %v4324, 1
    %v4326 = vadd.f32 %v4324, %v4325
    %v4327 = vmul.f32 %v4317, %v4317
    %v4328 = vsel %vm3139, %v4327, 0.0
    %v4329 = vrot.slane %v4328, 4
    %v4330 = vadd.f32 %v4328, %v4329
    %v4331 = vrot.slane %v4330, 2
    %v4332 = vadd.f32 %v4330, %v4331
    %v4333 = vrot.slane %v4332, 1
    %v4334 = vadd.f32 %v4332, %v4333
    %v4335 = vmul.f32 %v4326, 0.5
    %v4336 = vmul.f32 %v4334, 0.5
    %v4337 = vmul.f32 %v4335, %v4335
    %v4338 = vsub.f32 %v4336, %v4337
    %v4339 = vsub.f32 %v4317, %v4335
    %v4340 = vadd.f32 %v4338, 1e-05
    %v4341 = vrsqrt.pop %v4340
    %v4342 = vmul.f32 %v4339, %v4341
    %v4344 = vlaneseq
    %v4345 = vshrl.u32 %v4344, 7
    %v4346 = vsub.s32 0, %v4345
    %v4347 = vrot.slane %v4318, %v4346
    %v4349 = vmul.f32 %v4342, %v4347
    %v4351 = vlaneseq
    %v4352 = vshrl.u32 %v4351, 7
    %v4353 = vsub.s32 0, %v4352
    %v4354 = vrot.slane %v4319, %v4353
    %v4356 = vadd.f32 %v4349, %v4354
    %vm4357 = vcmp.ge.f32.partialorder %v4356, 0.0
    %v4358 = vmul.f32 %v4356, 0.01
    %v4359 = vsel %vm4357, %v4356, %v4358
    %v4360 = vpack.c.bf16 %v4359, %v4359
    %v4361 = vld [vmem:[%s15] sm:$0xff]
    %v4362 = vld [vmem:[%s15 + $0x8] sm:$0xff]
    %v4363 = vld [vmem:[%s15 + $0x10] sm:$0xff]
    %v4364 = vld [vmem:[%s15 + $0x18] sm:$0xff]
    %v4365 = vld [vmem:[%s15 + $0x20] sm:$0xff]
    %v4366 = vld [vmem:[%s15 + $0x28] sm:$0xff]
    %v4367 = vld [vmem:[%s15 + $0x30] sm:$0xff]
    %v4368 = vld [vmem:[%s15 + $0x38] sm:$0xff]
    %v4369 = vld [vmem:[%s15 + $0x40] sm:$0xff]
    %v4370 = vld [vmem:[%s15 + $0x48] sm:$0xff]
    %v4371 = vld [vmem:[%s15 + $0x50] sm:$0xff]
    %v4372 = vld [vmem:[%s15 + $0x58] sm:$0xff]
    %v4373 = vld [vmem:[%s15 + $0x60] sm:$0xff]
    %v4374 = vld [vmem:[%s15 + $0x68] sm:$0xff]
    %v4375 = vld [vmem:[%s15 + $0x70] sm:$0xff]
    %v4376 = vld [vmem:[%s15 + $0x78] sm:$0xff]
    %v4377 = vld [vmem:[%s16] sm:$0xf]
    %v4379 = vlaneseq
    %v4380 = vshrl.u32 %v4379, 7
    %v4381 = vsub.s32 0, %v4380
    %v4382 = vrot.slane %v4377, %v4381
    %v4383 = vlaneseq
    %v4384 = vshrl.u32 %v4383, 7
    %v4385 = vsub.s32 1, %v4384
    %v4386 = vrot.slane %v4377, %v4385
    %v4387 = vlaneseq
    %v4388 = vshrl.u32 %v4387, 7
    %v4389 = vsub.s32 2, %v4388
    %v4390 = vrot.slane %v4377, %v4389
    %v4391 = vlaneseq
    %v4392 = vshrl.u32 %v4391, 7
    %v4393 = vsub.s32 3, %v4392
    %v4394 = vrot.slane %v4377, %v4393
    %v4415 = vunpack.c.l.b16 %v4361
    %v4416 = vunpack.c.h.b16 %v4361
    %v4417 = vunpack.c.l.b16 %v4362
    %v4418 = vunpack.c.h.b16 %v4362
    %v4419 = vunpack.c.l.b16 %v4363
    %v4420 = vunpack.c.h.b16 %v4363
    %v4421 = vunpack.c.l.b16 %v4364
    %v4422 = vunpack.c.h.b16 %v4364
    %v4423 = vunpack.c.l.b16 %v4365
    %v4424 = vunpack.c.h.b16 %v4365
    %v4425 = vunpack.c.l.b16 %v4366
    %v4426 = vunpack.c.h.b16 %v4366
    %v4427 = vunpack.c.l.b16 %v4367
    %v4428 = vunpack.c.h.b16 %v4367
    %v4429 = vunpack.c.l.b16 %v4368
    %v4430 = vunpack.c.h.b16 %v4368
    %v4431 = vunpack.c.l.b16 %v4369
    %v4432 = vunpack.c.h.b16 %v4369
    %v4433 = vunpack.c.l.b16 %v4370
    %v4434 = vunpack.c.h.b16 %v4370
    %v4435 = vunpack.c.l.b16 %v4371
    %v4436 = vunpack.c.h.b16 %v4371
    %v4437 = vunpack.c.l.b16 %v4372
    %v4438 = vunpack.c.h.b16 %v4372
    %v4439 = vunpack.c.l.b16 %v4373
    %v4440 = vunpack.c.h.b16 %v4373
    %v4441 = vunpack.c.l.b16 %v4374
    %v4442 = vunpack.c.h.b16 %v4374
    %v4443 = vunpack.c.l.b16 %v4375
    %v4444 = vunpack.c.h.b16 %v4375
    %v4445 = vunpack.c.l.b16 %v4376
    %v4446 = vunpack.c.h.b16 %v4376
    %v4447 = vpack.c.b16 %v4419, %v4415
    %v4448 = vpack.c.b16 %v4420, %v4416
    %v4449 = vpack.c.b16 %v4421, %v4417
    %v4450 = vpack.c.b16 %v4422, %v4418
    %v4451 = vpack.c.b16 %v4427, %v4423
    %v4452 = vpack.c.b16 %v4428, %v4424
    %v4453 = vpack.c.b16 %v4429, %v4425
    %v4454 = vpack.c.b16 %v4430, %v4426
    %v4455 = vpack.c.b16 %v4435, %v4431
    %v4456 = vpack.c.b16 %v4436, %v4432
    %v4457 = vpack.c.b16 %v4437, %v4433
    %v4458 = vpack.c.b16 %v4438, %v4434
    %v4459 = vpack.c.b16 %v4443, %v4439
    %v4460 = vpack.c.b16 %v4444, %v4440
    %v4461 = vpack.c.b16 %v4445, %v4441
    %v4462 = vpack.c.b16 %v4446, %v4442
    %v4480 = vsel %vm3135, %v4360, 0
    %4482 = vmatprep.subr.bf16.mxu0 %v4448
    %4483 = vmatpush1.bf16.msra.mxu0 %v4447
    %4484 = vmatprep.subr.bf16.mxu0 %v4452
    %4485 = vmatpush1.bf16.msra.mxu0 %v4451
    %4486 = vmatprep.subr.bf16.mxu0 %v4456
    %4487 = vmatpush1.bf16.msra.mxu0 %v4455
    %4488 = vmatprep.subr.bf16.mxu0 %v4460
    %4489 = vmatpush1.bf16.msra.mxu0 %v4459
    %4490 = vmatprep.subr.bf16.mxu0 0
    %4491 = vmatpush1.bf16.msra.mxu0 0
    %4492 = vmatprep.subr.bf16.mxu0 0
    %4493 = vmatpush1.bf16.msra.mxu0 0
    %4494 = vmatprep.subr.bf16.mxu0 0
    %4495 = vmatpush1.bf16.msra.mxu0 0
    %4496 = vmatprep.subr.bf16.mxu0 0
    %4497 = vmatpush1.bf16.msra.mxu0 0
    %4498 = vmatprep.subr.bf16.mxu0 0
    %4499 = vmatpush1.bf16.msra.mxu0 0
    %4500 = vmatprep.subr.bf16.mxu0 0
    %4501 = vmatpush1.bf16.msra.mxu0 0
    %4502 = vmatprep.subr.bf16.mxu0 0
    %4503 = vmatpush1.bf16.msra.mxu0 0
    %4504 = vmatprep.subr.bf16.mxu0 0
    %4505 = vmatpush1.bf16.msra.mxu0 0
    %4506 = vmatprep.subr.bf16.mxu0 0
    %4507 = vmatpush1.bf16.msra.mxu0 0
    %4508 = vmatprep.subr.bf16.mxu0 0
    %4509 = vmatpush1.bf16.msra.mxu0 0
    %4510 = vmatprep.subr.bf16.mxu0 0
    %4511 = vmatpush1.bf16.msra.mxu0 0
    %4512 = vmatprep.subr.bf16.mxu0 0
    %4513 = vmatpush1.bf16.msra.mxu0 0
    %4514 = vmatprep.mubr.bf16.mxu0 0
    %4515 = vmatmul.mubr.bf16.gmra.mrb[0].mxu0 %v4480
    %v4516 = vpop.f32.mrb[0].mxu0
    %v4517 = vadd.f32 %v4382, %v4516
    %v4518 = vpop.f32.mrb[0].mxu0
    %v4519 = vadd.f32 %v4386, %v4518
    %v4520 = vpop.f32.mrb[0].mxu0
    %v4521 = vpop.f32.mrb[0].mxu0
    %4522 = vdwg.mxu0
    %4523 = vmatprep.subr.bf16.mxu0 %v4450
    %4524 = vmatpush1.bf16.msra.mxu0 %v4449
    %4525 = vmatprep.subr.bf16.mxu0 %v4454
    %4526 = vmatpush1.bf16.msra.mxu0 %v4453
    %4527 = vmatprep.subr.bf16.mxu0 %v4458
    %4528 = vmatpush1.bf16.msra.mxu0 %v4457
    %4529 = vmatprep.subr.bf16.mxu0 %v4462
    %4530 = vmatpush1.bf16.msra.mxu0 %v4461
    %4531 = vmatprep.subr.bf16.mxu0 0
    %4532 = vmatpush1.bf16.msra.mxu0 0
    %4533 = vmatprep.subr.bf16.mxu0 0
    %4534 = vmatpush1.bf16.msra.mxu0 0
    %4535 = vmatprep.subr.bf16.mxu0 0
    %4536 = vmatpush1.bf16.msra.mxu0 0
    %4537 = vmatprep.subr.bf16.mxu0 0
    %4538 = vmatpush1.bf16.msra.mxu0 0
    %4539 = vmatprep.subr.bf16.mxu0 0
    %4540 = vmatpush1.bf16.msra.mxu0 0
    %4541 = vmatprep.subr.bf16.mxu0 0
    %4542 = vmatpush1.bf16.msra.mxu0 0
    %4543 = vmatprep.subr.bf16.mxu0 0
    %4544 = vmatpush1.bf16.msra.mxu0 0
    %4545 = vmatprep.subr.bf16.mxu0 0
    %4546 = vmatpush1.bf16.msra.mxu0 0
    %4547 = vmatprep.subr.bf16.mxu0 0
    %4548 = vmatpush1.bf16.msra.mxu0 0
    %4549 = vmatprep.subr.bf16.mxu0 0
    %4550 = vmatpush1.bf16.msra.mxu0 0
    %4551 = vmatprep.subr.bf16.mxu0 0
    %4552 = vmatpush1.bf16.msra.mxu0 0
    %4553 = vmatprep.subr.bf16.mxu0 0
    %4554 = vmatpush1.bf16.msra.mxu0 0
    %4555 = vmatprep.mubr.bf16.mxu0 0
    %4556 = vmatmul.mubr.bf16.gmra.mrb[0].mxu0 %v4480
    %v4557 = vpop.f32.mrb[0].mxu0
    %v4558 = vadd.f32 %v4390, %v4557
    %v4559 = vpop.f32.mrb[0].mxu0
    %v4560 = vadd.f32 %v4394, %v4559
    %v4561 = vpop.f32.mrb[0].mxu0
    %v4562 = vpop.f32.mrb[0].mxu0
    %4563 = vdwg.mxu0
    %vm4564 = vcmp.ge.f32.partialorder %v4517, 0.0
    %vm4565 = vcmp.ge.f32.partialorder %v4519, 0.0
    %vm4566 = vcmp.ge.f32.partialorder %v4558, 0.0
    %vm4567 = vcmp.ge.f32.partialorder %v4560, 0.0
    %v4568 = vmul.f32 %v4517, 0.01
    %v4569 = vmul.f32 %v4519, 0.01
    %v4570 = vmul.f32 %v4558, 0.01
    %v4571 = vmul.f32 %v4560, 0.01
    %v4572 = vsel %vm4564, %v4517, %v4568
    %v4573 = vsel %vm4565, %v4519, %v4569
    %v4574 = vsel %vm4566, %v4558, %v4570
    %v4575 = vsel %vm4567, %v4560, %v4571
    %v4576 = vpack.c.bf16 %v4572, %v4572
    %v4577 = vpack.c.bf16 %v4573, %v4573
    %v4578 = vpack.c.bf16 %v4574, %v4574
    %v4579 = vpack.c.bf16 %v4575, %v4575
    %v4580 = vld [vmem:[%s17] sm:$0xf]
    %v4581 = vld [vmem:[%s17 + $0x4] sm:$0xf]
    %v4582 = vld [vmem:[%s17 + $0x8] sm:$0xf]
    %v4583 = vld [vmem:[%s17 + $0xc] sm:$0xf]
    %v4584 = vld [vmem:[%s17 + $0x10] sm:$0xf]
    %v4585 = vld [vmem:[%s17 + $0x14] sm:$0xf]
    %v4586 = vld [vmem:[%s17 + $0x18] sm:$0xf]
    %v4587 = vld [vmem:[%s17 + $0x1c] sm:$0xf]
    %v4588 = vld [vmem:[%s17 + $0x20] sm:$0xf]
    %v4589 = vld [vmem:[%s17 + $0x24] sm:$0xf]
    %v4590 = vld [vmem:[%s17 + $0x28] sm:$0xf]
    %v4591 = vld [vmem:[%s17 + $0x2c] sm:$0xf]
    %v4592 = vld [vmem:[%s17 + $0x30] sm:$0xf]
    %v4593 = vld [vmem:[%s17 + $0x34] sm:$0xf]
    %v4594 = vld [vmem:[%s17 + $0x38] sm:$0xf]
    %v4595 = vld [vmem:[%s17 + $0x3c] sm:$0xf]
    %v4596 = vld [vmem:[%s17 + $0x40] sm:$0xf]
    %v4597 = vld [vmem:[%s17 + $0x44] sm:$0xf]
    %v4598 = vld [vmem:[%s17 + $0x48] sm:$0xf]
    %v4599 = vld [vmem:[%s17 + $0x4c] sm:$0xf]
    %v4600 = vld [vmem:[%s17 + $0x50] sm:$0xf]
    %v4601 = vld [vmem:[%s17 + $0x54] sm:$0xf]
    %v4602 = vld [vmem:[%s17 + $0x58] sm:$0xf]
    %v4603 = vld [vmem:[%s17 + $0x5c] sm:$0xf]
    %v4604 = vld [vmem:[%s17 + $0x60] sm:$0xf]
    %v4605 = vld [vmem:[%s17 + $0x64] sm:$0xf]
    %v4606 = vld [vmem:[%s17 + $0x68] sm:$0xf]
    %v4607 = vld [vmem:[%s17 + $0x6c] sm:$0xf]
    %v4608 = vld [vmem:[%s17 + $0x70] sm:$0xf]
    %v4609 = vld [vmem:[%s17 + $0x74] sm:$0xf]
    %v4610 = vld [vmem:[%s17 + $0x78] sm:$0xf]
    %v4611 = vld [vmem:[%s17 + $0x7c] sm:$0xf]
    %v4612 = vld [vmem:[%s17 + $0x80] sm:$0xf]
    %v4613 = vld [vmem:[%s17 + $0x84] sm:$0xf]
    %v4614 = vld [vmem:[%s17 + $0x88] sm:$0xf]
    %v4615 = vld [vmem:[%s17 + $0x8c] sm:$0xf]
    %v4616 = vld [vmem:[%s17 + $0x90] sm:$0xf]
    %v4617 = vld [vmem:[%s17 + $0x94] sm:$0xf]
    %v4618 = vld [vmem:[%s17 + $0x98] sm:$0xf]
    %v4619 = vld [vmem:[%s17 + $0x9c] sm:$0xf]
    %v4620 = vld [vmem:[%s17 + $0xa0] sm:$0xf]
    %v4621 = vld [vmem:[%s17 + $0xa4] sm:$0xf]
    %v4622 = vld [vmem:[%s17 + $0xa8] sm:$0xf]
    %v4623 = vld [vmem:[%s17 + $0xac] sm:$0xf]
    %v4624 = vld [vmem:[%s17 + $0xb0] sm:$0xf]
    %v4625 = vld [vmem:[%s17 + $0xb4] sm:$0xf]
    %v4626 = vld [vmem:[%s17 + $0xb8] sm:$0xf]
    %v4627 = vld [vmem:[%s17 + $0xbc] sm:$0xf]
    %v4628 = vld [vmem:[%s17 + $0xc0] sm:$0xf]
    %v4629 = vld [vmem:[%s17 + $0xc4] sm:$0xf]
    %v4630 = vld [vmem:[%s17 + $0xc8] sm:$0xf]
    %v4631 = vld [vmem:[%s17 + $0xcc] sm:$0xf]
    %v4632 = vld [vmem:[%s17 + $0xd0] sm:$0xf]
    %v4633 = vld [vmem:[%s17 + $0xd4] sm:$0xf]
    %v4634 = vld [vmem:[%s17 + $0xd8] sm:$0xf]
    %v4635 = vld [vmem:[%s17 + $0xdc] sm:$0xf]
    %v4636 = vld [vmem:[%s17 + $0xe0] sm:$0xf]
    %v4637 = vld [vmem:[%s17 + $0xe4] sm:$0xf]
    %v4638 = vld [vmem:[%s17 + $0xe8] sm:$0xf]
    %v4639 = vld [vmem:[%s17 + $0xec] sm:$0xf]
    %v4640 = vld [vmem:[%s17 + $0xf0] sm:$0xf]
    %v4641 = vld [vmem:[%s17 + $0xf4] sm:$0xf]
    %v4642 = vld [vmem:[%s17 + $0xf8] sm:$0xf]
    %v4643 = vld [vmem:[%s17 + $0xfc] sm:$0xf]
    %v4644 = vld [vmem:[%s18] sm:$0x1]
    %v4646 = vlaneseq
    %v4647 = vshrl.u32 %v4646, 7
    %v4648 = vsub.s32 0, %v4647
    %v4649 = vrot.slane %v4644, %v4648
    %v4715 = vunpack.c.l.b16 %v4580
    %v4716 = vunpack.c.l.b16 %v4581
    %v4717 = vunpack.c.l.b16 %v4582
    %v4718 = vunpack.c.l.b16 %v4583
    %v4719 = vunpack.c.l.b16 %v4584
    %v4720 = vunpack.c.l.b16 %v4585
    %v4721 = vunpack.c.l.b16 %v4586
    %v4722 = vunpack.c.l.b16 %v4587
    %v4723 = vunpack.c.l.b16 %v4588
    %v4724 = vunpack.c.l.b16 %v4589
    %v4725 = vunpack.c.l.b16 %v4590
    %v4726 = vunpack.c.l.b16 %v4591
    %v4727 = vunpack.c.l.b16 %v4592
    %v4728 = vunpack.c.l.b16 %v4593
    %v4729 = vunpack.c.l.b16 %v4594
    %v4730 = vunpack.c.l.b16 %v4595
    %v4731 = vunpack.c.l.b16 %v4596
    %v4732 = vunpack.c.l.b16 %v4597
    %v4733 = vunpack.c.l.b16 %v4598
    %v4734 = vunpack.c.l.b16 %v4599
    %v4735 = vunpack.c.l.b16 %v4600
    %v4736 = vunpack.c.l.b16 %v4601
    %v4737 = vunpack.c.l.b16 %v4602
    %v4738 = vunpack.c.l.b16 %v4603
    %v4739 = vunpack.c.l.b16 %v4604
    %v4740 = vunpack.c.l.b16 %v4605
    %v4741 = vunpack.c.l.b16 %v4606
    %v4742 = vunpack.c.l.b16 %v4607
    %v4743 = vunpack.c.l.b16 %v4608
    %v4744 = vunpack.c.l.b16 %v4609
    %v4745 = vunpack.c.l.b16 %v4610
    %v4746 = vunpack.c.l.b16 %v4611
    %v4747 = vunpack.c.l.b16 %v4612
    %v4748 = vunpack.c.l.b16 %v4613
    %v4749 = vunpack.c.l.b16 %v4614
    %v4750 = vunpack.c.l.b16 %v4615
    %v4751 = vunpack.c.l.b16 %v4616
    %v4752 = vunpack.c.l.b16 %v4617
    %v4753 = vunpack.c.l.b16 %v4618
    %v4754 = vunpack.c.l.b16 %v4619
    %v4755 = vunpack.c.l.b16 %v4620
    %v4756 = vunpack.c.l.b16 %v4621
    %v4757 = vunpack.c.l.b16 %v4622
    %v4758 = vunpack.c.l.b16 %v4623
    %v4759 = vunpack.c.l.b16 %v4624
    %v4760 = vunpack.c.l.b16 %v4625
    %v4761 = vunpack.c.l.b16 %v4626
    %v4762 = vunpack.c.l.b16 %v4627
    %v4763 = vunpack.c.l.b16 %v4628
    %v4764 = vunpack.c.l.b16 %v4629
    %v4765 = vunpack.c.l.b16 %v4630
    %v4766 = vunpack.c.l.b16 %v4631
    %v4767 = vunpack.c.l.b16 %v4632
    %v4768 = vunpack.c.l.b16 %v4633
    %v4769 = vunpack.c.l.b16 %v4634
    %v4770 = vunpack.c.l.b16 %v4635
    %v4771 = vunpack.c.l.b16 %v4636
    %v4772 = vunpack.c.l.b16 %v4637
    %v4773 = vunpack.c.l.b16 %v4638
    %v4774 = vunpack.c.l.b16 %v4639
    %v4775 = vunpack.c.l.b16 %v4640
    %v4776 = vunpack.c.l.b16 %v4641
    %v4777 = vunpack.c.l.b16 %v4642
    %v4778 = vunpack.c.l.b16 %v4643
    %v4779 = vpack.c.b16 %v4716, %v4715
    %v4780 = vpack.c.b16 %v4718, %v4717
    %v4781 = vpack.c.b16 %v4720, %v4719
    %v4782 = vpack.c.b16 %v4722, %v4721
    %v4783 = vpack.c.b16 %v4724, %v4723
    %v4784 = vpack.c.b16 %v4726, %v4725
    %v4785 = vpack.c.b16 %v4728, %v4727
    %v4786 = vpack.c.b16 %v4730, %v4729
    %v4787 = vpack.c.b16 %v4732, %v4731
    %v4788 = vpack.c.b16 %v4734, %v4733
    %v4789 = vpack.c.b16 %v4736, %v4735
    %v4790 = vpack.c.b16 %v4738, %v4737
    %v4791 = vpack.c.b16 %v4740, %v4739
    %v4792 = vpack.c.b16 %v4742, %v4741
    %v4793 = vpack.c.b16 %v4744, %v4743
    %v4794 = vpack.c.b16 %v4746, %v4745
    %v4795 = vpack.c.b16 %v4748, %v4747
    %v4796 = vpack.c.b16 %v4750, %v4749
    %v4797 = vpack.c.b16 %v4752, %v4751
    %v4798 = vpack.c.b16 %v4754, %v4753
    %v4799 = vpack.c.b16 %v4756, %v4755
    %v4800 = vpack.c.b16 %v4758, %v4757
    %v4801 = vpack.c.b16 %v4760, %v4759
    %v4802 = vpack.c.b16 %v4762, %v4761
    %v4803 = vpack.c.b16 %v4764, %v4763
    %v4804 = vpack.c.b16 %v4766, %v4765
    %v4805 = vpack.c.b16 %v4768, %v4767
    %v4806 = vpack.c.b16 %v4770, %v4769
    %v4807 = vpack.c.b16 %v4772, %v4771
    %v4808 = vpack.c.b16 %v4774, %v4773
    %v4809 = vpack.c.b16 %v4776, %v4775
    %v4810 = vpack.c.b16 %v4778, %v4777
    %4843 = vmatprep.subr.bf16.mxu0 0
    %4844 = vmatpush1.bf16.msra.mxu0 %v4779
    %4845 = vmatprep.subr.bf16.mxu0 0
    %4846 = vmatpush1.bf16.msra.mxu0 %v4780
    %4847 = vmatprep.subr.bf16.mxu0 0
    %4848 = vmatpush1.bf16.msra.mxu0 %v4781
    %4849 = vmatprep.subr.bf16.mxu0 0
    %4850 = vmatpush1.bf16.msra.mxu0 %v4782
    %4851 = vmatprep.subr.bf16.mxu0 0
    %4852 = vmatpush1.bf16.msra.mxu0 %v4783
    %4853 = vmatprep.subr.bf16.mxu0 0
    %4854 = vmatpush1.bf16.msra.mxu0 %v4784
    %4855 = vmatprep.subr.bf16.mxu0 0
    %4856 = vmatpush1.bf16.msra.mxu0 %v4785
    %4857 = vmatprep.subr.bf16.mxu0 0
    %4858 = vmatpush1.bf16.msra.mxu0 %v4786
    %4859 = vmatprep.subr.bf16.mxu0 0
    %4860 = vmatpush1.bf16.msra.mxu0 %v4787
    %4861 = vmatprep.subr.bf16.mxu0 0
    %4862 = vmatpush1.bf16.msra.mxu0 %v4788
    %4863 = vmatprep.subr.bf16.mxu0 0
    %4864 = vmatpush1.bf16.msra.mxu0 %v4789
    %4865 = vmatprep.subr.bf16.mxu0 0
    %4866 = vmatpush1.bf16.msra.mxu0 %v4790
    %4867 = vmatprep.subr.bf16.mxu0 0
    %4868 = vmatpush1.bf16.msra.mxu0 %v4791
    %4869 = vmatprep.subr.bf16.mxu0 0
    %4870 = vmatpush1.bf16.msra.mxu0 %v4792
    %4871 = vmatprep.subr.bf16.mxu0 0
    %4872 = vmatpush1.bf16.msra.mxu0 %v4793
    %4873 = vmatprep.subr.bf16.mxu0 0
    %4874 = vmatpush1.bf16.msra.mxu0 %v4794
    %4875 = vmatprep.mubr.bf16.mxu0 %v4577
    %4876 = vmatmul.mubr.bf16.gmra.mrb[0].mxu0 %v4576
    %v4877 = vpop.f32.mrb[0].mxu0
    %v4878 = vadd.f32 %v4649, %v4877
    %v4879 = vpop.f32.mrb[0].mxu0
    %v4880 = vpop.f32.mrb[0].mxu0
    %v4881 = vpop.f32.mrb[0].mxu0
    %4882 = vdwg.mxu0
    %4883 = vmatprep.subr.bf16.mxu0 0
    %4884 = vmatpush1.bf16.msra.mxu0 %v4795
    %4885 = vmatprep.subr.bf16.mxu0 0
    %4886 = vmatpush1.bf16.msra.mxu0 %v4796
    %4887 = vmatprep.subr.bf16.mxu0 0
    %4888 = vmatpush1.bf16.msra.mxu0 %v4797
    %4889 = vmatprep.subr.bf16.mxu0 0
    %4890 = vmatpush1.bf16.msra.mxu0 %v4798
    %4891 = vmatprep.subr.bf16.mxu0 0
    %4892 = vmatpush1.bf16.msra.mxu0 %v4799
    %4893 = vmatprep.subr.bf16.mxu0 0
    %4894 = vmatpush1.bf16.msra.mxu0 %v4800
    %4895 = vmatprep.subr.bf16.mxu0 0
    %4896 = vmatpush1.bf16.msra.mxu0 %v4801
    %4897 = vmatprep.subr.bf16.mxu0 0
    %4898 = vmatpush1.bf16.msra.mxu0 %v4802
    %4899 = vmatprep.subr.bf16.mxu0 0
    %4900 = vmatpush1.bf16.msra.mxu0 %v4803
    %4901 = vmatprep.subr.bf16.mxu0 0
    %4902 = vmatpush1.bf16.msra.mxu0 %v4804
    %4903 = vmatprep.subr.bf16.mxu0 0
    %4904 = vmatpush1.bf16.msra.mxu0 %v4805
    %4905 = vmatprep.subr.bf16.mxu0 0
    %4906 = vmatpush1.bf16.msra.mxu0 %v4806
    %4907 = vmatprep.subr.bf16.mxu0 0
    %4908 = vmatpush1.bf16.msra.mxu0 %v4807
    %4909 = vmatprep.subr.bf16.mxu0 0
    %4910 = vmatpush1.bf16.msra.mxu0 %v4808
    %4911 = vmatprep.subr.bf16.mxu0 0
    %4912 = vmatpush1.bf16.msra.mxu0 %v4809
    %4913 = vmatprep.subr.bf16.mxu0 0
    %4914 = vmatpush1.bf16.msra.mxu0 %v4810
    %4915 = vmatprep.mubr.bf16.mxu0 %v4579
    %4916 = vmatmul.mubr.bf16.gmra.mrb[0].mxu0 %v4578
    %v4917 = vpop.f32.mrb[0].mxu0
    %v4918 = vadd.f32 %v4878, %v4917
    %v4919 = vpop.f32.mrb[0].mxu0
    %v4920 = vpop.f32.mrb[0].mxu0
    %v4921 = vpop.f32.mrb[0].mxu0
    %4922 = vdwg.mxu0
    %vm4923 = vcmask 33792
    %4924 = vst.msk [vmem:[#allocation2] sm:$0x3] %vm4923, %v4918
    // Predicated region
    $region78: #{network_forward.1} parent=1 // pred_check
      _
    $region79: #{network_forward.1} parent=1 // pred_check_branch
      %4926 = sbr.rel (0) target = $region81
    $region80: #{network_forward.1} parent=1 // pred_region
      %s4928 = ssub.s32 32, 32
      %4929 = vsyncadd [#allocation3], %s4928
      %s4931 = sshll.u32 [#allocation2], 4
      %s4932 = int_to_ptr.vmem [resolvable:$true] %s4931
      %4934 = dma.vmem_to_hbm [thread:$0]  %s4932, 32, %s19, [#allocation3]
    $region81: #{network_forward.1} parent=1 // pred_fallthru
      _
    // Predicated region
    $region82: #{network_forward.1} parent=1 // pred_check
      _
    $region83: #{network_forward.1} parent=1 // pred_check_branch
      %4936 = sbr.rel (0) target = $region85
    $region84: #{network_forward.1} parent=1 // pred_region
      %4937 = dma.done [#allocation3], 32
    $region85: #{network_forward.1} parent=1 // pred_fallthru
      _
    %4938 = vsyncpa [#allocation3], 1

</llo_original>
